<compile_context>
chip_gen: v6e
topology: v6e:2x2x1
jax: 0.10.0
libtpu: 0.0.40
codegen_flags: <defaults>
</compile_context>

<pallas_src>
import math
import jax
import jax.numpy as jnp
from jax import lax
from jax.experimental import pallas as pl
from jax.experimental.pallas import tpu as pltpu


def _round_up(v, m):
    return -(-v // m) * m


# -----------------------------------------------------------------------------
# Pallas kernel: single invocation, whole (padded) batch.
# -----------------------------------------------------------------------------
def decoder_kernel(x_ref, wih_ref, whh_ref, wproj_ref, wout_ref, bias_ref,
                   out_ref, xg_ref, hall_ref):
    L, B_pad, D = x_ref.shape
    Hp = wproj_ref.shape[0]                  # H_pad
    G4 = whh_ref.shape[1]                    # 4 * H_pad
    C_pad = wout_ref.shape[1]
    eps = 1e-5
    bf16 = jnp.bfloat16

    # one load of the packed bias slab; slice values (no extra DMAs)
    bias = bias_ref[...]                                           # (8, Wb) f32
    bgate = bias[0:1, :G4]
    bproj = bias[1:2, :D]
    bout = bias[2:3, :C_pad]

    # ---- pre_norm (my_Layernorm): LayerNorm(D) without affine (gamma folded into
    #      w_ih, beta cancels), then subtract the mean over the sequence dim (L). ----
    x = x_ref[...]                                                 # (L, Bp, D) f32
    mu = jnp.mean(x, axis=-1, keepdims=True)
    var = jnp.mean((x - mu) ** 2, axis=-1, keepdims=True)
    xh = (x - mu) * lax.rsqrt(var + eps)
    xh = xh - jnp.mean(xh, axis=0, keepdims=True)

    # ---- input->gate matmul for the whole (L*Bp) slab; b_ih + b_hh folded in ----
    xg = (jnp.dot(xh.reshape(L * B_pad, D).astype(bf16), wih_ref[...],
                  preferred_element_type=jnp.float32) + bgate)
    xg_ref[...] = xg.reshape(L, B_pad, G4)

    def sigm(v):                                # 1 EUP push (tanh) per gate slab
        return 0.5 * jnp.tanh(0.5 * v) + 0.5

    def activate(gates):                        # lane-aligned 128-wide gate slabs
        i = sigm(gates[:, 0 * Hp:1 * Hp])
        f = sigm(gates[:, 1 * Hp:2 * Hp])
        g = jnp.tanh(gates[:, 2 * Hp:3 * Hp])
        o = sigm(gates[:, 3 * Hp:4 * Hp])
        return i, f, g, o

    # ---- t = 0 peeled: h0 = c0 = 0 -> no recurrent matmul ----
    i, f, g, o = activate(xg_ref[0])
    c = i * g
    h = o * jnp.tanh(c)
    hall_ref[0] = h                                                # full (8,128) store

    # ---- remaining timesteps (PyTorch i,f,g,o order), batched over B_pad sublanes ----
    def step(t, carry):
        h, c = carry                                               # (Bp, Hp) f32
        gates = xg_ref[t] + jnp.dot(h.astype(bf16), whh_ref[...],
                                    preferred_element_type=jnp.float32)
        i, f, g, o = activate(gates)
        c = f * c + i * g
        h = o * jnp.tanh(c)
        hall_ref[t] = h
        return (h, c)

    lax.fori_loop(1, L, step, (h, c), unroll=True)

    # ---- lstm_proj: Linear(H -> D) on the whole slab ----
    y = (jnp.dot(hall_ref[...].reshape(L * B_pad, Hp).astype(bf16), wproj_ref[...],
                 preferred_element_type=jnp.float32) + bproj)      # (L*Bp, D)

    # ---- post_norm: LayerNorm(D) without affine (folded into w_out / bout) ----
    mu2 = jnp.mean(y, axis=-1, keepdims=True)
    var2 = jnp.mean((y - mu2) ** 2, axis=-1, keepdims=True)
    yn = (y - mu2) * lax.rsqrt(var2 + eps)

    # ---- projection: Linear(D -> C_pad); output lane-dense (C_pad = 128) ----
    out = (jnp.dot(yn.astype(bf16), wout_ref[...],
                   preferred_element_type=jnp.float32) + bout)     # (L*Bp, Cp)
    out_ref[...] = out.reshape(L, B_pad, C_pad).astype(out_ref.dtype)


# -----------------------------------------------------------------------------
# Wrapper (layout plumbing: time-major transpose, padding, gate packing, folding)
# -----------------------------------------------------------------------------
def _pack_gate_cols(w, H, H_pad):
    """(K, 4H) in PyTorch i,f,g,o order -> (K, 4*H_pad) with each gate lane-aligned."""
    K = w.shape[0]
    out = jnp.zeros((K, 4 * H_pad), w.dtype)
    for g in range(4):
        out = out.at[:, g * H_pad:g * H_pad + H].set(w[:, g * H:(g + 1) * H])
    return out


def decoder_forward(x, trend, params):
    B, L, D = x.shape
    H = params["w_hh"].shape[0]
    C = params["w_out"].shape[1]

    B_pad = _round_up(B, 8)
    H_pad = _round_up(H, 128)
    C_pad = _round_up(C, 128)
    f32, bf16 = jnp.float32, jnp.bfloat16

    # time-major, batch padded to a full sublane group
    x_tm = jnp.transpose(x.astype(f32), (1, 0, 2))                # (L, B, D)
    x_tm = jnp.pad(x_tm, ((0, 0), (0, B_pad - B), (0, 0)))        # (L, Bp, D)

    # ---- fold the norm affines into the weights (one-time weight transform) ----
    # pre_norm: gamma_pre scales rows of w_ih; beta_pre cancels under the seq-mean sub.
    w_ih_f = params["w_ih"] * params["gamma_pre"].reshape(-1, 1)          # (D, 4H)
    # post_norm: gamma_post scales rows of w_out; beta_post @ w_out folds into b_out.
    w_out_f = params["w_out"] * params["gamma_post"].reshape(-1, 1)       # (D, C)
    b_out_f = params["b_out"] + params["beta_post"] @ params["w_out"]     # (1, C)

    # ---- weight packing: lane-aligned gate slabs, zero-padded H / C, bf16 storage ----
    w_ih = _pack_gate_cols(w_ih_f.astype(f32), H, H_pad).astype(bf16)            # (D, 4Hp)
    w_hh = _pack_gate_cols(params["w_hh"].astype(f32), H, H_pad)
    w_hh = jnp.pad(w_hh, ((0, H_pad - H), (0, 0))).astype(bf16)                  # (Hp, 4Hp)
    w_proj = jnp.pad(params["w_proj"].astype(f32),
                     ((0, H_pad - H), (0, 0))).astype(bf16)                      # (Hp, D)
    w_out = jnp.pad(w_out_f.astype(f32), ((0, 0), (0, C_pad - C))).astype(bf16)  # (D, Cp)

    b_gate = _pack_gate_cols((params["b_ih"] + params["b_hh"]).astype(f32),
                             H, H_pad)                                           # (1, 4Hp)
    b_out = jnp.pad(b_out_f.astype(f32), ((0, 0), (0, C_pad - C)))               # (1, Cp)

    # ---- single f32 bias slab (one DMA): row0 gate bias, row1 proj bias, row2 out ----
    Wb = max(4 * H_pad, _round_up(D, 128), C_pad)
    bias = jnp.zeros((8, Wb), f32)
    bias = bias.at[0, :4 * H_pad].set(b_gate[0])
    bias = bias.at[1, :D].set(params["b_proj"].astype(f32)[0])
    bias = bias.at[2, :C_pad].set(b_out[0])

    def whole(arr):
        nd = arr.ndim
        return pl.BlockSpec(arr.shape, lambda i, nd=nd: (0,) * nd)

    out_pad = pl.pallas_call(
        decoder_kernel,
        out_shape=jax.ShapeDtypeStruct((L, B_pad, C_pad), f32),
        grid=(1,),
        in_specs=[pl.BlockSpec((L, B_pad, D), lambda i: (0, 0, 0)),
                  whole(w_ih), whole(w_hh), whole(w_proj), whole(w_out), whole(bias)],
        out_specs=pl.BlockSpec((L, B_pad, C_pad), lambda i: (0, 0, 0)),
        scratch_shapes=[pltpu.VMEM((L, B_pad, 4 * H_pad), jnp.float32),   # xg slab
                        pltpu.VMEM((L, B_pad, H_pad), jnp.float32)],      # hidden states
        compiler_params=pltpu.CompilerParams(
            dimension_semantics=("arbitrary",)),
    )(x_tm, w_ih, w_hh, w_proj, w_out, bias)

    out = jnp.transpose(out_pad, (1, 0, 2))[:B, :, :C].astype(x.dtype)
    # forward returns (x, trend); with layers=[] trend passes through unchanged.
    return out, trend


# -----------------------------------------------------------------------------
# Pure-JAX reference (for correctness check) — full f32, un-folded affines.
# -----------------------------------------------------------------------------
def decoder_reference(x, p):
    eps = 1e-5
    mu = x.mean(-1, keepdims=True)
    var = ((x - mu) ** 2).mean(-1, keepdims=True)
    xh = (x - mu) / jnp.sqrt(var + eps) * p["gamma_pre"][0] + p["beta_pre"][0]
    xh = xh - xh.mean(axis=1, keepdims=True)

    B, L, D = x.shape
    H = p["w_hh"].shape[0]
    xg = xh @ p["w_ih"] + p["b_ih"][0]                        # (B, L, 4H)

    def step(carry, xg_t):
        h, c = carry
        gates = xg_t + h @ p["w_hh"] + p["b_hh"][0]
        i, f, g, o = jnp.split(gates, 4, axis=-1)
        c = jax.nn.sigmoid(f) * c + jax.nn.sigmoid(i) * jnp.tanh(g)
        h = jax.nn.sigmoid(o) * jnp.tanh(c)
        return (h, c), h

    h0 = jnp.zeros((B, H), jnp.float32)
    _, hs = lax.scan(step, (h0, h0), jnp.swapaxes(xg, 0, 1))
    hs = jnp.swapaxes(hs, 0, 1)                               # (B, L, H)

    y = hs @ p["w_proj"] + p["b_proj"][0]
    mu2 = y.mean(-1, keepdims=True)
    var2 = ((y - mu2) ** 2).mean(-1, keepdims=True)
    yn = (y - mu2) / jnp.sqrt(var2 + eps) * p["gamma_post"][0] + p["beta_post"][0]
    return yn @ p["w_out"] + p["b_out"][0]


def init_params(key, d_model, hidden, c_out):
    ks = jax.random.split(key, 12)

    def u(k, shape, bound):
        return jax.random.uniform(k, shape, jnp.float32, -bound, bound)

    kl = 1.0 / math.sqrt(hidden)
    ko = 1.0 / math.sqrt(d_model)
    return {
        # pre_norm (my_Layernorm's inner LayerNorm) — non-trivial affine to exercise folding
        "gamma_pre": 1.0 + 0.1 * jax.random.normal(ks[8], (1, d_model), jnp.float32),
        "beta_pre": 0.1 * jax.random.normal(ks[9], (1, d_model), jnp.float32),
        # LSTM weights, stored transposed for (in, out) matmuls; gate order i,f,g,o
        "w_ih": u(ks[0], (d_model, 4 * hidden), kl),
        "b_ih": u(ks[1], (1, 4 * hidden), kl),
        "w_hh": u(ks[2], (hidden, 4 * hidden), kl),
        "b_hh": u(ks[3], (1, 4 * hidden), kl),
        # lstm_proj Linear(hidden -> d_model)
        "w_proj": u(ks[4], (hidden, d_model), kl),
        "b_proj": u(ks[5], (1, d_model), kl),
        # post_norm LayerNorm(d_model)
        "gamma_post": 1.0 + 0.1 * jax.random.normal(ks[10], (1, d_model), jnp.float32),
        "beta_post": 0.1 * jax.random.normal(ks[11], (1, d_model), jnp.float32),
        # projection Linear(d_model -> c_out)
        "w_out": u(ks[6], (d_model, c_out), ko),
        "b_out": u(ks[7], (1, c_out), ko),
    }


if __name__ == "__main__":
    B, L, D, H, C = 2, 8, 32, 48, 16

    key = jax.random.PRNGKey(0)
    kx, kt, kw = jax.random.split(key, 3)
    x = jax.random.normal(kx, (B, L, D), jnp.float32)
    trend = jax.random.normal(kt, (B, L, C), jnp.float32)
    params = init_params(kw, D, H, C)

    out, trend_out = decoder_forward(x, trend, params)
    out = jax.block_until_ready(out)

    ref = decoder_reference(x, params)
    assert out.shape == (B, L, C) and trend_out.shape == (B, L, C)
    assert bool(jnp.all(jnp.isfinite(out)))
    # tolerance sized for bf16 weights/activations in the MXU dots (f32 accumulation)
    assert bool(jnp.allclose(out, ref, atol=3e-2, rtol=3e-2))
    assert bool(jnp.allclose(trend_out, trend))

    print("KERNEL_OK")
</pallas_src>

<mosaic_0001>
module attributes {stable_mosaic.version = 11 : i64} {
  func.func @decoder_kernel(%arg0: i32, %arg1: memref<8x8x32xf32, #tpu.memory_space<vmem>>, %arg2: memref<32x512xbf16, #tpu.memory_space<vmem>>, %arg3: memref<128x512xbf16, #tpu.memory_space<vmem>>, %arg4: memref<128x32xbf16, #tpu.memory_space<vmem>>, %arg5: memref<32x128xbf16, #tpu.memory_space<vmem>>, %arg6: memref<8x512xf32, #tpu.memory_space<vmem>>, %arg7: memref<8x8x128xf32, #tpu.memory_space<vmem>>, %arg8: memref<8x8x512xf32, #tpu.memory_space<vmem>>, %arg9: memref<8x8x128xf32, #tpu.memory_space<vmem>>) attributes {dimension_semantics = [#tpu.dimension_semantics<arbitrary>], iteration_bounds = array<i64: 1>, scalar_prefetch = 0 : i64, scratch_operands = 2 : i64, tpu.core_type = #tpu.core_type<tc>, window_params = [{pipeline_mode = #tpu.pipeline_mode<synchronous>, transform_indices = @transform_0, window_bounds = array<i64: 8, 8, 32>}, {pipeline_mode = #tpu.pipeline_mode<synchronous>, transform_indices = @transform_1, window_bounds = array<i64: 32, 512>}, {pipeline_mode = #tpu.pipeline_mode<synchronous>, transform_indices = @transform_2, window_bounds = array<i64: 128, 512>}, {pipeline_mode = #tpu.pipeline_mode<synchronous>, transform_indices = @transform_3, window_bounds = array<i64: 128, 32>}, {pipeline_mode = #tpu.pipeline_mode<synchronous>, transform_indices = @transform_4, window_bounds = array<i64: 32, 128>}, {pipeline_mode = #tpu.pipeline_mode<synchronous>, transform_indices = @transform_5, window_bounds = array<i64: 8, 512>}, {pipeline_mode = #tpu.pipeline_mode<synchronous>, transform_indices = @transform_6, window_bounds = array<i64: 8, 8, 128>}]} {
    %c0 = arith.constant 0 : index
    %c0_0 = arith.constant 0 : index
    %0 = vector.load %arg6[%c0, %c0_0] : memref<8x512xf32, #tpu.memory_space<vmem>>, vector<8x512xf32>
    %1 = vector.extract_strided_slice %0 {offsets = [0, 0], sizes = [1, 512], strides = [1, 1]} : vector<8x512xf32> to vector<1x512xf32>
    %2 = vector.extract_strided_slice %0 {offsets = [1, 0], sizes = [1, 32], strides = [1, 1]} : vector<8x512xf32> to vector<1x32xf32>
    %3 = vector.extract_strided_slice %0 {offsets = [2, 0], sizes = [1, 128], strides = [1, 1]} : vector<8x512xf32> to vector<1x128xf32>
    %c0_1 = arith.constant 0 : index
    %c0_2 = arith.constant 0 : index
    %c0_3 = arith.constant 0 : index
    %4 = vector.load %arg1[%c0_1, %c0_2, %c0_3] : memref<8x8x32xf32, #tpu.memory_space<vmem>>, vector<8x8x32xf32>
    %cst = arith.constant dense<0.000000e+00> : vector<8x8xf32>
    %5 = vector.multi_reduction <add>, %4, %cst [2] : vector<8x8x32xf32> to vector<8x8xf32>
    %6 = vector.shape_cast %5 : vector<8x8xf32> to vector<8x8x1xf32>
    %cst_4 = arith.constant 3.200000e+01 : f32
    %7 = vector.broadcast %cst_4 : f32 to vector<8x8x1xf32>
    %8 = arith.divf %6, %7 : vector<8x8x1xf32>
    %9 = vector.broadcast %8 : vector<8x8x1xf32> to vector<8x8x32xf32>
    %10 = arith.subf %4, %9 : vector<8x8x32xf32>
    %11 = arith.mulf %10, %10 : vector<8x8x32xf32>
    %cst_5 = arith.constant dense<0.000000e+00> : vector<8x8xf32>
    %12 = vector.multi_reduction <add>, %11, %cst_5 [2] : vector<8x8x32xf32> to vector<8x8xf32>
    %13 = vector.shape_cast %12 : vector<8x8xf32> to vector<8x8x1xf32>
    %cst_6 = arith.constant 3.200000e+01 : f32
    %14 = vector.broadcast %cst_6 : f32 to vector<8x8x1xf32>
    %15 = arith.divf %13, %14 : vector<8x8x1xf32>
    %16 = vector.broadcast %8 : vector<8x8x1xf32> to vector<8x8x32xf32>
    %17 = arith.subf %4, %16 : vector<8x8x32xf32>
    %cst_7 = arith.constant 9.99999974E-6 : f32
    %18 = vector.broadcast %cst_7 : f32 to vector<8x8x1xf32>
    %19 = arith.addf %15, %18 : vector<8x8x1xf32>
    %20 = math.rsqrt %19 : vector<8x8x1xf32>
    %21 = vector.broadcast %20 : vector<8x8x1xf32> to vector<8x8x32xf32>
    %22 = arith.mulf %17, %21 : vector<8x8x32xf32>
    %cst_8 = arith.constant dense<0.000000e+00> : vector<8x32xf32>
    %23 = vector.multi_reduction <add>, %22, %cst_8 [0] : vector<8x8x32xf32> to vector<8x32xf32>
    %24 = vector.shape_cast %23 : vector<8x32xf32> to vector<1x8x32xf32>
    %cst_9 = arith.constant 8.000000e+00 : f32
    %25 = vector.broadcast %cst_9 : f32 to vector<1x8x32xf32>
    %26 = arith.divf %24, %25 : vector<1x8x32xf32>
    %27 = vector.broadcast %26 : vector<1x8x32xf32> to vector<8x8x32xf32>
    %28 = arith.subf %22, %27 : vector<8x8x32xf32>
    %29 = vector.shape_cast %28 : vector<8x8x32xf32> to vector<64x32xf32>
    %30 = arith.truncf %29 : vector<64x32xf32> to vector<64x32xbf16>
    %c0_10 = arith.constant 0 : index
    %c0_11 = arith.constant 0 : index
    %31 = vector.load %arg2[%c0_10, %c0_11] : memref<32x512xbf16, #tpu.memory_space<vmem>>, vector<32x512xbf16>
    %cst_12 = arith.constant dense<0.000000e+00> : vector<64x512xf32>
    %32 = tpu.matmul %30, %31, %cst_12 {dimension_numbers = #tpu.dot_dimension_numbers<[1], [0], [0], [1], [0, 0, 1, 1], [], []>} : vector<64x32xbf16>, vector<32x512xbf16>, vector<64x512xf32> -> vector<64x512xf32>
    %33 = vector.broadcast %1 : vector<1x512xf32> to vector<64x512xf32>
    %34 = arith.addf %32, %33 : vector<64x512xf32>
    %35 = vector.shape_cast %34 : vector<64x512xf32> to vector<8x8x512xf32>
    %c0_13 = arith.constant 0 : index
    %c0_14 = arith.constant 0 : index
    %c0_15 = arith.constant 0 : index
    %36 = vector.load %arg8[%c0_13, %c0_14, %c0_15] : memref<8x8x512xf32, #tpu.memory_space<vmem>>, vector<8x8x512xf32>
    tpu.vector_store %arg8[%c0_13, %c0_14, %c0_15], %35 {strides = array<i32>} : memref<8x8x512xf32, #tpu.memory_space<vmem>>, vector<8x8x512xf32>,
    %c0_16 = arith.constant 0 : index
    %c0_17 = arith.constant 0 : index
    %c0_18 = arith.constant 0 : index
    %37 = vector.load %arg8[%c0_16, %c0_17, %c0_18] : memref<8x8x512xf32, #tpu.memory_space<vmem>>, vector<1x8x512xf32>
    %38 = vector.shape_cast %37 : vector<1x8x512xf32> to vector<8x512xf32>
    %39 = vector.extract_strided_slice %38 {offsets = [0, 0], sizes = [8, 128], strides = [1, 1]} : vector<8x512xf32> to vector<8x128xf32>
    %cst_19 = arith.constant 5.000000e-01 : f32
    %40 = vector.broadcast %cst_19 : f32 to vector<8x128xf32>
    %41 = arith.mulf %40, %39 : vector<8x128xf32>
    %42 = math.tanh %41 : vector<8x128xf32>
    %cst_20 = arith.constant 5.000000e-01 : f32
    %43 = vector.broadcast %cst_20 : f32 to vector<8x128xf32>
    %44 = arith.mulf %43, %42 : vector<8x128xf32>
    %cst_21 = arith.constant 5.000000e-01 : f32
    %45 = vector.broadcast %cst_21 : f32 to vector<8x128xf32>
    %46 = arith.addf %44, %45 : vector<8x128xf32>
    %47 = vector.extract_strided_slice %38 {offsets = [0, 256], sizes = [8, 128], strides = [1, 1]} : vector<8x512xf32> to vector<8x128xf32>
    %48 = math.tanh %47 : vector<8x128xf32>
    %49 = vector.extract_strided_slice %38 {offsets = [0, 384], sizes = [8, 128], strides = [1, 1]} : vector<8x512xf32> to vector<8x128xf32>
    %cst_22 = arith.constant 5.000000e-01 : f32
    %50 = vector.broadcast %cst_22 : f32 to vector<8x128xf32>
    %51 = arith.mulf %50, %49 : vector<8x128xf32>
    %52 = math.tanh %51 : vector<8x128xf32>
    %cst_23 = arith.constant 5.000000e-01 : f32
    %53 = vector.broadcast %cst_23 : f32 to vector<8x128xf32>
    %54 = arith.mulf %53, %52 : vector<8x128xf32>
    %cst_24 = arith.constant 5.000000e-01 : f32
    %55 = vector.broadcast %cst_24 : f32 to vector<8x128xf32>
    %56 = arith.addf %54, %55 : vector<8x128xf32>
    %57 = arith.mulf %46, %48 : vector<8x128xf32>
    %58 = math.tanh %57 : vector<8x128xf32>
    %59 = arith.mulf %56, %58 : vector<8x128xf32>
    %c0_25 = arith.constant 0 : index
    %c0_26 = arith.constant 0 : index
    %c0_27 = arith.constant 0 : index
    %60 = vector.load %arg9[%c0_25, %c0_26, %c0_27] : memref<8x8x128xf32, #tpu.memory_space<vmem>>, vector<1x8x128xf32>
    %61 = vector.shape_cast %60 : vector<1x8x128xf32> to vector<8x128xf32>
    %62 = vector.shape_cast %59 : vector<8x128xf32> to vector<1x8x128xf32>
    tpu.vector_store %arg9[%c0_25, %c0_26, %c0_27], %62 {strides = array<i32>} : memref<8x8x128xf32, #tpu.memory_space<vmem>>, vector<1x8x128xf32>,
    %c1_i32 = arith.constant 1 : i32
    %63 = arith.index_cast %c1_i32 : i32 to index
    %c0_28 = arith.constant 0 : index
    %c0_29 = arith.constant 0 : index
    %64 = vector.load %arg8[%63, %c0_28, %c0_29] : memref<8x8x512xf32, #tpu.memory_space<vmem>>, vector<1x8x512xf32>
    %65 = vector.shape_cast %64 : vector<1x8x512xf32> to vector<8x512xf32>
    %66 = arith.truncf %59 : vector<8x128xf32> to vector<8x128xbf16>
    %c0_30 = arith.constant 0 : index
    %c0_31 = arith.constant 0 : index
    %67 = vector.load %arg3[%c0_30, %c0_31] : memref<128x512xbf16, #tpu.memory_space<vmem>>, vector<128x512xbf16>
    %cst_32 = arith.constant dense<0.000000e+00> : vector<8x512xf32>
    %68 = tpu.matmul %66, %67, %cst_32 {dimension_numbers = #tpu.dot_dimension_numbers<[1], [0], [0], [1], [0, 0, 1, 1], [], []>} : vector<8x128xbf16>, vector<128x512xbf16>, vector<8x512xf32> -> vector<8x512xf32>
    %69 = arith.addf %65, %68 : vector<8x512xf32>
    %70 = vector.extract_strided_slice %69 {offsets = [0, 0], sizes = [8, 128], strides = [1, 1]} : vector<8x512xf32> to vector<8x128xf32>
    %cst_33 = arith.constant 5.000000e-01 : f32
    %71 = vector.broadcast %cst_33 : f32 to vector<8x128xf32>
    %72 = arith.mulf %71, %70 : vector<8x128xf32>
    %73 = math.tanh %72 : vector<8x128xf32>
    %cst_34 = arith.constant 5.000000e-01 : f32
    %74 = vector.broadcast %cst_34 : f32 to vector<8x128xf32>
    %75 = arith.mulf %74, %73 : vector<8x128xf32>
    %cst_35 = arith.constant 5.000000e-01 : f32
    %76 = vector.broadcast %cst_35 : f32 to vector<8x128xf32>
    %77 = arith.addf %75, %76 : vector<8x128xf32>
    %78 = vector.extract_strided_slice %69 {offsets = [0, 128], sizes = [8, 128], strides = [1, 1]} : vector<8x512xf32> to vector<8x128xf32>
    %cst_36 = arith.constant 5.000000e-01 : f32
    %79 = vector.broadcast %cst_36 : f32 to vector<8x128xf32>
    %80 = arith.mulf %79, %78 : vector<8x128xf32>
    %81 = math.tanh %80 : vector<8x128xf32>
    %cst_37 = arith.constant 5.000000e-01 : f32
    %82 = vector.broadcast %cst_37 : f32 to vector<8x128xf32>
    %83 = arith.mulf %82, %81 : vector<8x128xf32>
    %cst_38 = arith.constant 5.000000e-01 : f32
    %84 = vector.broadcast %cst_38 : f32 to vector<8x128xf32>
    %85 = arith.addf %83, %84 : vector<8x128xf32>
    %86 = vector.extract_strided_slice %69 {offsets = [0, 256], sizes = [8, 128], strides = [1, 1]} : vector<8x512xf32> to vector<8x128xf32>
    %87 = math.tanh %86 : vector<8x128xf32>
    %88 = vector.extract_strided_slice %69 {offsets = [0, 384], sizes = [8, 128], strides = [1, 1]} : vector<8x512xf32> to vector<8x128xf32>
    %cst_39 = arith.constant 5.000000e-01 : f32
    %89 = vector.broadcast %cst_39 : f32 to vector<8x128xf32>
    %90 = arith.mulf %89, %88 : vector<8x128xf32>
    %91 = math.tanh %90 : vector<8x128xf32>
    %cst_40 = arith.constant 5.000000e-01 : f32
    %92 = vector.broadcast %cst_40 : f32 to vector<8x128xf32>
    %93 = arith.mulf %92, %91 : vector<8x128xf32>
    %cst_41 = arith.constant 5.000000e-01 : f32
    %94 = vector.broadcast %cst_41 : f32 to vector<8x128xf32>
    %95 = arith.addf %93, %94 : vector<8x128xf32>
    %96 = arith.mulf %85, %57 : vector<8x128xf32>
    %97 = arith.mulf %77, %87 : vector<8x128xf32>
    %98 = arith.addf %96, %97 : vector<8x128xf32>
    %99 = math.tanh %98 : vector<8x128xf32>
    %100 = arith.mulf %95, %99 : vector<8x128xf32>
    %101 = arith.index_cast %c1_i32 : i32 to index
    %c0_42 = arith.constant 0 : index
    %c0_43 = arith.constant 0 : index
    %102 = vector.load %arg9[%101, %c0_42, %c0_43] : memref<8x8x128xf32, #tpu.memory_space<vmem>>, vector<1x8x128xf32>
    %103 = vector.shape_cast %102 : vector<1x8x128xf32> to vector<8x128xf32>
    %104 = vector.shape_cast %100 : vector<8x128xf32> to vector<1x8x128xf32>
    tpu.vector_store %arg9[%101, %c0_42, %c0_43], %104 {strides = array<i32>} : memref<8x8x128xf32, #tpu.memory_space<vmem>>, vector<1x8x128xf32>,
    %c2_i32 = arith.constant 2 : i32
    %105 = arith.index_cast %c2_i32 : i32 to index
    %c0_44 = arith.constant 0 : index
    %c0_45 = arith.constant 0 : index
    %106 = vector.load %arg8[%105, %c0_44, %c0_45] : memref<8x8x512xf32, #tpu.memory_space<vmem>>, vector<1x8x512xf32>
    %107 = vector.shape_cast %106 : vector<1x8x512xf32> to vector<8x512xf32>
    %108 = arith.truncf %100 : vector<8x128xf32> to vector<8x128xbf16>
    %c0_46 = arith.constant 0 : index
    %c0_47 = arith.constant 0 : index
    %109 = vector.load %arg3[%c0_46, %c0_47] : memref<128x512xbf16, #tpu.memory_space<vmem>>, vector<128x512xbf16>
    %cst_48 = arith.constant dense<0.000000e+00> : vector<8x512xf32>
    %110 = tpu.matmul %108, %109, %cst_48 {dimension_numbers = #tpu.dot_dimension_numbers<[1], [0], [0], [1], [0, 0, 1, 1], [], []>} : vector<8x128xbf16>, vector<128x512xbf16>, vector<8x512xf32> -> vector<8x512xf32>
    %111 = arith.addf %107, %110 : vector<8x512xf32>
    %112 = vector.extract_strided_slice %111 {offsets = [0, 0], sizes = [8, 128], strides = [1, 1]} : vector<8x512xf32> to vector<8x128xf32>
    %cst_49 = arith.constant 5.000000e-01 : f32
    %113 = vector.broadcast %cst_49 : f32 to vector<8x128xf32>
    %114 = arith.mulf %113, %112 : vector<8x128xf32>
    %115 = math.tanh %114 : vector<8x128xf32>
    %cst_50 = arith.constant 5.000000e-01 : f32
    %116 = vector.broadcast %cst_50 : f32 to vector<8x128xf32>
    %117 = arith.mulf %116, %115 : vector<8x128xf32>
    %cst_51 = arith.constant 5.000000e-01 : f32
    %118 = vector.broadcast %cst_51 : f32 to vector<8x128xf32>
    %119 = arith.addf %117, %118 : vector<8x128xf32>
    %120 = vector.extract_strided_slice %111 {offsets = [0, 128], sizes = [8, 128], strides = [1, 1]} : vector<8x512xf32> to vector<8x128xf32>
    %cst_52 = arith.constant 5.000000e-01 : f32
    %121 = vector.broadcast %cst_52 : f32 to vector<8x128xf32>
    %122 = arith.mulf %121, %120 : vector<8x128xf32>
    %123 = math.tanh %122 : vector<8x128xf32>
    %cst_53 = arith.constant 5.000000e-01 : f32
    %124 = vector.broadcast %cst_53 : f32 to vector<8x128xf32>
    %125 = arith.mulf %124, %123 : vector<8x128xf32>
    %cst_54 = arith.constant 5.000000e-01 : f32
    %126 = vector.broadcast %cst_54 : f32 to vector<8x128xf32>
    %127 = arith.addf %125, %126 : vector<8x128xf32>
    %128 = vector.extract_strided_slice %111 {offsets = [0, 256], sizes = [8, 128], strides = [1, 1]} : vector<8x512xf32> to vector<8x128xf32>
    %129 = math.tanh %128 : vector<8x128xf32>
    %130 = vector.extract_strided_slice %111 {offsets = [0, 384], sizes = [8, 128], strides = [1, 1]} : vector<8x512xf32> to vector<8x128xf32>
    %cst_55 = arith.constant 5.000000e-01 : f32
    %131 = vector.broadcast %cst_55 : f32 to vector<8x128xf32>
    %132 = arith.mulf %131, %130 : vector<8x128xf32>
    %133 = math.tanh %132 : vector<8x128xf32>
    %cst_56 = arith.constant 5.000000e-01 : f32
    %134 = vector.broadcast %cst_56 : f32 to vector<8x128xf32>
    %135 = arith.mulf %134, %133 : vector<8x128xf32>
    %cst_57 = arith.constant 5.000000e-01 : f32
    %136 = vector.broadcast %cst_57 : f32 to vector<8x128xf32>
    %137 = arith.addf %135, %136 : vector<8x128xf32>
    %138 = arith.mulf %127, %98 : vector<8x128xf32>
    %139 = arith.mulf %119, %129 : vector<8x128xf32>
    %140 = arith.addf %138, %139 : vector<8x128xf32>
    %141 = math.tanh %140 : vector<8x128xf32>
    %142 = arith.mulf %137, %141 : vector<8x128xf32>
    %143 = arith.index_cast %c2_i32 : i32 to index
    %c0_58 = arith.constant 0 : index
    %c0_59 = arith.constant 0 : index
    %144 = vector.load %arg9[%143, %c0_58, %c0_59] : memref<8x8x128xf32, #tpu.memory_space<vmem>>, vector<1x8x128xf32>
    %145 = vector.shape_cast %144 : vector<1x8x128xf32> to vector<8x128xf32>
    %146 = vector.shape_cast %142 : vector<8x128xf32> to vector<1x8x128xf32>
    tpu.vector_store %arg9[%143, %c0_58, %c0_59], %146 {strides = array<i32>} : memref<8x8x128xf32, #tpu.memory_space<vmem>>, vector<1x8x128xf32>,
    %c3_i32 = arith.constant 3 : i32
    %147 = arith.index_cast %c3_i32 : i32 to index
    %c0_60 = arith.constant 0 : index
    %c0_61 = arith.constant 0 : index
    %148 = vector.load %arg8[%147, %c0_60, %c0_61] : memref<8x8x512xf32, #tpu.memory_space<vmem>>, vector<1x8x512xf32>
    %149 = vector.shape_cast %148 : vector<1x8x512xf32> to vector<8x512xf32>
    %150 = arith.truncf %142 : vector<8x128xf32> to vector<8x128xbf16>
    %c0_62 = arith.constant 0 : index
    %c0_63 = arith.constant 0 : index
    %151 = vector.load %arg3[%c0_62, %c0_63] : memref<128x512xbf16, #tpu.memory_space<vmem>>, vector<128x512xbf16>
    %cst_64 = arith.constant dense<0.000000e+00> : vector<8x512xf32>
    %152 = tpu.matmul %150, %151, %cst_64 {dimension_numbers = #tpu.dot_dimension_numbers<[1], [0], [0], [1], [0, 0, 1, 1], [], []>} : vector<8x128xbf16>, vector<128x512xbf16>, vector<8x512xf32> -> vector<8x512xf32>
    %153 = arith.addf %149, %152 : vector<8x512xf32>
    %154 = vector.extract_strided_slice %153 {offsets = [0, 0], sizes = [8, 128], strides = [1, 1]} : vector<8x512xf32> to vector<8x128xf32>
    %cst_65 = arith.constant 5.000000e-01 : f32
    %155 = vector.broadcast %cst_65 : f32 to vector<8x128xf32>
    %156 = arith.mulf %155, %154 : vector<8x128xf32>
    %157 = math.tanh %156 : vector<8x128xf32>
    %cst_66 = arith.constant 5.000000e-01 : f32
    %158 = vector.broadcast %cst_66 : f32 to vector<8x128xf32>
    %159 = arith.mulf %158, %157 : vector<8x128xf32>
    %cst_67 = arith.constant 5.000000e-01 : f32
    %160 = vector.broadcast %cst_67 : f32 to vector<8x128xf32>
    %161 = arith.addf %159, %160 : vector<8x128xf32>
    %162 = vector.extract_strided_slice %153 {offsets = [0, 128], sizes = [8, 128], strides = [1, 1]} : vector<8x512xf32> to vector<8x128xf32>
    %cst_68 = arith.constant 5.000000e-01 : f32
    %163 = vector.broadcast %cst_68 : f32 to vector<8x128xf32>
    %164 = arith.mulf %163, %162 : vector<8x128xf32>
    %165 = math.tanh %164 : vector<8x128xf32>
    %cst_69 = arith.constant 5.000000e-01 : f32
    %166 = vector.broadcast %cst_69 : f32 to vector<8x128xf32>
    %167 = arith.mulf %166, %165 : vector<8x128xf32>
    %cst_70 = arith.constant 5.000000e-01 : f32
    %168 = vector.broadcast %cst_70 : f32 to vector<8x128xf32>
    %169 = arith.addf %167, %168 : vector<8x128xf32>
    %170 = vector.extract_strided_slice %153 {offsets = [0, 256], sizes = [8, 128], strides = [1, 1]} : vector<8x512xf32> to vector<8x128xf32>
    %171 = math.tanh %170 : vector<8x128xf32>
    %172 = vector.extract_strided_slice %153 {offsets = [0, 384], sizes = [8, 128], strides = [1, 1]} : vector<8x512xf32> to vector<8x128xf32>
    %cst_71 = arith.constant 5.000000e-01 : f32
    %173 = vector.broadcast %cst_71 : f32 to vector<8x128xf32>
    %174 = arith.mulf %173, %172 : vector<8x128xf32>
    %175 = math.tanh %174 : vector<8x128xf32>
    %cst_72 = arith.constant 5.000000e-01 : f32
    %176 = vector.broadcast %cst_72 : f32 to vector<8x128xf32>
    %177 = arith.mulf %176, %175 : vector<8x128xf32>
    %cst_73 = arith.constant 5.000000e-01 : f32
    %178 = vector.broadcast %cst_73 : f32 to vector<8x128xf32>
    %179 = arith.addf %177, %178 : vector<8x128xf32>
    %180 = arith.mulf %169, %140 : vector<8x128xf32>
    %181 = arith.mulf %161, %171 : vector<8x128xf32>
    %182 = arith.addf %180, %181 : vector<8x128xf32>
    %183 = math.tanh %182 : vector<8x128xf32>
    %184 = arith.mulf %179, %183 : vector<8x128xf32>
    %185 = arith.index_cast %c3_i32 : i32 to index
    %c0_74 = arith.constant 0 : index
    %c0_75 = arith.constant 0 : index
    %186 = vector.load %arg9[%185, %c0_74, %c0_75] : memref<8x8x128xf32, #tpu.memory_space<vmem>>, vector<1x8x128xf32>
    %187 = vector.shape_cast %186 : vector<1x8x128xf32> to vector<8x128xf32>
    %188 = vector.shape_cast %184 : vector<8x128xf32> to vector<1x8x128xf32>
    tpu.vector_store %arg9[%185, %c0_74, %c0_75], %188 {strides = array<i32>} : memref<8x8x128xf32, #tpu.memory_space<vmem>>, vector<1x8x128xf32>,
    %c4_i32 = arith.constant 4 : i32
    %189 = arith.index_cast %c4_i32 : i32 to index
    %c0_76 = arith.constant 0 : index
    %c0_77 = arith.constant 0 : index
    %190 = vector.load %arg8[%189, %c0_76, %c0_77] : memref<8x8x512xf32, #tpu.memory_space<vmem>>, vector<1x8x512xf32>
    %191 = vector.shape_cast %190 : vector<1x8x512xf32> to vector<8x512xf32>
    %192 = arith.truncf %184 : vector<8x128xf32> to vector<8x128xbf16>
    %c0_78 = arith.constant 0 : index
    %c0_79 = arith.constant 0 : index
    %193 = vector.load %arg3[%c0_78, %c0_79] : memref<128x512xbf16, #tpu.memory_space<vmem>>, vector<128x512xbf16>
    %cst_80 = arith.constant dense<0.000000e+00> : vector<8x512xf32>
    %194 = tpu.matmul %192, %193, %cst_80 {dimension_numbers = #tpu.dot_dimension_numbers<[1], [0], [0], [1], [0, 0, 1, 1], [], []>} : vector<8x128xbf16>, vector<128x512xbf16>, vector<8x512xf32> -> vector<8x512xf32>
    %195 = arith.addf %191, %194 : vector<8x512xf32>
    %196 = vector.extract_strided_slice %195 {offsets = [0, 0], sizes = [8, 128], strides = [1, 1]} : vector<8x512xf32> to vector<8x128xf32>
    %cst_81 = arith.constant 5.000000e-01 : f32
    %197 = vector.broadcast %cst_81 : f32 to vector<8x128xf32>
    %198 = arith.mulf %197, %196 : vector<8x128xf32>
    %199 = math.tanh %198 : vector<8x128xf32>
    %cst_82 = arith.constant 5.000000e-01 : f32
    %200 = vector.broadcast %cst_82 : f32 to vector<8x128xf32>
    %201 = arith.mulf %200, %199 : vector<8x128xf32>
    %cst_83 = arith.constant 5.000000e-01 : f32
    %202 = vector.broadcast %cst_83 : f32 to vector<8x128xf32>
    %203 = arith.addf %201, %202 : vector<8x128xf32>
    %204 = vector.extract_strided_slice %195 {offsets = [0, 128], sizes = [8, 128], strides = [1, 1]} : vector<8x512xf32> to vector<8x128xf32>
    %cst_84 = arith.constant 5.000000e-01 : f32
    %205 = vector.broadcast %cst_84 : f32 to vector<8x128xf32>
    %206 = arith.mulf %205, %204 : vector<8x128xf32>
    %207 = math.tanh %206 : vector<8x128xf32>
    %cst_85 = arith.constant 5.000000e-01 : f32
    %208 = vector.broadcast %cst_85 : f32 to vector<8x128xf32>
    %209 = arith.mulf %208, %207 : vector<8x128xf32>
    %cst_86 = arith.constant 5.000000e-01 : f32
    %210 = vector.broadcast %cst_86 : f32 to vector<8x128xf32>
    %211 = arith.addf %209, %210 : vector<8x128xf32>
    %212 = vector.extract_strided_slice %195 {offsets = [0, 256], sizes = [8, 128], strides = [1, 1]} : vector<8x512xf32> to vector<8x128xf32>
    %213 = math.tanh %212 : vector<8x128xf32>
    %214 = vector.extract_strided_slice %195 {offsets = [0, 384], sizes = [8, 128], strides = [1, 1]} : vector<8x512xf32> to vector<8x128xf32>
    %cst_87 = arith.constant 5.000000e-01 : f32
    %215 = vector.broadcast %cst_87 : f32 to vector<8x128xf32>
    %216 = arith.mulf %215, %214 : vector<8x128xf32>
    %217 = math.tanh %216 : vector<8x128xf32>
    %cst_88 = arith.constant 5.000000e-01 : f32
    %218 = vector.broadcast %cst_88 : f32 to vector<8x128xf32>
    %219 = arith.mulf %218, %217 : vector<8x128xf32>
    %cst_89 = arith.constant 5.000000e-01 : f32
    %220 = vector.broadcast %cst_89 : f32 to vector<8x128xf32>
    %221 = arith.addf %219, %220 : vector<8x128xf32>
    %222 = arith.mulf %211, %182 : vector<8x128xf32>
    %223 = arith.mulf %203, %213 : vector<8x128xf32>
    %224 = arith.addf %222, %223 : vector<8x128xf32>
    %225 = math.tanh %224 : vector<8x128xf32>
    %226 = arith.mulf %221, %225 : vector<8x128xf32>
    %227 = arith.index_cast %c4_i32 : i32 to index
    %c0_90 = arith.constant 0 : index
    %c0_91 = arith.constant 0 : index
    %228 = vector.load %arg9[%227, %c0_90, %c0_91] : memref<8x8x128xf32, #tpu.memory_space<vmem>>, vector<1x8x128xf32>
    %229 = vector.shape_cast %228 : vector<1x8x128xf32> to vector<8x128xf32>
    %230 = vector.shape_cast %226 : vector<8x128xf32> to vector<1x8x128xf32>
    tpu.vector_store %arg9[%227, %c0_90, %c0_91], %230 {strides = array<i32>} : memref<8x8x128xf32, #tpu.memory_space<vmem>>, vector<1x8x128xf32>,
    %c5_i32 = arith.constant 5 : i32
    %231 = arith.index_cast %c5_i32 : i32 to index
    %c0_92 = arith.constant 0 : index
    %c0_93 = arith.constant 0 : index
    %232 = vector.load %arg8[%231, %c0_92, %c0_93] : memref<8x8x512xf32, #tpu.memory_space<vmem>>, vector<1x8x512xf32>
    %233 = vector.shape_cast %232 : vector<1x8x512xf32> to vector<8x512xf32>
    %234 = arith.truncf %226 : vector<8x128xf32> to vector<8x128xbf16>
    %c0_94 = arith.constant 0 : index
    %c0_95 = arith.constant 0 : index
    %235 = vector.load %arg3[%c0_94, %c0_95] : memref<128x512xbf16, #tpu.memory_space<vmem>>, vector<128x512xbf16>
    %cst_96 = arith.constant dense<0.000000e+00> : vector<8x512xf32>
    %236 = tpu.matmul %234, %235, %cst_96 {dimension_numbers = #tpu.dot_dimension_numbers<[1], [0], [0], [1], [0, 0, 1, 1], [], []>} : vector<8x128xbf16>, vector<128x512xbf16>, vector<8x512xf32> -> vector<8x512xf32>
    %237 = arith.addf %233, %236 : vector<8x512xf32>
    %238 = vector.extract_strided_slice %237 {offsets = [0, 0], sizes = [8, 128], strides = [1, 1]} : vector<8x512xf32> to vector<8x128xf32>
    %cst_97 = arith.constant 5.000000e-01 : f32
    %239 = vector.broadcast %cst_97 : f32 to vector<8x128xf32>
    %240 = arith.mulf %239, %238 : vector<8x128xf32>
    %241 = math.tanh %240 : vector<8x128xf32>
    %cst_98 = arith.constant 5.000000e-01 : f32
    %242 = vector.broadcast %cst_98 : f32 to vector<8x128xf32>
    %243 = arith.mulf %242, %241 : vector<8x128xf32>
    %cst_99 = arith.constant 5.000000e-01 : f32
    %244 = vector.broadcast %cst_99 : f32 to vector<8x128xf32>
    %245 = arith.addf %243, %244 : vector<8x128xf32>
    %246 = vector.extract_strided_slice %237 {offsets = [0, 128], sizes = [8, 128], strides = [1, 1]} : vector<8x512xf32> to vector<8x128xf32>
    %cst_100 = arith.constant 5.000000e-01 : f32
    %247 = vector.broadcast %cst_100 : f32 to vector<8x128xf32>
    %248 = arith.mulf %247, %246 : vector<8x128xf32>
    %249 = math.tanh %248 : vector<8x128xf32>
    %cst_101 = arith.constant 5.000000e-01 : f32
    %250 = vector.broadcast %cst_101 : f32 to vector<8x128xf32>
    %251 = arith.mulf %250, %249 : vector<8x128xf32>
    %cst_102 = arith.constant 5.000000e-01 : f32
    %252 = vector.broadcast %cst_102 : f32 to vector<8x128xf32>
    %253 = arith.addf %251, %252 : vector<8x128xf32>
    %254 = vector.extract_strided_slice %237 {offsets = [0, 256], sizes = [8, 128], strides = [1, 1]} : vector<8x512xf32> to vector<8x128xf32>
    %255 = math.tanh %254 : vector<8x128xf32>
    %256 = vector.extract_strided_slice %237 {offsets = [0, 384], sizes = [8, 128], strides = [1, 1]} : vector<8x512xf32> to vector<8x128xf32>
    %cst_103 = arith.constant 5.000000e-01 : f32
    %257 = vector.broadcast %cst_103 : f32 to vector<8x128xf32>
    %258 = arith.mulf %257, %256 : vector<8x128xf32>
    %259 = math.tanh %258 : vector<8x128xf32>
    %cst_104 = arith.constant 5.000000e-01 : f32
    %260 = vector.broadcast %cst_104 : f32 to vector<8x128xf32>
    %261 = arith.mulf %260, %259 : vector<8x128xf32>
    %cst_105 = arith.constant 5.000000e-01 : f32
    %262 = vector.broadcast %cst_105 : f32 to vector<8x128xf32>
    %263 = arith.addf %261, %262 : vector<8x128xf32>
    %264 = arith.mulf %253, %224 : vector<8x128xf32>
    %265 = arith.mulf %245, %255 : vector<8x128xf32>
    %266 = arith.addf %264, %265 : vector<8x128xf32>
    %267 = math.tanh %266 : vector<8x128xf32>
    %268 = arith.mulf %263, %267 : vector<8x128xf32>
    %269 = arith.index_cast %c5_i32 : i32 to index
    %c0_106 = arith.constant 0 : index
    %c0_107 = arith.constant 0 : index
    %270 = vector.load %arg9[%269, %c0_106, %c0_107] : memref<8x8x128xf32, #tpu.memory_space<vmem>>, vector<1x8x128xf32>
    %271 = vector.shape_cast %270 : vector<1x8x128xf32> to vector<8x128xf32>
    %272 = vector.shape_cast %268 : vector<8x128xf32> to vector<1x8x128xf32>
    tpu.vector_store %arg9[%269, %c0_106, %c0_107], %272 {strides = array<i32>} : memref<8x8x128xf32, #tpu.memory_space<vmem>>, vector<1x8x128xf32>,
    %c6_i32 = arith.constant 6 : i32
    %273 = arith.index_cast %c6_i32 : i32 to index
    %c0_108 = arith.constant 0 : index
    %c0_109 = arith.constant 0 : index
    %274 = vector.load %arg8[%273, %c0_108, %c0_109] : memref<8x8x512xf32, #tpu.memory_space<vmem>>, vector<1x8x512xf32>
    %275 = vector.shape_cast %274 : vector<1x8x512xf32> to vector<8x512xf32>
    %276 = arith.truncf %268 : vector<8x128xf32> to vector<8x128xbf16>
    %c0_110 = arith.constant 0 : index
    %c0_111 = arith.constant 0 : index
    %277 = vector.load %arg3[%c0_110, %c0_111] : memref<128x512xbf16, #tpu.memory_space<vmem>>, vector<128x512xbf16>
    %cst_112 = arith.constant dense<0.000000e+00> : vector<8x512xf32>
    %278 = tpu.matmul %276, %277, %cst_112 {dimension_numbers = #tpu.dot_dimension_numbers<[1], [0], [0], [1], [0, 0, 1, 1], [], []>} : vector<8x128xbf16>, vector<128x512xbf16>, vector<8x512xf32> -> vector<8x512xf32>
    %279 = arith.addf %275, %278 : vector<8x512xf32>
    %280 = vector.extract_strided_slice %279 {offsets = [0, 0], sizes = [8, 128], strides = [1, 1]} : vector<8x512xf32> to vector<8x128xf32>
    %cst_113 = arith.constant 5.000000e-01 : f32
    %281 = vector.broadcast %cst_113 : f32 to vector<8x128xf32>
    %282 = arith.mulf %281, %280 : vector<8x128xf32>
    %283 = math.tanh %282 : vector<8x128xf32>
    %cst_114 = arith.constant 5.000000e-01 : f32
    %284 = vector.broadcast %cst_114 : f32 to vector<8x128xf32>
    %285 = arith.mulf %284, %283 : vector<8x128xf32>
    %cst_115 = arith.constant 5.000000e-01 : f32
    %286 = vector.broadcast %cst_115 : f32 to vector<8x128xf32>
    %287 = arith.addf %285, %286 : vector<8x128xf32>
    %288 = vector.extract_strided_slice %279 {offsets = [0, 128], sizes = [8, 128], strides = [1, 1]} : vector<8x512xf32> to vector<8x128xf32>
    %cst_116 = arith.constant 5.000000e-01 : f32
    %289 = vector.broadcast %cst_116 : f32 to vector<8x128xf32>
    %290 = arith.mulf %289, %288 : vector<8x128xf32>
    %291 = math.tanh %290 : vector<8x128xf32>
    %cst_117 = arith.constant 5.000000e-01 : f32
    %292 = vector.broadcast %cst_117 : f32 to vector<8x128xf32>
    %293 = arith.mulf %292, %291 : vector<8x128xf32>
    %cst_118 = arith.constant 5.000000e-01 : f32
    %294 = vector.broadcast %cst_118 : f32 to vector<8x128xf32>
    %295 = arith.addf %293, %294 : vector<8x128xf32>
    %296 = vector.extract_strided_slice %279 {offsets = [0, 256], sizes = [8, 128], strides = [1, 1]} : vector<8x512xf32> to vector<8x128xf32>
    %297 = math.tanh %296 : vector<8x128xf32>
    %298 = vector.extract_strided_slice %279 {offsets = [0, 384], sizes = [8, 128], strides = [1, 1]} : vector<8x512xf32> to vector<8x128xf32>
    %cst_119 = arith.constant 5.000000e-01 : f32
    %299 = vector.broadcast %cst_119 : f32 to vector<8x128xf32>
    %300 = arith.mulf %299, %298 : vector<8x128xf32>
    %301 = math.tanh %300 : vector<8x128xf32>
    %cst_120 = arith.constant 5.000000e-01 : f32
    %302 = vector.broadcast %cst_120 : f32 to vector<8x128xf32>
    %303 = arith.mulf %302, %301 : vector<8x128xf32>
    %cst_121 = arith.constant 5.000000e-01 : f32
    %304 = vector.broadcast %cst_121 : f32 to vector<8x128xf32>
    %305 = arith.addf %303, %304 : vector<8x128xf32>
    %306 = arith.mulf %295, %266 : vector<8x128xf32>
    %307 = arith.mulf %287, %297 : vector<8x128xf32>
    %308 = arith.addf %306, %307 : vector<8x128xf32>
    %309 = math.tanh %308 : vector<8x128xf32>
    %310 = arith.mulf %305, %309 : vector<8x128xf32>
    %311 = arith.index_cast %c6_i32 : i32 to index
    %c0_122 = arith.constant 0 : index
    %c0_123 = arith.constant 0 : index
    %312 = vector.load %arg9[%311, %c0_122, %c0_123] : memref<8x8x128xf32, #tpu.memory_space<vmem>>, vector<1x8x128xf32>
    %313 = vector.shape_cast %312 : vector<1x8x128xf32> to vector<8x128xf32>
    %314 = vector.shape_cast %310 : vector<8x128xf32> to vector<1x8x128xf32>
    tpu.vector_store %arg9[%311, %c0_122, %c0_123], %314 {strides = array<i32>} : memref<8x8x128xf32, #tpu.memory_space<vmem>>, vector<1x8x128xf32>,
    %c7_i32 = arith.constant 7 : i32
    %315 = arith.index_cast %c7_i32 : i32 to index
    %c0_124 = arith.constant 0 : index
    %c0_125 = arith.constant 0 : index
    %316 = vector.load %arg8[%315, %c0_124, %c0_125] : memref<8x8x512xf32, #tpu.memory_space<vmem>>, vector<1x8x512xf32>
    %317 = vector.shape_cast %316 : vector<1x8x512xf32> to vector<8x512xf32>
    %318 = arith.truncf %310 : vector<8x128xf32> to vector<8x128xbf16>
    %c0_126 = arith.constant 0 : index
    %c0_127 = arith.constant 0 : index
    %319 = vector.load %arg3[%c0_126, %c0_127] : memref<128x512xbf16, #tpu.memory_space<vmem>>, vector<128x512xbf16>
    %cst_128 = arith.constant dense<0.000000e+00> : vector<8x512xf32>
    %320 = tpu.matmul %318, %319, %cst_128 {dimension_numbers = #tpu.dot_dimension_numbers<[1], [0], [0], [1], [0, 0, 1, 1], [], []>} : vector<8x128xbf16>, vector<128x512xbf16>, vector<8x512xf32> -> vector<8x512xf32>
    %321 = arith.addf %317, %320 : vector<8x512xf32>
    %322 = vector.extract_strided_slice %321 {offsets = [0, 0], sizes = [8, 128], strides = [1, 1]} : vector<8x512xf32> to vector<8x128xf32>
    %cst_129 = arith.constant 5.000000e-01 : f32
    %323 = vector.broadcast %cst_129 : f32 to vector<8x128xf32>
    %324 = arith.mulf %323, %322 : vector<8x128xf32>
    %325 = math.tanh %324 : vector<8x128xf32>
    %cst_130 = arith.constant 5.000000e-01 : f32
    %326 = vector.broadcast %cst_130 : f32 to vector<8x128xf32>
    %327 = arith.mulf %326, %325 : vector<8x128xf32>
    %cst_131 = arith.constant 5.000000e-01 : f32
    %328 = vector.broadcast %cst_131 : f32 to vector<8x128xf32>
    %329 = arith.addf %327, %328 : vector<8x128xf32>
    %330 = vector.extract_strided_slice %321 {offsets = [0, 128], sizes = [8, 128], strides = [1, 1]} : vector<8x512xf32> to vector<8x128xf32>
    %cst_132 = arith.constant 5.000000e-01 : f32
    %331 = vector.broadcast %cst_132 : f32 to vector<8x128xf32>
    %332 = arith.mulf %331, %330 : vector<8x128xf32>
    %333 = math.tanh %332 : vector<8x128xf32>
    %cst_133 = arith.constant 5.000000e-01 : f32
    %334 = vector.broadcast %cst_133 : f32 to vector<8x128xf32>
    %335 = arith.mulf %334, %333 : vector<8x128xf32>
    %cst_134 = arith.constant 5.000000e-01 : f32
    %336 = vector.broadcast %cst_134 : f32 to vector<8x128xf32>
    %337 = arith.addf %335, %336 : vector<8x128xf32>
    %338 = vector.extract_strided_slice %321 {offsets = [0, 256], sizes = [8, 128], strides = [1, 1]} : vector<8x512xf32> to vector<8x128xf32>
    %339 = math.tanh %338 : vector<8x128xf32>
    %340 = vector.extract_strided_slice %321 {offsets = [0, 384], sizes = [8, 128], strides = [1, 1]} : vector<8x512xf32> to vector<8x128xf32>
    %cst_135 = arith.constant 5.000000e-01 : f32
    %341 = vector.broadcast %cst_135 : f32 to vector<8x128xf32>
    %342 = arith.mulf %341, %340 : vector<8x128xf32>
    %343 = math.tanh %342 : vector<8x128xf32>
    %cst_136 = arith.constant 5.000000e-01 : f32
    %344 = vector.broadcast %cst_136 : f32 to vector<8x128xf32>
    %345 = arith.mulf %344, %343 : vector<8x128xf32>
    %cst_137 = arith.constant 5.000000e-01 : f32
    %346 = vector.broadcast %cst_137 : f32 to vector<8x128xf32>
    %347 = arith.addf %345, %346 : vector<8x128xf32>
    %348 = arith.mulf %337, %308 : vector<8x128xf32>
    %349 = arith.mulf %329, %339 : vector<8x128xf32>
    %350 = arith.addf %348, %349 : vector<8x128xf32>
    %351 = math.tanh %350 : vector<8x128xf32>
    %352 = arith.mulf %347, %351 : vector<8x128xf32>
    %353 = arith.index_cast %c7_i32 : i32 to index
    %c0_138 = arith.constant 0 : index
    %c0_139 = arith.constant 0 : index
    %354 = vector.load %arg9[%353, %c0_138, %c0_139] : memref<8x8x128xf32, #tpu.memory_space<vmem>>, vector<1x8x128xf32>
    %355 = vector.shape_cast %354 : vector<1x8x128xf32> to vector<8x128xf32>
    %356 = vector.shape_cast %352 : vector<8x128xf32> to vector<1x8x128xf32>
    tpu.vector_store %arg9[%353, %c0_138, %c0_139], %356 {strides = array<i32>} : memref<8x8x128xf32, #tpu.memory_space<vmem>>, vector<1x8x128xf32>,
    %c7_i32_140 = arith.constant 7 : i32
    %c0_141 = arith.constant 0 : index
    %c0_142 = arith.constant 0 : index
    %c0_143 = arith.constant 0 : index
    %357 = vector.load %arg9[%c0_141, %c0_142, %c0_143] : memref<8x8x128xf32, #tpu.memory_space<vmem>>, vector<8x8x128xf32>
    %358 = vector.shape_cast %357 : vector<8x8x128xf32> to vector<64x128xf32>
    %359 = arith.truncf %358 : vector<64x128xf32> to vector<64x128xbf16>
    %c0_144 = arith.constant 0 : index
    %c0_145 = arith.constant 0 : index
    %360 = vector.load %arg4[%c0_144, %c0_145] : memref<128x32xbf16, #tpu.memory_space<vmem>>, vector<128x32xbf16>
    %cst_146 = arith.constant dense<0.000000e+00> : vector<64x32xf32>
    %361 = tpu.matmul %359, %360, %cst_146 {dimension_numbers = #tpu.dot_dimension_numbers<[1], [0], [0], [1], [0, 0, 1, 1], [], []>} : vector<64x128xbf16>, vector<128x32xbf16>, vector<64x32xf32> -> vector<64x32xf32>
    %362 = vector.broadcast %2 : vector<1x32xf32> to vector<64x32xf32>
    %363 = arith.addf %361, %362 : vector<64x32xf32>
    %cst_147 = arith.constant dense<0.000000e+00> : vector<64xf32>
    %364 = vector.multi_reduction <add>, %363, %cst_147 [1] : vector<64x32xf32> to vector<64xf32>
    %365 = vector.shape_cast %364 : vector<64xf32> to vector<64x1xf32>
    %cst_148 = arith.constant 3.200000e+01 : f32
    %366 = vector.broadcast %cst_148 : f32 to vector<64x1xf32>
    %367 = arith.divf %365, %366 : vector<64x1xf32>
    %368 = vector.broadcast %367 : vector<64x1xf32> to vector<64x32xf32>
    %369 = arith.subf %363, %368 : vector<64x32xf32>
    %370 = arith.mulf %369, %369 : vector<64x32xf32>
    %cst_149 = arith.constant dense<0.000000e+00> : vector<64xf32>
    %371 = vector.multi_reduction <add>, %370, %cst_149 [1] : vector<64x32xf32> to vector<64xf32>
    %372 = vector.shape_cast %371 : vector<64xf32> to vector<64x1xf32>
    %cst_150 = arith.constant 3.200000e+01 : f32
    %373 = vector.broadcast %cst_150 : f32 to vector<64x1xf32>
    %374 = arith.divf %372, %373 : vector<64x1xf32>
    %375 = vector.broadcast %367 : vector<64x1xf32> to vector<64x32xf32>
    %376 = arith.subf %363, %375 : vector<64x32xf32>
    %cst_151 = arith.constant 9.99999974E-6 : f32
    %377 = vector.broadcast %cst_151 : f32 to vector<64x1xf32>
    %378 = arith.addf %374, %377 : vector<64x1xf32>
    %379 = math.rsqrt %378 : vector<64x1xf32>
    %380 = vector.broadcast %379 : vector<64x1xf32> to vector<64x32xf32>
    %381 = arith.mulf %376, %380 : vector<64x32xf32>
    %382 = arith.truncf %381 : vector<64x32xf32> to vector<64x32xbf16>
    %c0_152 = arith.constant 0 : index
    %c0_153 = arith.constant 0 : index
    %383 = vector.load %arg5[%c0_152, %c0_153] : memref<32x128xbf16, #tpu.memory_space<vmem>>, vector<32x128xbf16>
    %cst_154 = arith.constant dense<0.000000e+00> : vector<64x128xf32>
    %384 = tpu.matmul %382, %383, %cst_154 {dimension_numbers = #tpu.dot_dimension_numbers<[1], [0], [0], [1], [0, 0, 1, 1], [], []>} : vector<64x32xbf16>, vector<32x128xbf16>, vector<64x128xf32> -> vector<64x128xf32>
    %385 = vector.broadcast %3 : vector<1x128xf32> to vector<64x128xf32>
    %386 = arith.addf %384, %385 : vector<64x128xf32>
    %387 = vector.shape_cast %386 : vector<64x128xf32> to vector<8x8x128xf32>
    %c0_155 = arith.constant 0 : index
    %c0_156 = arith.constant 0 : index
    %c0_157 = arith.constant 0 : index
    %388 = vector.load %arg7[%c0_155, %c0_156, %c0_157] : memref<8x8x128xf32, #tpu.memory_space<vmem>>, vector<8x8x128xf32>
    tpu.vector_store %arg7[%c0_155, %c0_156, %c0_157], %387 {strides = array<i32>} : memref<8x8x128xf32, #tpu.memory_space<vmem>>, vector<8x8x128xf32>,
    return
  }
  func.func @transform_0(%arg0: i32) -> (i32, i32, i32) {
    %c0_i32 = arith.constant 0 : i32
    %c0_i32_0 = arith.constant 0 : i32
    %c0_i32_1 = arith.constant 0 : i32
    %c0_i32_2 = arith.constant 0 : i32
    return %c0_i32, %c0_i32_0, %c0_i32_1 : i32, i32, i32
  }
  func.func @transform_1(%arg0: i32) -> (i32, i32) {
    %c0_i32 = arith.constant 0 : i32
    %c0_i32_0 = arith.constant 0 : i32
    %c0_i32_1 = arith.constant 0 : i32
    return %c0_i32, %c0_i32_0 : i32, i32
  }
  func.func @transform_2(%arg0: i32) -> (i32, i32) {
    %c0_i32 = arith.constant 0 : i32
    %c0_i32_0 = arith.constant 0 : i32
    %c0_i32_1 = arith.constant 0 : i32
    return %c0_i32, %c0_i32_0 : i32, i32
  }
  func.func @transform_3(%arg0: i32) -> (i32, i32) {
    %c0_i32 = arith.constant 0 : i32
    %c0_i32_0 = arith.constant 0 : i32
    %c0_i32_1 = arith.constant 0 : i32
    return %c0_i32, %c0_i32_0 : i32, i32
  }
  func.func @transform_4(%arg0: i32) -> (i32, i32) {
    %c0_i32 = arith.constant 0 : i32
    %c0_i32_0 = arith.constant 0 : i32
    %c0_i32_1 = arith.constant 0 : i32
    return %c0_i32, %c0_i32_0 : i32, i32
  }
  func.func @transform_5(%arg0: i32) -> (i32, i32) {
    %c0_i32 = arith.constant 0 : i32
    %c0_i32_0 = arith.constant 0 : i32
    %c0_i32_1 = arith.constant 0 : i32
    return %c0_i32, %c0_i32_0 : i32, i32
  }
  func.func @transform_6(%arg0: i32) -> (i32, i32, i32) {
    %c0_i32 = arith.constant 0 : i32
    %c0_i32_0 = arith.constant 0 : i32
    %c0_i32_1 = arith.constant 0 : i32
    %c0_i32_2 = arith.constant 0 : i32
    return %c0_i32, %c0_i32_0, %c0_i32_1 : i32, i32, i32
  }
}

</mosaic_0001>

<llo_original>
// kernel: tpu_custom_call.1
$region0: #{tpu_custom_call.1}
  #allocation0 [shape = 'u32[]', space=smem, size = 0x4, offset = 0x4, fixed_abs, tag = 'smem constant byte address 0x4 - core index']
  #allocation1 [shape = 'u32[144,128]{1,0:T(1,128)}', space=vmem, size = 0x12000, scoped, tag = 'internal scratch']
  #allocation2 [shape = 'f32[8,8,512]{2,1,0:T(8,128)}', space=vmem, size = 0x20000, scoped, tag = 'scratch operand']
  #allocation3 [shape = 'f32[8,8,128]{2,1,0:T(8,128)}', space=vmem, size = 0x8000, scoped, tag = 'scratch operand']
  %s0 = inlined_call_operand.vmem [shape: f32[8,8,32], index: 0, kind: input, shape index: {}]
  %s1 = inlined_call_operand.hbm [shape: bf16[32,512], index: 1, kind: input, shape index: {}]
  %s2 = inlined_call_operand.hbm [shape: bf16[128,512], index: 2, kind: input, shape index: {}]
  %s3 = inlined_call_operand.vmem [shape: bf16[128,32], index: 3, kind: input, shape index: {}]
  %s4 = inlined_call_operand.vmem [shape: bf16[32,128], index: 4, kind: input, shape index: {}]
  %s5 = inlined_call_operand.hbm [shape: f32[8,512], index: 5, kind: input, shape index: {}]
  %s6 = inlined_call_operand.hbm [shape: f32[8,8,128], index: 6, kind: output, shape index: {}]
  %s7 = sld [smem:[#allocation0]]
  $region46: #{tpu_custom_call.1} parent=0
    _
  %s9 = ssub.s32 1, %s7
  %s10 = scalar_select 0, %s9, %s7
  $region1: #{tpu_custom_call.1} parent=0
    #allocation4 [shape = 'u8[32768]{0}', space=vmem, size = 0x8000, scoped, tag = 'input window, operand 1, single buffered']
    #allocation5 [shape = 's32[1]{0}', space=sflag, size = 0x4, scoped, tag = 'scoped memory for tpu_custom_call.1']
    #allocation6 [shape = 's32[1]{0}', space=sflag, size = 0x4, scoped, tag = 'scoped memory for tpu_custom_call.1']
    #allocation7 [shape = 'u8[131072]{0}', space=vmem, size = 0x20000, scoped, tag = 'input window, operand 2, single buffered']
    #allocation8 [shape = 's32[1]{0}', space=sflag, size = 0x4, scoped, tag = 'scoped memory for tpu_custom_call.1']
    #allocation9 [shape = 'u8[16384]{0}', space=vmem, size = 0x4000, scoped, tag = 'input window, operand 5, single buffered']
    #allocation10 [shape = 'u8[32768]{0}', space=vmem, size = 0x8000, scoped, tag = 'output window, operand 0, single buffered']
    %11 = vsyncpa [#allocation5], 0
    %12 = vsyncpa [#allocation8], 0
    %13 = vsyncpa [#allocation6], 0
    // Predicated region
    $region2: #{tpu_custom_call.1} parent=1 // pred_check
      _
    $region3: #{tpu_custom_call.1} parent=1 // pred_check_branch
      %15 = sbr.rel (0) target = $region5
    $region4: #{tpu_custom_call.1} parent=1 // pred_region
      _
    $region5: #{tpu_custom_call.1} parent=1 // pred_fallthru
      _
    // Predicated region
    $region6: #{tpu_custom_call.1} parent=1 // pred_check
      _
    $region7: #{tpu_custom_call.1} parent=1 // pred_check_branch
      %17 = sbr.rel (0) target = $region9
    $region8: #{tpu_custom_call.1} parent=1 // pred_region
      %s19 = ssub.s32 1024, 1024
      %20 = vsyncadd [#allocation5], %s19
      %s21 = sshll.u32 [#allocation4], 4
      %s22 = int_to_ptr.vmem [resolvable:$true] %s21
      %27 = dma.hbm_to_vmem [thread:$0]  %s1, 1024, %s22, [#allocation5], 256, 256, 16
    $region9: #{tpu_custom_call.1} parent=1 // pred_fallthru
      _
    // Predicated region
    $region10: #{tpu_custom_call.1} parent=1 // pred_check
      _
    $region11: #{tpu_custom_call.1} parent=1 // pred_check_branch
      %29 = sbr.rel (0) target = $region13
    $region12: #{tpu_custom_call.1} parent=1 // pred_region
      %s31 = ssub.s32 4096, 4096
      %32 = vsyncadd [#allocation8], %s31
      %s33 = sshll.u32 [#allocation7], 4
      %s34 = int_to_ptr.vmem [resolvable:$true] %s33
      %39 = dma.hbm_to_vmem [thread:$0]  %s2, 4096, %s34, [#allocation8], 256, 256, 16
    $region13: #{tpu_custom_call.1} parent=1 // pred_fallthru
      _
    // Predicated region
    $region14: #{tpu_custom_call.1} parent=1 // pred_check
      _
    $region15: #{tpu_custom_call.1} parent=1 // pred_check_branch
      %41 = sbr.rel (0) target = $region17
    $region16: #{tpu_custom_call.1} parent=1 // pred_region
      _
    $region17: #{tpu_custom_call.1} parent=1 // pred_fallthru
      _
    // Predicated region
    $region18: #{tpu_custom_call.1} parent=1 // pred_check
      _
    $region19: #{tpu_custom_call.1} parent=1 // pred_check_branch
      %43 = sbr.rel (0) target = $region21
    $region20: #{tpu_custom_call.1} parent=1 // pred_region
      _
    $region21: #{tpu_custom_call.1} parent=1 // pred_fallthru
      _
    // Predicated region
    $region22: #{tpu_custom_call.1} parent=1 // pred_check
      _
    $region23: #{tpu_custom_call.1} parent=1 // pred_check_branch
      %45 = sbr.rel (0) target = $region25
    $region24: #{tpu_custom_call.1} parent=1 // pred_region
      %s47 = ssub.s32 512, 512
      %48 = vsyncadd [#allocation8], %s47
      %s50 = sshll.u32 [#allocation9], 4
      %s51 = int_to_ptr.vmem [resolvable:$true] %s50
      %53 = dma.hbm_to_vmem [thread:$0]  %s5, 512, %s51, [#allocation8]
    $region25: #{tpu_custom_call.1} parent=1 // pred_fallthru
      _
    // Predicated region
    $region26: #{tpu_custom_call.1} parent=1 // pred_check
      _
    $region27: #{tpu_custom_call.1} parent=1 // pred_check_branch
      %55 = sbr.rel (0) target = $region29
    $region28: #{tpu_custom_call.1} parent=1 // pred_region
      %56 = dma.done [#allocation5], 1024
    $region29: #{tpu_custom_call.1} parent=1 // pred_fallthru
      _
    // Predicated region
    $region30: #{tpu_custom_call.1} parent=1 // pred_check
      _
    $region31: #{tpu_custom_call.1} parent=1 // pred_check_branch
      %58 = sbr.rel (0) target = $region33
    $region32: #{tpu_custom_call.1} parent=1 // pred_region
      %59 = dma.done [#allocation8], 4096
    $region33: #{tpu_custom_call.1} parent=1 // pred_fallthru
      _
    // Predicated region
    $region34: #{tpu_custom_call.1} parent=1 // pred_check
      _
    $region35: #{tpu_custom_call.1} parent=1 // pred_check_branch
      %61 = sbr.rel (0) target = $region37
    $region36: #{tpu_custom_call.1} parent=1 // pred_region
      %62 = dma.done [#allocation8], 512
    $region37: #{tpu_custom_call.1} parent=1 // pred_fallthru
      _
    %v64 = vld [vmem:[#allocation9] sm:$0xff]
    %v65 = vld [vmem:[#allocation9 + $0x8] sm:$0xff]
    %v66 = vld [vmem:[#allocation9 + $0x10] sm:$0xff]
    %v67 = vld [vmem:[#allocation9 + $0x18] sm:$0xff]
    %v68 = vld [vmem:[%s0] sm:$0xff]
    %v69 = vld [vmem:[%s0 + $0x8] sm:$0xff]
    %v70 = vld [vmem:[%s0 + $0x10] sm:$0xff]
    %v71 = vld [vmem:[%s0 + $0x18] sm:$0xff]
    %v72 = vld [vmem:[%s0 + $0x20] sm:$0xff]
    %v73 = vld [vmem:[%s0 + $0x28] sm:$0xff]
    %v74 = vld [vmem:[%s0 + $0x30] sm:$0xff]
    %v75 = vld [vmem:[%s0 + $0x38] sm:$0xff]
    %vm76 = vcmask 261120
    %v77 = vsel %vm76, %v68, 0.0
    %78 = vadd.xlane.f32.xlu0 %v77
    %v79 = vpop.xlane.xlu0 %78
    %v80 = vsel %vm76, %v69, 0.0
    %81 = vadd.xlane.f32.xlu0 %v80
    %v82 = vpop.xlane.xlu0 %81
    %v83 = vsel %vm76, %v70, 0.0
    %84 = vadd.xlane.f32.xlu0 %v83
    %v85 = vpop.xlane.xlu0 %84
    %v86 = vsel %vm76, %v71, 0.0
    %87 = vadd.xlane.f32.xlu0 %v86
    %v88 = vpop.xlane.xlu0 %87
    %v89 = vsel %vm76, %v72, 0.0
    %90 = vadd.xlane.f32.xlu0 %v89
    %v91 = vpop.xlane.xlu0 %90
    %v92 = vsel %vm76, %v73, 0.0
    %93 = vadd.xlane.f32.xlu0 %v92
    %v94 = vpop.xlane.xlu0 %93
    %v95 = vsel %vm76, %v74, 0.0
    %96 = vadd.xlane.f32.xlu0 %v95
    %v97 = vpop.xlane.xlu0 %96
    %v98 = vsel %vm76, %v75, 0.0
    %99 = vadd.xlane.f32.xlu0 %v98
    %v100 = vpop.xlane.xlu0 %99
    %v101 = vrcp.pop 32.0
    %v102 = vmul.f32 %v79, %v101
    %v103 = vmul.f32 %v82, %v101
    %v104 = vmul.f32 %v85, %v101
    %v105 = vmul.f32 %v88, %v101
    %v106 = vmul.f32 %v91, %v101
    %v107 = vmul.f32 %v94, %v101
    %v108 = vmul.f32 %v97, %v101
    %v109 = vmul.f32 %v100, %v101
    %v110 = vsub.f32 %v68, %v102
    %v111 = vsub.f32 %v69, %v103
    %v112 = vsub.f32 %v70, %v104
    %v113 = vsub.f32 %v71, %v105
    %v114 = vsub.f32 %v72, %v106
    %v115 = vsub.f32 %v73, %v107
    %v116 = vsub.f32 %v74, %v108
    %v117 = vsub.f32 %v75, %v109
    %v118 = vmul.f32 %v110, %v110
    %v119 = vmul.f32 %v111, %v111
    %v120 = vmul.f32 %v112, %v112
    %v121 = vmul.f32 %v113, %v113
    %v122 = vmul.f32 %v114, %v114
    %v123 = vmul.f32 %v115, %v115
    %v124 = vmul.f32 %v116, %v116
    %v125 = vmul.f32 %v117, %v117
    %v126 = vsel %vm76, %v118, 0.0
    %127 = vadd.xlane.f32.xlu0 %v126
    %v128 = vpop.xlane.xlu0 %127
    %v129 = vsel %vm76, %v119, 0.0
    %130 = vadd.xlane.f32.xlu0 %v129
    %v131 = vpop.xlane.xlu0 %130
    %v132 = vsel %vm76, %v120, 0.0
    %133 = vadd.xlane.f32.xlu0 %v132
    %v134 = vpop.xlane.xlu0 %133
    %v135 = vsel %vm76, %v121, 0.0
    %136 = vadd.xlane.f32.xlu0 %v135
    %v137 = vpop.xlane.xlu0 %136
    %v138 = vsel %vm76, %v122, 0.0
    %139 = vadd.xlane.f32.xlu0 %v138
    %v140 = vpop.xlane.xlu0 %139
    %v141 = vsel %vm76, %v123, 0.0
    %142 = vadd.xlane.f32.xlu0 %v141
    %v143 = vpop.xlane.xlu0 %142
    %v144 = vsel %vm76, %v124, 0.0
    %145 = vadd.xlane.f32.xlu0 %v144
    %v146 = vpop.xlane.xlu0 %145
    %v147 = vsel %vm76, %v125, 0.0
    %148 = vadd.xlane.f32.xlu0 %v147
    %v149 = vpop.xlane.xlu0 %148
    %v150 = vmul.f32 %v128, %v101
    %v151 = vmul.f32 %v131, %v101
    %v152 = vmul.f32 %v134, %v101
    %v153 = vmul.f32 %v137, %v101
    %v154 = vmul.f32 %v140, %v101
    %v155 = vmul.f32 %v143, %v101
    %v156 = vmul.f32 %v146, %v101
    %v157 = vmul.f32 %v149, %v101
    %v158 = vadd.f32 %v150, 1e-05
    %v159 = vadd.f32 %v151, 1e-05
    %v160 = vadd.f32 %v152, 1e-05
    %v161 = vadd.f32 %v153, 1e-05
    %v162 = vadd.f32 %v154, 1e-05
    %v163 = vadd.f32 %v155, 1e-05
    %v164 = vadd.f32 %v156, 1e-05
    %v165 = vadd.f32 %v157, 1e-05
    %v166 = vrsqrt.pop %v158
    %v167 = vrsqrt.pop %v159
    %v168 = vrsqrt.pop %v160
    %v169 = vrsqrt.pop %v161
    %v170 = vrsqrt.pop %v162
    %v171 = vrsqrt.pop %v163
    %v172 = vrsqrt.pop %v164
    %v173 = vrsqrt.pop %v165
    %v174 = vmul.f32 %v110, %v166
    %v175 = vmul.f32 %v111, %v167
    %v176 = vmul.f32 %v112, %v168
    %v177 = vmul.f32 %v113, %v169
    %v178 = vmul.f32 %v114, %v170
    %v179 = vmul.f32 %v115, %v171
    %v180 = vmul.f32 %v116, %v172
    %v181 = vmul.f32 %v117, %v173
    %v182 = vsel %vm76, %v174, 0.0
    %v183 = vsel %vm76, %v175, 0.0
    %v184 = vadd.f32 %v182, %v183
    %v185 = vsel %vm76, %v176, 0.0
    %v186 = vadd.f32 %v184, %v185
    %v187 = vsel %vm76, %v177, 0.0
    %v188 = vadd.f32 %v186, %v187
    %v189 = vsel %vm76, %v178, 0.0
    %v190 = vadd.f32 %v188, %v189
    %v191 = vsel %vm76, %v179, 0.0
    %v192 = vadd.f32 %v190, %v191
    %v193 = vsel %vm76, %v180, 0.0
    %v194 = vadd.f32 %v192, %v193
    %v195 = vsel %vm76, %v181, 0.0
    %v196 = vadd.f32 %v194, %v195
    %v197 = vrcp.pop 8.0
    %v198 = vmul.f32 %v196, %v197
    %v199 = vsub.f32 %v174, %v198
    %v200 = vsub.f32 %v175, %v198
    %v201 = vsub.f32 %v176, %v198
    %v202 = vsub.f32 %v177, %v198
    %v203 = vsub.f32 %v178, %v198
    %v204 = vsub.f32 %v179, %v198
    %v205 = vsub.f32 %v180, %v198
    %v206 = vsub.f32 %v181, %v198
    %v207 = vpack.c.bf16 %v200, %v199
    %v208 = vpack.c.bf16 %v202, %v201
    %v209 = vpack.c.bf16 %v204, %v203
    %v210 = vpack.c.bf16 %v206, %v205
    %v211 = vld [vmem:[#allocation4] sm:$0xff]
    %v212 = vld [vmem:[#allocation4 + $0x8] sm:$0xff]
    %v213 = vld [vmem:[#allocation4 + $0x10] sm:$0xff]
    %v214 = vld [vmem:[#allocation4 + $0x18] sm:$0xff]
    %v215 = vld [vmem:[#allocation4 + $0x20] sm:$0xff]
    %v216 = vld [vmem:[#allocation4 + $0x28] sm:$0xff]
    %v217 = vld [vmem:[#allocation4 + $0x30] sm:$0xff]
    %v218 = vld [vmem:[#allocation4 + $0x38] sm:$0xff]
    %v219 = vlaneseq
    %v220 = vshrl.u32 %v219, 7
    %v221 = vsub.s32 0, %v220
    %v222 = vrot.slane %v64, %v221
    %v223 = vlaneseq
    %v224 = vshrl.u32 %v223, 7
    %v225 = vsub.s32 0, %v224
    %v226 = vrot.slane %v65, %v225
    %v227 = vlaneseq
    %v228 = vshrl.u32 %v227, 7
    %v229 = vsub.s32 0, %v228
    %v230 = vrot.slane %v66, %v229
    %v231 = vlaneseq
    %v232 = vshrl.u32 %v231, 7
    %v233 = vsub.s32 0, %v232
    %v234 = vrot.slane %v67, %v233
    %v243 = vunpack.c.l.b16 %v211
    %v244 = vunpack.c.h.b16 %v211
    %v245 = vunpack.c.l.b16 %v212
    %v246 = vunpack.c.h.b16 %v212
    %v247 = vunpack.c.l.b16 %v213
    %v248 = vunpack.c.h.b16 %v213
    %v249 = vunpack.c.l.b16 %v214
    %v250 = vunpack.c.h.b16 %v214
    %v251 = vunpack.c.l.b16 %v215
    %v252 = vunpack.c.h.b16 %v215
    %v253 = vunpack.c.l.b16 %v216
    %v254 = vunpack.c.h.b16 %v216
    %v255 = vunpack.c.l.b16 %v217
    %v256 = vunpack.c.h.b16 %v217
    %v257 = vunpack.c.l.b16 %v218
    %v258 = vunpack.c.h.b16 %v218
    %v259 = vpack.c.b16 %v247, %v243
    %v260 = vpack.c.b16 %v248, %v244
    %v261 = vpack.c.b16 %v249, %v245
    %v262 = vpack.c.b16 %v250, %v246
    %v263 = vpack.c.b16 %v255, %v251
    %v264 = vpack.c.b16 %v256, %v252
    %v265 = vpack.c.b16 %v257, %v253
    %v266 = vpack.c.b16 %v258, %v254
    %v276 = vsel %vm76, %v207, 0
    %v279 = vsel %vm76, %v208, 0
    %v282 = vsel %vm76, %v209, 0
    %v285 = vsel %vm76, %v210, 0
    %287 = vmatprep.subr.bf16.mxu0 0
    %288 = vmatpush1.bf16.msra.mxu0 0
    %289 = vmatprep.subr.bf16.mxu0 0
    %290 = vmatpush1.bf16.msra.mxu0 0
    %291 = vmatprep.subr.bf16.mxu0 0
    %292 = vmatpush1.bf16.msra.mxu0 0
    %293 = vmatprep.subr.bf16.mxu0 0
    %294 = vmatpush1.bf16.msra.mxu0 0
    %295 = vmatprep.subr.bf16.mxu0 0
    %296 = vmatpush1.bf16.msra.mxu0 0
    %297 = vmatprep.subr.bf16.mxu0 0
    %298 = vmatpush1.bf16.msra.mxu0 0
    %299 = vmatprep.subr.bf16.mxu0 %v264
    %300 = vmatpush1.bf16.msra.mxu0 %v263
    %301 = vmatprep.subr.bf16.mxu0 %v260
    %302 = vmatpush1.bf16.msra.mxu0 %v259
    %303 = vmatprep.subr.bf16.mxu0 0
    %304 = vmatpush2.bf16.msra.mxu0 0
    %305 = vmatprep.subr.bf16.mxu0 0
    %306 = vmatpush2.bf16.msra.mxu0 0
    %307 = vmatprep.subr.bf16.mxu0 0
    %308 = vmatpush2.bf16.msra.mxu0 0
    %309 = vmatprep.subr.bf16.mxu0 0
    %310 = vmatpush2.bf16.msra.mxu0 0
    %311 = vmatprep.subr.bf16.mxu0 0
    %312 = vmatpush2.bf16.msra.mxu0 0
    %313 = vmatprep.subr.bf16.mxu0 0
    %314 = vmatpush2.bf16.msra.mxu0 0
    %315 = vmatprep.subr.bf16.mxu0 0
    %316 = vmatpush2.bf16.msra.mxu0 0
    %317 = vmatprep.subr.bf16.mxu0 0
    %318 = vmatpush2.bf16.msra.mxu0 0
    %319 = vmatprep.mubr.bf16.mxu0 0
    %320 = vmatmul.mubr.bf16.gmra.mxu0 %v276
    %v321 = vpop.f32.mrf.mxu0
    %v322 = vadd.f32 %v222, %v321
    %v323 = vpop.f32.mrf.mxu0
    %v324 = vadd.f32 %v226, %v323
    %v325 = vpop.f32.mrf.mxu0
    %v326 = vadd.f32 %v222, %v325
    %v327 = vpop.f32.mrf.mxu0
    %v328 = vadd.f32 %v226, %v327
    %329 = vmatprep.mubr.bf16.mxu0 0
    %330 = vmatmul.mubr.bf16.gmra.mxu0 %v279
    %v331 = vpop.f32.mrf.mxu0
    %v332 = vadd.f32 %v222, %v331
    %v333 = vpop.f32.mrf.mxu0
    %v334 = vadd.f32 %v226, %v333
    %v335 = vpop.f32.mrf.mxu0
    %v336 = vadd.f32 %v222, %v335
    %v337 = vpop.f32.mrf.mxu0
    %v338 = vadd.f32 %v226, %v337
    %339 = vmatprep.mubr.bf16.mxu0 0
    %340 = vmatmul.mubr.bf16.gmra.mxu0 %v282
    %v341 = vpop.f32.mrf.mxu0
    %v342 = vadd.f32 %v222, %v341
    %v343 = vpop.f32.mrf.mxu0
    %v344 = vadd.f32 %v226, %v343
    %v345 = vpop.f32.mrf.mxu0
    %v346 = vadd.f32 %v222, %v345
    %v347 = vpop.f32.mrf.mxu0
    %v348 = vadd.f32 %v226, %v347
    %349 = vmatprep.mubr.bf16.mxu0 0
    %350 = vmatmul.mubr.bf16.gmra.mxu0 %v285
    %v351 = vpop.f32.mrf.mxu0
    %v352 = vadd.f32 %v222, %v351
    %v353 = vpop.f32.mrf.mxu0
    %v354 = vadd.f32 %v226, %v353
    %v355 = vpop.f32.mrf.mxu0
    %v356 = vadd.f32 %v222, %v355
    %v357 = vpop.f32.mrf.mxu0
    %v358 = vadd.f32 %v226, %v357
    %359 = vdwg.mxu0
    %360 = vmatprep.subr.bf16.mxu0 0
    %361 = vmatpush1.bf16.msra.mxu0 0
    %362 = vmatprep.subr.bf16.mxu0 0
    %363 = vmatpush1.bf16.msra.mxu0 0
    %364 = vmatprep.subr.bf16.mxu0 0
    %365 = vmatpush1.bf16.msra.mxu0 0
    %366 = vmatprep.subr.bf16.mxu0 0
    %367 = vmatpush1.bf16.msra.mxu0 0
    %368 = vmatprep.subr.bf16.mxu0 0
    %369 = vmatpush1.bf16.msra.mxu0 0
    %370 = vmatprep.subr.bf16.mxu0 0
    %371 = vmatpush1.bf16.msra.mxu0 0
    %372 = vmatprep.subr.bf16.mxu0 %v266
    %373 = vmatpush1.bf16.msra.mxu0 %v265
    %374 = vmatprep.subr.bf16.mxu0 %v262
    %375 = vmatpush1.bf16.msra.mxu0 %v261
    %376 = vmatprep.subr.bf16.mxu0 0
    %377 = vmatpush2.bf16.msra.mxu0 0
    %378 = vmatprep.subr.bf16.mxu0 0
    %379 = vmatpush2.bf16.msra.mxu0 0
    %380 = vmatprep.subr.bf16.mxu0 0
    %381 = vmatpush2.bf16.msra.mxu0 0
    %382 = vmatprep.subr.bf16.mxu0 0
    %383 = vmatpush2.bf16.msra.mxu0 0
    %384 = vmatprep.subr.bf16.mxu0 0
    %385 = vmatpush2.bf16.msra.mxu0 0
    %386 = vmatprep.subr.bf16.mxu0 0
    %387 = vmatpush2.bf16.msra.mxu0 0
    %388 = vmatprep.subr.bf16.mxu0 0
    %389 = vmatpush2.bf16.msra.mxu0 0
    %390 = vmatprep.subr.bf16.mxu0 0
    %391 = vmatpush2.bf16.msra.mxu0 0
    %392 = vmatprep.mubr.bf16.mxu0 0
    %393 = vmatmul.mubr.bf16.gmra.mxu0 %v276
    %v394 = vpop.f32.mrf.mxu0
    %v395 = vadd.f32 %v230, %v394
    %v396 = vpop.f32.mrf.mxu0
    %v397 = vadd.f32 %v234, %v396
    %v398 = vpop.f32.mrf.mxu0
    %v399 = vadd.f32 %v230, %v398
    %v400 = vpop.f32.mrf.mxu0
    %v401 = vadd.f32 %v234, %v400
    %402 = vmatprep.mubr.bf16.mxu0 0
    %403 = vmatmul.mubr.bf16.gmra.mxu0 %v279
    %v404 = vpop.f32.mrf.mxu0
    %v405 = vadd.f32 %v230, %v404
    %v406 = vpop.f32.mrf.mxu0
    %v407 = vadd.f32 %v234, %v406
    %v408 = vpop.f32.mrf.mxu0
    %v409 = vadd.f32 %v230, %v408
    %v410 = vpop.f32.mrf.mxu0
    %v411 = vadd.f32 %v234, %v410
    %412 = vmatprep.mubr.bf16.mxu0 0
    %413 = vmatmul.mubr.bf16.gmra.mxu0 %v282
    %v414 = vpop.f32.mrf.mxu0
    %v415 = vadd.f32 %v230, %v414
    %v416 = vpop.f32.mrf.mxu0
    %v417 = vadd.f32 %v234, %v416
    %v418 = vpop.f32.mrf.mxu0
    %v419 = vadd.f32 %v230, %v418
    %v420 = vpop.f32.mrf.mxu0
    %v421 = vadd.f32 %v234, %v420
    %422 = vmatprep.mubr.bf16.mxu0 0
    %423 = vmatmul.mubr.bf16.gmra.mxu0 %v285
    %v424 = vpop.f32.mrf.mxu0
    %v425 = vadd.f32 %v230, %v424
    %v426 = vpop.f32.mrf.mxu0
    %v427 = vadd.f32 %v234, %v426
    %v428 = vpop.f32.mrf.mxu0
    %v429 = vadd.f32 %v230, %v428
    %v430 = vpop.f32.mrf.mxu0
    %v431 = vadd.f32 %v234, %v430
    %432 = vdwg.mxu0
    %433 = vst [vmem:[#allocation2] sm:$0xff] %v322
    %434 = vst [vmem:[#allocation2 + $0x8] sm:$0xff] %v324
    %435 = vst [vmem:[#allocation2 + $0x10] sm:$0xff] %v395
    %436 = vst [vmem:[#allocation2 + $0x18] sm:$0xff] %v397
    %437 = vst [vmem:[#allocation2 + $0x20] sm:$0xff] %v326
    %438 = vst [vmem:[#allocation2 + $0x28] sm:$0xff] %v328
    %439 = vst [vmem:[#allocation2 + $0x30] sm:$0xff] %v399
    %440 = vst [vmem:[#allocation2 + $0x38] sm:$0xff] %v401
    %441 = vst [vmem:[#allocation2 + $0x40] sm:$0xff] %v332
    %442 = vst [vmem:[#allocation2 + $0x48] sm:$0xff] %v334
    %443 = vst [vmem:[#allocation2 + $0x50] sm:$0xff] %v405
    %444 = vst [vmem:[#allocation2 + $0x58] sm:$0xff] %v407
    %445 = vst [vmem:[#allocation2 + $0x60] sm:$0xff] %v336
    %446 = vst [vmem:[#allocation2 + $0x68] sm:$0xff] %v338
    %447 = vst [vmem:[#allocation2 + $0x70] sm:$0xff] %v409
    %448 = vst [vmem:[#allocation2 + $0x78] sm:$0xff] %v411
    %449 = vst [vmem:[#allocation2 + $0x80] sm:$0xff] %v342
    %450 = vst [vmem:[#allocation2 + $0x88] sm:$0xff] %v344
    %451 = vst [vmem:[#allocation2 + $0x90] sm:$0xff] %v415
    %452 = vst [vmem:[#allocation2 + $0x98] sm:$0xff] %v417
    %453 = vst [vmem:[#allocation2 + $0xa0] sm:$0xff] %v346
    %454 = vst [vmem:[#allocation2 + $0xa8] sm:$0xff] %v348
    %455 = vst [vmem:[#allocation2 + $0xb0] sm:$0xff] %v419
    %456 = vst [vmem:[#allocation2 + $0xb8] sm:$0xff] %v421
    %457 = vst [vmem:[#allocation2 + $0xc0] sm:$0xff] %v352
    %458 = vst [vmem:[#allocation2 + $0xc8] sm:$0xff] %v354
    %459 = vst [vmem:[#allocation2 + $0xd0] sm:$0xff] %v425
    %460 = vst [vmem:[#allocation2 + $0xd8] sm:$0xff] %v427
    %461 = vst [vmem:[#allocation2 + $0xe0] sm:$0xff] %v356
    %462 = vst [vmem:[#allocation2 + $0xe8] sm:$0xff] %v358
    %463 = vst [vmem:[#allocation2 + $0xf0] sm:$0xff] %v429
    %464 = vst [vmem:[#allocation2 + $0xf8] sm:$0xff] %v431
    %v465 = vld [vmem:[#allocation2] sm:$0xff]
    %v466 = vld [vmem:[#allocation2 + $0x10] sm:$0xff]
    %v467 = vld [vmem:[#allocation2 + $0x18] sm:$0xff]
    %v468 = vmul.f32 %v465, 0.5
    %v469 = vtanh.pop %v468
    %v470 = vmul.f32 %v469, 0.5
    %v471 = vadd.f32 %v470, 0.5
    %v472 = vtanh.pop %v466
    %v473 = vmul.f32 %v467, 0.5
    %v474 = vtanh.pop %v473
    %v475 = vmul.f32 %v474, 0.5
    %v476 = vadd.f32 %v475, 0.5
    %v477 = vmul.f32 %v471, %v472
    %v478 = vtanh.pop %v477
    %v479 = vmul.f32 %v476, %v478
    %480 = vst [vmem:[#allocation3] sm:$0xff] %v479
    %s481 = scalar_lea.vmem [#allocation2], 32
    %v482 = vld [vmem:[%s481] sm:$0xff]
    %v483 = vld [vmem:[%s481 + $0x8] sm:$0xff]
    %v484 = vld [vmem:[%s481 + $0x10] sm:$0xff]
    %v485 = vld [vmem:[%s481 + $0x18] sm:$0xff]
    %v486 = vpack.c.bf16 %v479, %v479
    %v487 = vld [vmem:[#allocation7] sm:$0xff]
    %v488 = vld [vmem:[#allocation7 + $0x8] sm:$0xff]
    %v489 = vld [vmem:[#allocation7 + $0x10] sm:$0xff]
    %v490 = vld [vmem:[#allocation7 + $0x18] sm:$0xff]
    %v491 = vld [vmem:[#allocation7 + $0x20] sm:$0xff]
    %v492 = vld [vmem:[#allocation7 + $0x28] sm:$0xff]
    %v493 = vld [vmem:[#allocation7 + $0x30] sm:$0xff]
    %v494 = vld [vmem:[#allocation7 + $0x38] sm:$0xff]
    %v495 = vld [vmem:[#allocation7 + $0x40] sm:$0xff]
    %v496 = vld [vmem:[#allocation7 + $0x48] sm:$0xff]
    %v497 = vld [vmem:[#allocation7 + $0x50] sm:$0xff]
    %v498 = vld [vmem:[#allocation7 + $0x58] sm:$0xff]
    %v499 = vld [vmem:[#allocation7 + $0x60] sm:$0xff]
    %v500 = vld [vmem:[#allocation7 + $0x68] sm:$0xff]
    %v501 = vld [vmem:[#allocation7 + $0x70] sm:$0xff]
    %v502 = vld [vmem:[#allocation7 + $0x78] sm:$0xff]
    %v503 = vld [vmem:[#allocation7 + $0x80] sm:$0xff]
    %v504 = vld [vmem:[#allocation7 + $0x88] sm:$0xff]
    %v505 = vld [vmem:[#allocation7 + $0x90] sm:$0xff]
    %v506 = vld [vmem:[#allocation7 + $0x98] sm:$0xff]
    %v507 = vld [vmem:[#allocation7 + $0xa0] sm:$0xff]
    %v508 = vld [vmem:[#allocation7 + $0xa8] sm:$0xff]
    %v509 = vld [vmem:[#allocation7 + $0xb0] sm:$0xff]
    %v510 = vld [vmem:[#allocation7 + $0xb8] sm:$0xff]
    %v511 = vld [vmem:[#allocation7 + $0xc0] sm:$0xff]
    %v512 = vld [vmem:[#allocation7 + $0xc8] sm:$0xff]
    %v513 = vld [vmem:[#allocation7 + $0xd0] sm:$0xff]
    %v514 = vld [vmem:[#allocation7 + $0xd8] sm:$0xff]
    %v515 = vld [vmem:[#allocation7 + $0xe0] sm:$0xff]
    %v516 = vld [vmem:[#allocation7 + $0xe8] sm:$0xff]
    %v517 = vld [vmem:[#allocation7 + $0xf0] sm:$0xff]
    %v518 = vld [vmem:[#allocation7 + $0xf8] sm:$0xff]
    %v551 = vunpack.c.l.b16 %v487
    %v552 = vunpack.c.h.b16 %v487
    %v553 = vunpack.c.l.b16 %v488
    %v554 = vunpack.c.h.b16 %v488
    %v555 = vunpack.c.l.b16 %v489
    %v556 = vunpack.c.h.b16 %v489
    %v557 = vunpack.c.l.b16 %v490
    %v558 = vunpack.c.h.b16 %v490
    %v559 = vunpack.c.l.b16 %v491
    %v560 = vunpack.c.h.b16 %v491
    %v561 = vunpack.c.l.b16 %v492
    %v562 = vunpack.c.h.b16 %v492
    %v563 = vunpack.c.l.b16 %v493
    %v564 = vunpack.c.h.b16 %v493
    %v565 = vunpack.c.l.b16 %v494
    %v566 = vunpack.c.h.b16 %v494
    %v567 = vunpack.c.l.b16 %v495
    %v568 = vunpack.c.h.b16 %v495
    %v569 = vunpack.c.l.b16 %v496
    %v570 = vunpack.c.h.b16 %v496
    %v571 = vunpack.c.l.b16 %v497
    %v572 = vunpack.c.h.b16 %v497
    %v573 = vunpack.c.l.b16 %v498
    %v574 = vunpack.c.h.b16 %v498
    %v575 = vunpack.c.l.b16 %v499
    %v576 = vunpack.c.h.b16 %v499
    %v577 = vunpack.c.l.b16 %v500
    %v578 = vunpack.c.h.b16 %v500
    %v579 = vunpack.c.l.b16 %v501
    %v580 = vunpack.c.h.b16 %v501
    %v581 = vunpack.c.l.b16 %v502
    %v582 = vunpack.c.h.b16 %v502
    %v583 = vunpack.c.l.b16 %v503
    %v584 = vunpack.c.h.b16 %v503
    %v585 = vunpack.c.l.b16 %v504
    %v586 = vunpack.c.h.b16 %v504
    %v587 = vunpack.c.l.b16 %v505
    %v588 = vunpack.c.h.b16 %v505
    %v589 = vunpack.c.l.b16 %v506
    %v590 = vunpack.c.h.b16 %v506
    %v591 = vunpack.c.l.b16 %v507
    %v592 = vunpack.c.h.b16 %v507
    %v593 = vunpack.c.l.b16 %v508
    %v594 = vunpack.c.h.b16 %v508
    %v595 = vunpack.c.l.b16 %v509
    %v596 = vunpack.c.h.b16 %v509
    %v597 = vunpack.c.l.b16 %v510
    %v598 = vunpack.c.h.b16 %v510
    %v599 = vunpack.c.l.b16 %v511
    %v600 = vunpack.c.h.b16 %v511
    %v601 = vunpack.c.l.b16 %v512
    %v602 = vunpack.c.h.b16 %v512
    %v603 = vunpack.c.l.b16 %v513
    %v604 = vunpack.c.h.b16 %v513
    %v605 = vunpack.c.l.b16 %v514
    %v606 = vunpack.c.h.b16 %v514
    %v607 = vunpack.c.l.b16 %v515
    %v608 = vunpack.c.h.b16 %v515
    %v609 = vunpack.c.l.b16 %v516
    %v610 = vunpack.c.h.b16 %v516
    %v611 = vunpack.c.l.b16 %v517
    %v612 = vunpack.c.h.b16 %v517
    %v613 = vunpack.c.l.b16 %v518
    %v614 = vunpack.c.h.b16 %v518
    %v615 = vpack.c.b16 %v555, %v551
    %v616 = vpack.c.b16 %v556, %v552
    %v617 = vpack.c.b16 %v557, %v553
    %v618 = vpack.c.b16 %v558, %v554
    %v619 = vpack.c.b16 %v563, %v559
    %v620 = vpack.c.b16 %v564, %v560
    %v621 = vpack.c.b16 %v565, %v561
    %v622 = vpack.c.b16 %v566, %v562
    %v623 = vpack.c.b16 %v571, %v567
    %v624 = vpack.c.b16 %v572, %v568
    %v625 = vpack.c.b16 %v573, %v569
    %v626 = vpack.c.b16 %v574, %v570
    %v627 = vpack.c.b16 %v579, %v575
    %v628 = vpack.c.b16 %v580, %v576
    %v629 = vpack.c.b16 %v581, %v577
    %v630 = vpack.c.b16 %v582, %v578
    %v631 = vpack.c.b16 %v587, %v583
    %v632 = vpack.c.b16 %v588, %v584
    %v633 = vpack.c.b16 %v589, %v585
    %v634 = vpack.c.b16 %v590, %v586
    %v635 = vpack.c.b16 %v595, %v591
    %v636 = vpack.c.b16 %v596, %v592
    %v637 = vpack.c.b16 %v597, %v593
    %v638 = vpack.c.b16 %v598, %v594
    %v639 = vpack.c.b16 %v603, %v599
    %v640 = vpack.c.b16 %v604, %v600
    %v641 = vpack.c.b16 %v605, %v601
    %v642 = vpack.c.b16 %v606, %v602
    %v643 = vpack.c.b16 %v611, %v607
    %v644 = vpack.c.b16 %v612, %v608
    %v645 = vpack.c.b16 %v613, %v609
    %v646 = vpack.c.b16 %v614, %v610
    %679 = vmatprep.subr.bf16.mxu0 %v644
    %680 = vmatpush1.bf16.msra.mxu0 %v643
    %681 = vmatprep.subr.bf16.mxu0 %v640
    %682 = vmatpush1.bf16.msra.mxu0 %v639
    %683 = vmatprep.subr.bf16.mxu0 %v636
    %684 = vmatpush1.bf16.msra.mxu0 %v635
    %685 = vmatprep.subr.bf16.mxu0 %v632
    %686 = vmatpush1.bf16.msra.mxu0 %v631
    %687 = vmatprep.subr.bf16.mxu0 %v628
    %688 = vmatpush1.bf16.msra.mxu0 %v627
    %689 = vmatprep.subr.bf16.mxu0 %v624
    %690 = vmatpush1.bf16.msra.mxu0 %v623
    %691 = vmatprep.subr.bf16.mxu0 %v620
    %692 = vmatpush1.bf16.msra.mxu0 %v619
    %693 = vmatprep.subr.bf16.mxu0 %v616
    %694 = vmatpush1.bf16.msra.mxu0 %v615
    %695 = vmatprep.subr.bf16.mxu0 0
    %696 = vmatpush2.bf16.msra.mxu0 0
    %697 = vmatprep.subr.bf16.mxu0 0
    %698 = vmatpush2.bf16.msra.mxu0 0
    %699 = vmatprep.subr.bf16.mxu0 0
    %700 = vmatpush2.bf16.msra.mxu0 0
    %701 = vmatprep.subr.bf16.mxu0 0
    %702 = vmatpush2.bf16.msra.mxu0 0
    %703 = vmatprep.subr.bf16.mxu0 0
    %704 = vmatpush2.bf16.msra.mxu0 0
    %705 = vmatprep.subr.bf16.mxu0 0
    %706 = vmatpush2.bf16.msra.mxu0 0
    %707 = vmatprep.subr.bf16.mxu0 0
    %708 = vmatpush2.bf16.msra.mxu0 0
    %709 = vmatprep.subr.bf16.mxu0 0
    %710 = vmatpush2.bf16.msra.mxu0 0
    %711 = vmatprep.mubr.bf16.mxu0 0
    %712 = vmatmul.mubr.bf16.gmra.mxu0 %v486
    %v713 = vpop.f32.mrf.mxu0
    %v714 = vadd.f32 0.0, %v713
    %v715 = vpop.f32.mrf.mxu0
    %v716 = vadd.f32 0.0, %v715
    %v717 = vpop.f32.mrf.mxu0
    %v718 = vpop.f32.mrf.mxu0
    %719 = vdwg.mxu0
    %720 = vmatprep.subr.bf16.mxu0 %v646
    %721 = vmatpush1.bf16.msra.mxu0 %v645
    %722 = vmatprep.subr.bf16.mxu0 %v642
    %723 = vmatpush1.bf16.msra.mxu0 %v641
    %724 = vmatprep.subr.bf16.mxu0 %v638
    %725 = vmatpush1.bf16.msra.mxu0 %v637
    %726 = vmatprep.subr.bf16.mxu0 %v634
    %727 = vmatpush1.bf16.msra.mxu0 %v633
    %728 = vmatprep.subr.bf16.mxu0 %v630
    %729 = vmatpush1.bf16.msra.mxu0 %v629
    %730 = vmatprep.subr.bf16.mxu0 %v626
    %731 = vmatpush1.bf16.msra.mxu0 %v625
    %732 = vmatprep.subr.bf16.mxu0 %v622
    %733 = vmatpush1.bf16.msra.mxu0 %v621
    %734 = vmatprep.subr.bf16.mxu0 %v618
    %735 = vmatpush1.bf16.msra.mxu0 %v617
    %736 = vmatprep.subr.bf16.mxu0 0
    %737 = vmatpush2.bf16.msra.mxu0 0
    %738 = vmatprep.subr.bf16.mxu0 0
    %739 = vmatpush2.bf16.msra.mxu0 0
    %740 = vmatprep.subr.bf16.mxu0 0
    %741 = vmatpush2.bf16.msra.mxu0 0
    %742 = vmatprep.subr.bf16.mxu0 0
    %743 = vmatpush2.bf16.msra.mxu0 0
    %744 = vmatprep.subr.bf16.mxu0 0
    %745 = vmatpush2.bf16.msra.mxu0 0
    %746 = vmatprep.subr.bf16.mxu0 0
    %747 = vmatpush2.bf16.msra.mxu0 0
    %748 = vmatprep.subr.bf16.mxu0 0
    %749 = vmatpush2.bf16.msra.mxu0 0
    %750 = vmatprep.subr.bf16.mxu0 0
    %751 = vmatpush2.bf16.msra.mxu0 0
    %752 = vmatprep.mubr.bf16.mxu0 0
    %753 = vmatmul.mubr.bf16.gmra.mxu0 %v486
    %v754 = vpop.f32.mrf.mxu0
    %v755 = vadd.f32 0.0, %v754
    %v756 = vpop.f32.mrf.mxu0
    %v757 = vadd.f32 0.0, %v756
    %v758 = vpop.f32.mrf.mxu0
    %v759 = vpop.f32.mrf.mxu0
    %760 = vdwg.mxu0
    %v761 = vadd.f32 %v482, %v714
    %v762 = vadd.f32 %v483, %v716
    %v763 = vadd.f32 %v484, %v755
    %v764 = vadd.f32 %v485, %v757
    %v765 = vmul.f32 %v761, 0.5
    %v766 = vtanh.pop %v765
    %v767 = vmul.f32 %v766, 0.5
    %v768 = vadd.f32 %v767, 0.5
    %v769 = vmul.f32 %v762, 0.5
    %v770 = vtanh.pop %v769
    %v771 = vmul.f32 %v770, 0.5
    %v772 = vadd.f32 %v771, 0.5
    %v773 = vtanh.pop %v763
    %v774 = vmul.f32 %v764, 0.5
    %v775 = vtanh.pop %v774
    %v776 = vmul.f32 %v775, 0.5
    %v777 = vadd.f32 %v776, 0.5
    %v778 = vmul.f32 %v772, %v477
    %v779 = vmul.f32 %v768, %v773
    %v780 = vadd.f32 %v778, %v779
    %v781 = vtanh.pop %v780
    %v782 = vmul.f32 %v777, %v781
    %s783 = scalar_lea.vmem [#allocation3], 8
    %784 = vst [vmem:[%s783] sm:$0xff] %v782
    %s785 = scalar_lea.vmem [#allocation2], 64
    %v786 = vld [vmem:[%s785] sm:$0xff]
    %v787 = vld [vmem:[%s785 + $0x8] sm:$0xff]
    %v788 = vld [vmem:[%s785 + $0x10] sm:$0xff]
    %v789 = vld [vmem:[%s785 + $0x18] sm:$0xff]
    %v790 = vpack.c.bf16 %v782, %v782
    %v791 = vld [vmem:[#allocation7] sm:$0xff]
    %v792 = vld [vmem:[#allocation7 + $0x8] sm:$0xff]
    %v793 = vld [vmem:[#allocation7 + $0x10] sm:$0xff]
    %v794 = vld [vmem:[#allocation7 + $0x18] sm:$0xff]
    %v795 = vld [vmem:[#allocation7 + $0x20] sm:$0xff]
    %v796 = vld [vmem:[#allocation7 + $0x28] sm:$0xff]
    %v797 = vld [vmem:[#allocation7 + $0x30] sm:$0xff]
    %v798 = vld [vmem:[#allocation7 + $0x38] sm:$0xff]
    %v799 = vld [vmem:[#allocation7 + $0x40] sm:$0xff]
    %v800 = vld [vmem:[#allocation7 + $0x48] sm:$0xff]
    %v801 = vld [vmem:[#allocation7 + $0x50] sm:$0xff]
    %v802 = vld [vmem:[#allocation7 + $0x58] sm:$0xff]
    %v803 = vld [vmem:[#allocation7 + $0x60] sm:$0xff]
    %v804 = vld [vmem:[#allocation7 + $0x68] sm:$0xff]
    %v805 = vld [vmem:[#allocation7 + $0x70] sm:$0xff]
    %v806 = vld [vmem:[#allocation7 + $0x78] sm:$0xff]
    %v807 = vld [vmem:[#allocation7 + $0x80] sm:$0xff]
    %v808 = vld [vmem:[#allocation7 + $0x88] sm:$0xff]
    %v809 = vld [vmem:[#allocation7 + $0x90] sm:$0xff]
    %v810 = vld [vmem:[#allocation7 + $0x98] sm:$0xff]
    %v811 = vld [vmem:[#allocation7 + $0xa0] sm:$0xff]
    %v812 = vld [vmem:[#allocation7 + $0xa8] sm:$0xff]
    %v813 = vld [vmem:[#allocation7 + $0xb0] sm:$0xff]
    %v814 = vld [vmem:[#allocation7 + $0xb8] sm:$0xff]
    %v815 = vld [vmem:[#allocation7 + $0xc0] sm:$0xff]
    %v816 = vld [vmem:[#allocation7 + $0xc8] sm:$0xff]
    %v817 = vld [vmem:[#allocation7 + $0xd0] sm:$0xff]
    %v818 = vld [vmem:[#allocation7 + $0xd8] sm:$0xff]
    %v819 = vld [vmem:[#allocation7 + $0xe0] sm:$0xff]
    %v820 = vld [vmem:[#allocation7 + $0xe8] sm:$0xff]
    %v821 = vld [vmem:[#allocation7 + $0xf0] sm:$0xff]
    %v822 = vld [vmem:[#allocation7 + $0xf8] sm:$0xff]
    %v855 = vunpack.c.l.b16 %v791
    %v856 = vunpack.c.h.b16 %v791
    %v857 = vunpack.c.l.b16 %v792
    %v858 = vunpack.c.h.b16 %v792
    %v859 = vunpack.c.l.b16 %v793
    %v860 = vunpack.c.h.b16 %v793
    %v861 = vunpack.c.l.b16 %v794
    %v862 = vunpack.c.h.b16 %v794
    %v863 = vunpack.c.l.b16 %v795
    %v864 = vunpack.c.h.b16 %v795
    %v865 = vunpack.c.l.b16 %v796
    %v866 = vunpack.c.h.b16 %v796
    %v867 = vunpack.c.l.b16 %v797
    %v868 = vunpack.c.h.b16 %v797
    %v869 = vunpack.c.l.b16 %v798
    %v870 = vunpack.c.h.b16 %v798
    %v871 = vunpack.c.l.b16 %v799
    %v872 = vunpack.c.h.b16 %v799
    %v873 = vunpack.c.l.b16 %v800
    %v874 = vunpack.c.h.b16 %v800
    %v875 = vunpack.c.l.b16 %v801
    %v876 = vunpack.c.h.b16 %v801
    %v877 = vunpack.c.l.b16 %v802
    %v878 = vunpack.c.h.b16 %v802
    %v879 = vunpack.c.l.b16 %v803
    %v880 = vunpack.c.h.b16 %v803
    %v881 = vunpack.c.l.b16 %v804
    %v882 = vunpack.c.h.b16 %v804
    %v883 = vunpack.c.l.b16 %v805
    %v884 = vunpack.c.h.b16 %v805
    %v885 = vunpack.c.l.b16 %v806
    %v886 = vunpack.c.h.b16 %v806
    %v887 = vunpack.c.l.b16 %v807
    %v888 = vunpack.c.h.b16 %v807
    %v889 = vunpack.c.l.b16 %v808
    %v890 = vunpack.c.h.b16 %v808
    %v891 = vunpack.c.l.b16 %v809
    %v892 = vunpack.c.h.b16 %v809
    %v893 = vunpack.c.l.b16 %v810
    %v894 = vunpack.c.h.b16 %v810
    %v895 = vunpack.c.l.b16 %v811
    %v896 = vunpack.c.h.b16 %v811
    %v897 = vunpack.c.l.b16 %v812
    %v898 = vunpack.c.h.b16 %v812
    %v899 = vunpack.c.l.b16 %v813
    %v900 = vunpack.c.h.b16 %v813
    %v901 = vunpack.c.l.b16 %v814
    %v902 = vunpack.c.h.b16 %v814
    %v903 = vunpack.c.l.b16 %v815
    %v904 = vunpack.c.h.b16 %v815
    %v905 = vunpack.c.l.b16 %v816
    %v906 = vunpack.c.h.b16 %v816
    %v907 = vunpack.c.l.b16 %v817
    %v908 = vunpack.c.h.b16 %v817
    %v909 = vunpack.c.l.b16 %v818
    %v910 = vunpack.c.h.b16 %v818
    %v911 = vunpack.c.l.b16 %v819
    %v912 = vunpack.c.h.b16 %v819
    %v913 = vunpack.c.l.b16 %v820
    %v914 = vunpack.c.h.b16 %v820
    %v915 = vunpack.c.l.b16 %v821
    %v916 = vunpack.c.h.b16 %v821
    %v917 = vunpack.c.l.b16 %v822
    %v918 = vunpack.c.h.b16 %v822
    %v919 = vpack.c.b16 %v859, %v855
    %v920 = vpack.c.b16 %v860, %v856
    %v921 = vpack.c.b16 %v861, %v857
    %v922 = vpack.c.b16 %v862, %v858
    %v923 = vpack.c.b16 %v867, %v863
    %v924 = vpack.c.b16 %v868, %v864
    %v925 = vpack.c.b16 %v869, %v865
    %v926 = vpack.c.b16 %v870, %v866
    %v927 = vpack.c.b16 %v875, %v871
    %v928 = vpack.c.b16 %v876, %v872
    %v929 = vpack.c.b16 %v877, %v873
    %v930 = vpack.c.b16 %v878, %v874
    %v931 = vpack.c.b16 %v883, %v879
    %v932 = vpack.c.b16 %v884, %v880
    %v933 = vpack.c.b16 %v885, %v881
    %v934 = vpack.c.b16 %v886, %v882
    %v935 = vpack.c.b16 %v891, %v887
    %v936 = vpack.c.b16 %v892, %v888
    %v937 = vpack.c.b16 %v893, %v889
    %v938 = vpack.c.b16 %v894, %v890
    %v939 = vpack.c.b16 %v899, %v895
    %v940 = vpack.c.b16 %v900, %v896
    %v941 = vpack.c.b16 %v901, %v897
    %v942 = vpack.c.b16 %v902, %v898
    %v943 = vpack.c.b16 %v907, %v903
    %v944 = vpack.c.b16 %v908, %v904
    %v945 = vpack.c.b16 %v909, %v905
    %v946 = vpack.c.b16 %v910, %v906
    %v947 = vpack.c.b16 %v915, %v911
    %v948 = vpack.c.b16 %v916, %v912
    %v949 = vpack.c.b16 %v917, %v913
    %v950 = vpack.c.b16 %v918, %v914
    %983 = vmatprep.subr.bf16.mxu0 %v948
    %984 = vmatpush1.bf16.msra.mxu0 %v947
    %985 = vmatprep.subr.bf16.mxu0 %v944
    %986 = vmatpush1.bf16.msra.mxu0 %v943
    %987 = vmatprep.subr.bf16.mxu0 %v940
    %988 = vmatpush1.bf16.msra.mxu0 %v939
    %989 = vmatprep.subr.bf16.mxu0 %v936
    %990 = vmatpush1.bf16.msra.mxu0 %v935
    %991 = vmatprep.subr.bf16.mxu0 %v932
    %992 = vmatpush1.bf16.msra.mxu0 %v931
    %993 = vmatprep.subr.bf16.mxu0 %v928
    %994 = vmatpush1.bf16.msra.mxu0 %v927
    %995 = vmatprep.subr.bf16.mxu0 %v924
    %996 = vmatpush1.bf16.msra.mxu0 %v923
    %997 = vmatprep.subr.bf16.mxu0 %v920
    %998 = vmatpush1.bf16.msra.mxu0 %v919
    %999 = vmatprep.subr.bf16.mxu0 0
    %1000 = vmatpush2.bf16.msra.mxu0 0
    %1001 = vmatprep.subr.bf16.mxu0 0
    %1002 = vmatpush2.bf16.msra.mxu0 0
    %1003 = vmatprep.subr.bf16.mxu0 0
    %1004 = vmatpush2.bf16.msra.mxu0 0
    %1005 = vmatprep.subr.bf16.mxu0 0
    %1006 = vmatpush2.bf16.msra.mxu0 0
    %1007 = vmatprep.subr.bf16.mxu0 0
    %1008 = vmatpush2.bf16.msra.mxu0 0
    %1009 = vmatprep.subr.bf16.mxu0 0
    %1010 = vmatpush2.bf16.msra.mxu0 0
    %1011 = vmatprep.subr.bf16.mxu0 0
    %1012 = vmatpush2.bf16.msra.mxu0 0
    %1013 = vmatprep.subr.bf16.mxu0 0
    %1014 = vmatpush2.bf16.msra.mxu0 0
    %1015 = vmatprep.mubr.bf16.mxu0 0
    %1016 = vmatmul.mubr.bf16.gmra.mxu0 %v790
    %v1017 = vpop.f32.mrf.mxu0
    %v1018 = vadd.f32 0.0, %v1017
    %v1019 = vpop.f32.mrf.mxu0
    %v1020 = vadd.f32 0.0, %v1019
    %v1021 = vpop.f32.mrf.mxu0
    %v1022 = vpop.f32.mrf.mxu0
    %1023 = vdwg.mxu0
    %1024 = vmatprep.subr.bf16.mxu0 %v950
    %1025 = vmatpush1.bf16.msra.mxu0 %v949
    %1026 = vmatprep.subr.bf16.mxu0 %v946
    %1027 = vmatpush1.bf16.msra.mxu0 %v945
    %1028 = vmatprep.subr.bf16.mxu0 %v942
    %1029 = vmatpush1.bf16.msra.mxu0 %v941
    %1030 = vmatprep.subr.bf16.mxu0 %v938
    %1031 = vmatpush1.bf16.msra.mxu0 %v937
    %1032 = vmatprep.subr.bf16.mxu0 %v934
    %1033 = vmatpush1.bf16.msra.mxu0 %v933
    %1034 = vmatprep.subr.bf16.mxu0 %v930
    %1035 = vmatpush1.bf16.msra.mxu0 %v929
    %1036 = vmatprep.subr.bf16.mxu0 %v926
    %1037 = vmatpush1.bf16.msra.mxu0 %v925
    %1038 = vmatprep.subr.bf16.mxu0 %v922
    %1039 = vmatpush1.bf16.msra.mxu0 %v921
    %1040 = vmatprep.subr.bf16.mxu0 0
    %1041 = vmatpush2.bf16.msra.mxu0 0
    %1042 = vmatprep.subr.bf16.mxu0 0
    %1043 = vmatpush2.bf16.msra.mxu0 0
    %1044 = vmatprep.subr.bf16.mxu0 0
    %1045 = vmatpush2.bf16.msra.mxu0 0
    %1046 = vmatprep.subr.bf16.mxu0 0
    %1047 = vmatpush2.bf16.msra.mxu0 0
    %1048 = vmatprep.subr.bf16.mxu0 0
    %1049 = vmatpush2.bf16.msra.mxu0 0
    %1050 = vmatprep.subr.bf16.mxu0 0
    %1051 = vmatpush2.bf16.msra.mxu0 0
    %1052 = vmatprep.subr.bf16.mxu0 0
    %1053 = vmatpush2.bf16.msra.mxu0 0
    %1054 = vmatprep.subr.bf16.mxu0 0
    %1055 = vmatpush2.bf16.msra.mxu0 0
    %1056 = vmatprep.mubr.bf16.mxu0 0
    %1057 = vmatmul.mubr.bf16.gmra.mxu0 %v790
    %v1058 = vpop.f32.mrf.mxu0
    %v1059 = vadd.f32 0.0, %v1058
    %v1060 = vpop.f32.mrf.mxu0
    %v1061 = vadd.f32 0.0, %v1060
    %v1062 = vpop.f32.mrf.mxu0
    %v1063 = vpop.f32.mrf.mxu0
    %1064 = vdwg.mxu0
    %v1065 = vadd.f32 %v786, %v1018
    %v1066 = vadd.f32 %v787, %v1020
    %v1067 = vadd.f32 %v788, %v1059
    %v1068 = vadd.f32 %v789, %v1061
    %v1069 = vmul.f32 %v1065, 0.5
    %v1070 = vtanh.pop %v1069
    %v1071 = vmul.f32 %v1070, 0.5
    %v1072 = vadd.f32 %v1071, 0.5
    %v1073 = vmul.f32 %v1066, 0.5
    %v1074 = vtanh.pop %v1073
    %v1075 = vmul.f32 %v1074, 0.5
    %v1076 = vadd.f32 %v1075, 0.5
    %v1077 = vtanh.pop %v1067
    %v1078 = vmul.f32 %v1068, 0.5
    %v1079 = vtanh.pop %v1078
    %v1080 = vmul.f32 %v1079, 0.5
    %v1081 = vadd.f32 %v1080, 0.5
    %v1082 = vmul.f32 %v1076, %v780
    %v1083 = vmul.f32 %v1072, %v1077
    %v1084 = vadd.f32 %v1082, %v1083
    %v1085 = vtanh.pop %v1084
    %v1086 = vmul.f32 %v1081, %v1085
    %s1087 = scalar_lea.vmem [#allocation3], 16
    %1088 = vst [vmem:[%s1087] sm:$0xff] %v1086
    %s1089 = scalar_lea.vmem [#allocation2], 96
    %v1090 = vld [vmem:[%s1089] sm:$0xff]
    %v1091 = vld [vmem:[%s1089 + $0x8] sm:$0xff]
    %v1092 = vld [vmem:[%s1089 + $0x10] sm:$0xff]
    %v1093 = vld [vmem:[%s1089 + $0x18] sm:$0xff]
    %v1094 = vpack.c.bf16 %v1086, %v1086
    %v1095 = vld [vmem:[#allocation7] sm:$0xff]
    %v1096 = vld [vmem:[#allocation7 + $0x8] sm:$0xff]
    %v1097 = vld [vmem:[#allocation7 + $0x10] sm:$0xff]
    %v1098 = vld [vmem:[#allocation7 + $0x18] sm:$0xff]
    %v1099 = vld [vmem:[#allocation7 + $0x20] sm:$0xff]
    %v1100 = vld [vmem:[#allocation7 + $0x28] sm:$0xff]
    %v1101 = vld [vmem:[#allocation7 + $0x30] sm:$0xff]
    %v1102 = vld [vmem:[#allocation7 + $0x38] sm:$0xff]
    %v1103 = vld [vmem:[#allocation7 + $0x40] sm:$0xff]
    %v1104 = vld [vmem:[#allocation7 + $0x48] sm:$0xff]
    %v1105 = vld [vmem:[#allocation7 + $0x50] sm:$0xff]
    %v1106 = vld [vmem:[#allocation7 + $0x58] sm:$0xff]
    %v1107 = vld [vmem:[#allocation7 + $0x60] sm:$0xff]
    %v1108 = vld [vmem:[#allocation7 + $0x68] sm:$0xff]
    %v1109 = vld [vmem:[#allocation7 + $0x70] sm:$0xff]
    %v1110 = vld [vmem:[#allocation7 + $0x78] sm:$0xff]
    %v1111 = vld [vmem:[#allocation7 + $0x80] sm:$0xff]
    %v1112 = vld [vmem:[#allocation7 + $0x88] sm:$0xff]
    %v1113 = vld [vmem:[#allocation7 + $0x90] sm:$0xff]
    %v1114 = vld [vmem:[#allocation7 + $0x98] sm:$0xff]
    %v1115 = vld [vmem:[#allocation7 + $0xa0] sm:$0xff]
    %v1116 = vld [vmem:[#allocation7 + $0xa8] sm:$0xff]
    %v1117 = vld [vmem:[#allocation7 + $0xb0] sm:$0xff]
    %v1118 = vld [vmem:[#allocation7 + $0xb8] sm:$0xff]
    %v1119 = vld [vmem:[#allocation7 + $0xc0] sm:$0xff]
    %v1120 = vld [vmem:[#allocation7 + $0xc8] sm:$0xff]
    %v1121 = vld [vmem:[#allocation7 + $0xd0] sm:$0xff]
    %v1122 = vld [vmem:[#allocation7 + $0xd8] sm:$0xff]
    %v1123 = vld [vmem:[#allocation7 + $0xe0] sm:$0xff]
    %v1124 = vld [vmem:[#allocation7 + $0xe8] sm:$0xff]
    %v1125 = vld [vmem:[#allocation7 + $0xf0] sm:$0xff]
    %v1126 = vld [vmem:[#allocation7 + $0xf8] sm:$0xff]
    %v1159 = vunpack.c.l.b16 %v1095
    %v1160 = vunpack.c.h.b16 %v1095
    %v1161 = vunpack.c.l.b16 %v1096
    %v1162 = vunpack.c.h.b16 %v1096
    %v1163 = vunpack.c.l.b16 %v1097
    %v1164 = vunpack.c.h.b16 %v1097
    %v1165 = vunpack.c.l.b16 %v1098
    %v1166 = vunpack.c.h.b16 %v1098
    %v1167 = vunpack.c.l.b16 %v1099
    %v1168 = vunpack.c.h.b16 %v1099
    %v1169 = vunpack.c.l.b16 %v1100
    %v1170 = vunpack.c.h.b16 %v1100
    %v1171 = vunpack.c.l.b16 %v1101
    %v1172 = vunpack.c.h.b16 %v1101
    %v1173 = vunpack.c.l.b16 %v1102
    %v1174 = vunpack.c.h.b16 %v1102
    %v1175 = vunpack.c.l.b16 %v1103
    %v1176 = vunpack.c.h.b16 %v1103
    %v1177 = vunpack.c.l.b16 %v1104
    %v1178 = vunpack.c.h.b16 %v1104
    %v1179 = vunpack.c.l.b16 %v1105
    %v1180 = vunpack.c.h.b16 %v1105
    %v1181 = vunpack.c.l.b16 %v1106
    %v1182 = vunpack.c.h.b16 %v1106
    %v1183 = vunpack.c.l.b16 %v1107
    %v1184 = vunpack.c.h.b16 %v1107
    %v1185 = vunpack.c.l.b16 %v1108
    %v1186 = vunpack.c.h.b16 %v1108
    %v1187 = vunpack.c.l.b16 %v1109
    %v1188 = vunpack.c.h.b16 %v1109
    %v1189 = vunpack.c.l.b16 %v1110
    %v1190 = vunpack.c.h.b16 %v1110
    %v1191 = vunpack.c.l.b16 %v1111
    %v1192 = vunpack.c.h.b16 %v1111
    %v1193 = vunpack.c.l.b16 %v1112
    %v1194 = vunpack.c.h.b16 %v1112
    %v1195 = vunpack.c.l.b16 %v1113
    %v1196 = vunpack.c.h.b16 %v1113
    %v1197 = vunpack.c.l.b16 %v1114
    %v1198 = vunpack.c.h.b16 %v1114
    %v1199 = vunpack.c.l.b16 %v1115
    %v1200 = vunpack.c.h.b16 %v1115
    %v1201 = vunpack.c.l.b16 %v1116
    %v1202 = vunpack.c.h.b16 %v1116
    %v1203 = vunpack.c.l.b16 %v1117
    %v1204 = vunpack.c.h.b16 %v1117
    %v1205 = vunpack.c.l.b16 %v1118
    %v1206 = vunpack.c.h.b16 %v1118
    %v1207 = vunpack.c.l.b16 %v1119
    %v1208 = vunpack.c.h.b16 %v1119
    %v1209 = vunpack.c.l.b16 %v1120
    %v1210 = vunpack.c.h.b16 %v1120
    %v1211 = vunpack.c.l.b16 %v1121
    %v1212 = vunpack.c.h.b16 %v1121
    %v1213 = vunpack.c.l.b16 %v1122
    %v1214 = vunpack.c.h.b16 %v1122
    %v1215 = vunpack.c.l.b16 %v1123
    %v1216 = vunpack.c.h.b16 %v1123
    %v1217 = vunpack.c.l.b16 %v1124
    %v1218 = vunpack.c.h.b16 %v1124
    %v1219 = vunpack.c.l.b16 %v1125
    %v1220 = vunpack.c.h.b16 %v1125
    %v1221 = vunpack.c.l.b16 %v1126
    %v1222 = vunpack.c.h.b16 %v1126
    %v1223 = vpack.c.b16 %v1163, %v1159
    %v1224 = vpack.c.b16 %v1164, %v1160
    %v1225 = vpack.c.b16 %v1165, %v1161
    %v1226 = vpack.c.b16 %v1166, %v1162
    %v1227 = vpack.c.b16 %v1171, %v1167
    %v1228 = vpack.c.b16 %v1172, %v1168
    %v1229 = vpack.c.b16 %v1173, %v1169
    %v1230 = vpack.c.b16 %v1174, %v1170
    %v1231 = vpack.c.b16 %v1179, %v1175
    %v1232 = vpack.c.b16 %v1180, %v1176
    %v1233 = vpack.c.b16 %v1181, %v1177
    %v1234 = vpack.c.b16 %v1182, %v1178
    %v1235 = vpack.c.b16 %v1187, %v1183
    %v1236 = vpack.c.b16 %v1188, %v1184
    %v1237 = vpack.c.b16 %v1189, %v1185
    %v1238 = vpack.c.b16 %v1190, %v1186
    %v1239 = vpack.c.b16 %v1195, %v1191
    %v1240 = vpack.c.b16 %v1196, %v1192
    %v1241 = vpack.c.b16 %v1197, %v1193
    %v1242 = vpack.c.b16 %v1198, %v1194
    %v1243 = vpack.c.b16 %v1203, %v1199
    %v1244 = vpack.c.b16 %v1204, %v1200
    %v1245 = vpack.c.b16 %v1205, %v1201
    %v1246 = vpack.c.b16 %v1206, %v1202
    %v1247 = vpack.c.b16 %v1211, %v1207
    %v1248 = vpack.c.b16 %v1212, %v1208
    %v1249 = vpack.c.b16 %v1213, %v1209
    %v1250 = vpack.c.b16 %v1214, %v1210
    %v1251 = vpack.c.b16 %v1219, %v1215
    %v1252 = vpack.c.b16 %v1220, %v1216
    %v1253 = vpack.c.b16 %v1221, %v1217
    %v1254 = vpack.c.b16 %v1222, %v1218
    %1287 = vmatprep.subr.bf16.mxu0 %v1252
    %1288 = vmatpush1.bf16.msra.mxu0 %v1251
    %1289 = vmatprep.subr.bf16.mxu0 %v1248
    %1290 = vmatpush1.bf16.msra.mxu0 %v1247
    %1291 = vmatprep.subr.bf16.mxu0 %v1244
    %1292 = vmatpush1.bf16.msra.mxu0 %v1243
    %1293 = vmatprep.subr.bf16.mxu0 %v1240
    %1294 = vmatpush1.bf16.msra.mxu0 %v1239
    %1295 = vmatprep.subr.bf16.mxu0 %v1236
    %1296 = vmatpush1.bf16.msra.mxu0 %v1235
    %1297 = vmatprep.subr.bf16.mxu0 %v1232
    %1298 = vmatpush1.bf16.msra.mxu0 %v1231
    %1299 = vmatprep.subr.bf16.mxu0 %v1228
    %1300 = vmatpush1.bf16.msra.mxu0 %v1227
    %1301 = vmatprep.subr.bf16.mxu0 %v1224
    %1302 = vmatpush1.bf16.msra.mxu0 %v1223
    %1303 = vmatprep.subr.bf16.mxu0 0
    %1304 = vmatpush2.bf16.msra.mxu0 0
    %1305 = vmatprep.subr.bf16.mxu0 0
    %1306 = vmatpush2.bf16.msra.mxu0 0
    %1307 = vmatprep.subr.bf16.mxu0 0
    %1308 = vmatpush2.bf16.msra.mxu0 0
    %1309 = vmatprep.subr.bf16.mxu0 0
    %1310 = vmatpush2.bf16.msra.mxu0 0
    %1311 = vmatprep.subr.bf16.mxu0 0
    %1312 = vmatpush2.bf16.msra.mxu0 0
    %1313 = vmatprep.subr.bf16.mxu0 0
    %1314 = vmatpush2.bf16.msra.mxu0 0
    %1315 = vmatprep.subr.bf16.mxu0 0
    %1316 = vmatpush2.bf16.msra.mxu0 0
    %1317 = vmatprep.subr.bf16.mxu0 0
    %1318 = vmatpush2.bf16.msra.mxu0 0
    %1319 = vmatprep.mubr.bf16.mxu0 0
    %1320 = vmatmul.mubr.bf16.gmra.mxu0 %v1094
    %v1321 = vpop.f32.mrf.mxu0
    %v1322 = vadd.f32 0.0, %v1321
    %v1323 = vpop.f32.mrf.mxu0
    %v1324 = vadd.f32 0.0, %v1323
    %v1325 = vpop.f32.mrf.mxu0
    %v1326 = vpop.f32.mrf.mxu0
    %1327 = vdwg.mxu0
    %1328 = vmatprep.subr.bf16.mxu0 %v1254
    %1329 = vmatpush1.bf16.msra.mxu0 %v1253
    %1330 = vmatprep.subr.bf16.mxu0 %v1250
    %1331 = vmatpush1.bf16.msra.mxu0 %v1249
    %1332 = vmatprep.subr.bf16.mxu0 %v1246
    %1333 = vmatpush1.bf16.msra.mxu0 %v1245
    %1334 = vmatprep.subr.bf16.mxu0 %v1242
    %1335 = vmatpush1.bf16.msra.mxu0 %v1241
    %1336 = vmatprep.subr.bf16.mxu0 %v1238
    %1337 = vmatpush1.bf16.msra.mxu0 %v1237
    %1338 = vmatprep.subr.bf16.mxu0 %v1234
    %1339 = vmatpush1.bf16.msra.mxu0 %v1233
    %1340 = vmatprep.subr.bf16.mxu0 %v1230
    %1341 = vmatpush1.bf16.msra.mxu0 %v1229
    %1342 = vmatprep.subr.bf16.mxu0 %v1226
    %1343 = vmatpush1.bf16.msra.mxu0 %v1225
    %1344 = vmatprep.subr.bf16.mxu0 0
    %1345 = vmatpush2.bf16.msra.mxu0 0
    %1346 = vmatprep.subr.bf16.mxu0 0
    %1347 = vmatpush2.bf16.msra.mxu0 0
    %1348 = vmatprep.subr.bf16.mxu0 0
    %1349 = vmatpush2.bf16.msra.mxu0 0
    %1350 = vmatprep.subr.bf16.mxu0 0
    %1351 = vmatpush2.bf16.msra.mxu0 0
    %1352 = vmatprep.subr.bf16.mxu0 0
    %1353 = vmatpush2.bf16.msra.mxu0 0
    %1354 = vmatprep.subr.bf16.mxu0 0
    %1355 = vmatpush2.bf16.msra.mxu0 0
    %1356 = vmatprep.subr.bf16.mxu0 0
    %1357 = vmatpush2.bf16.msra.mxu0 0
    %1358 = vmatprep.subr.bf16.mxu0 0
    %1359 = vmatpush2.bf16.msra.mxu0 0
    %1360 = vmatprep.mubr.bf16.mxu0 0
    %1361 = vmatmul.mubr.bf16.gmra.mxu0 %v1094
    %v1362 = vpop.f32.mrf.mxu0
    %v1363 = vadd.f32 0.0, %v1362
    %v1364 = vpop.f32.mrf.mxu0
    %v1365 = vadd.f32 0.0, %v1364
    %v1366 = vpop.f32.mrf.mxu0
    %v1367 = vpop.f32.mrf.mxu0
    %1368 = vdwg.mxu0
    %v1369 = vadd.f32 %v1090, %v1322
    %v1370 = vadd.f32 %v1091, %v1324
    %v1371 = vadd.f32 %v1092, %v1363
    %v1372 = vadd.f32 %v1093, %v1365
    %v1373 = vmul.f32 %v1369, 0.5
    %v1374 = vtanh.pop %v1373
    %v1375 = vmul.f32 %v1374, 0.5
    %v1376 = vadd.f32 %v1375, 0.5
    %v1377 = vmul.f32 %v1370, 0.5
    %v1378 = vtanh.pop %v1377
    %v1379 = vmul.f32 %v1378, 0.5
    %v1380 = vadd.f32 %v1379, 0.5
    %v1381 = vtanh.pop %v1371
    %v1382 = vmul.f32 %v1372, 0.5
    %v1383 = vtanh.pop %v1382
    %v1384 = vmul.f32 %v1383, 0.5
    %v1385 = vadd.f32 %v1384, 0.5
    %v1386 = vmul.f32 %v1380, %v1084
    %v1387 = vmul.f32 %v1376, %v1381
    %v1388 = vadd.f32 %v1386, %v1387
    %v1389 = vtanh.pop %v1388
    %v1390 = vmul.f32 %v1385, %v1389
    %s1391 = scalar_lea.vmem [#allocation3], 24
    %1392 = vst [vmem:[%s1391] sm:$0xff] %v1390
    %s1393 = scalar_lea.vmem [#allocation2], 128
    %v1394 = vld [vmem:[%s1393] sm:$0xff]
    %v1395 = vld [vmem:[%s1393 + $0x8] sm:$0xff]
    %v1396 = vld [vmem:[%s1393 + $0x10] sm:$0xff]
    %v1397 = vld [vmem:[%s1393 + $0x18] sm:$0xff]
    %v1398 = vpack.c.bf16 %v1390, %v1390
    %v1399 = vld [vmem:[#allocation7] sm:$0xff]
    %v1400 = vld [vmem:[#allocation7 + $0x8] sm:$0xff]
    %v1401 = vld [vmem:[#allocation7 + $0x10] sm:$0xff]
    %v1402 = vld [vmem:[#allocation7 + $0x18] sm:$0xff]
    %v1403 = vld [vmem:[#allocation7 + $0x20] sm:$0xff]
    %v1404 = vld [vmem:[#allocation7 + $0x28] sm:$0xff]
    %v1405 = vld [vmem:[#allocation7 + $0x30] sm:$0xff]
    %v1406 = vld [vmem:[#allocation7 + $0x38] sm:$0xff]
    %v1407 = vld [vmem:[#allocation7 + $0x40] sm:$0xff]
    %v1408 = vld [vmem:[#allocation7 + $0x48] sm:$0xff]
    %v1409 = vld [vmem:[#allocation7 + $0x50] sm:$0xff]
    %v1410 = vld [vmem:[#allocation7 + $0x58] sm:$0xff]
    %v1411 = vld [vmem:[#allocation7 + $0x60] sm:$0xff]
    %v1412 = vld [vmem:[#allocation7 + $0x68] sm:$0xff]
    %v1413 = vld [vmem:[#allocation7 + $0x70] sm:$0xff]
    %v1414 = vld [vmem:[#allocation7 + $0x78] sm:$0xff]
    %v1415 = vld [vmem:[#allocation7 + $0x80] sm:$0xff]
    %v1416 = vld [vmem:[#allocation7 + $0x88] sm:$0xff]
    %v1417 = vld [vmem:[#allocation7 + $0x90] sm:$0xff]
    %v1418 = vld [vmem:[#allocation7 + $0x98] sm:$0xff]
    %v1419 = vld [vmem:[#allocation7 + $0xa0] sm:$0xff]
    %v1420 = vld [vmem:[#allocation7 + $0xa8] sm:$0xff]
    %v1421 = vld [vmem:[#allocation7 + $0xb0] sm:$0xff]
    %v1422 = vld [vmem:[#allocation7 + $0xb8] sm:$0xff]
    %v1423 = vld [vmem:[#allocation7 + $0xc0] sm:$0xff]
    %v1424 = vld [vmem:[#allocation7 + $0xc8] sm:$0xff]
    %v1425 = vld [vmem:[#allocation7 + $0xd0] sm:$0xff]
    %v1426 = vld [vmem:[#allocation7 + $0xd8] sm:$0xff]
    %v1427 = vld [vmem:[#allocation7 + $0xe0] sm:$0xff]
    %v1428 = vld [vmem:[#allocation7 + $0xe8] sm:$0xff]
    %v1429 = vld [vmem:[#allocation7 + $0xf0] sm:$0xff]
    %v1430 = vld [vmem:[#allocation7 + $0xf8] sm:$0xff]
    %v1463 = vunpack.c.l.b16 %v1399
    %v1464 = vunpack.c.h.b16 %v1399
    %v1465 = vunpack.c.l.b16 %v1400
    %v1466 = vunpack.c.h.b16 %v1400
    %v1467 = vunpack.c.l.b16 %v1401
    %v1468 = vunpack.c.h.b16 %v1401
    %v1469 = vunpack.c.l.b16 %v1402
    %v1470 = vunpack.c.h.b16 %v1402
    %v1471 = vunpack.c.l.b16 %v1403
    %v1472 = vunpack.c.h.b16 %v1403
    %v1473 = vunpack.c.l.b16 %v1404
    %v1474 = vunpack.c.h.b16 %v1404
    %v1475 = vunpack.c.l.b16 %v1405
    %v1476 = vunpack.c.h.b16 %v1405
    %v1477 = vunpack.c.l.b16 %v1406
    %v1478 = vunpack.c.h.b16 %v1406
    %v1479 = vunpack.c.l.b16 %v1407
    %v1480 = vunpack.c.h.b16 %v1407
    %v1481 = vunpack.c.l.b16 %v1408
    %v1482 = vunpack.c.h.b16 %v1408
    %v1483 = vunpack.c.l.b16 %v1409
    %v1484 = vunpack.c.h.b16 %v1409
    %v1485 = vunpack.c.l.b16 %v1410
    %v1486 = vunpack.c.h.b16 %v1410
    %v1487 = vunpack.c.l.b16 %v1411
    %v1488 = vunpack.c.h.b16 %v1411
    %v1489 = vunpack.c.l.b16 %v1412
    %v1490 = vunpack.c.h.b16 %v1412
    %v1491 = vunpack.c.l.b16 %v1413
    %v1492 = vunpack.c.h.b16 %v1413
    %v1493 = vunpack.c.l.b16 %v1414
    %v1494 = vunpack.c.h.b16 %v1414
    %v1495 = vunpack.c.l.b16 %v1415
    %v1496 = vunpack.c.h.b16 %v1415
    %v1497 = vunpack.c.l.b16 %v1416
    %v1498 = vunpack.c.h.b16 %v1416
    %v1499 = vunpack.c.l.b16 %v1417
    %v1500 = vunpack.c.h.b16 %v1417
    %v1501 = vunpack.c.l.b16 %v1418
    %v1502 = vunpack.c.h.b16 %v1418
    %v1503 = vunpack.c.l.b16 %v1419
    %v1504 = vunpack.c.h.b16 %v1419
    %v1505 = vunpack.c.l.b16 %v1420
    %v1506 = vunpack.c.h.b16 %v1420
    %v1507 = vunpack.c.l.b16 %v1421
    %v1508 = vunpack.c.h.b16 %v1421
    %v1509 = vunpack.c.l.b16 %v1422
    %v1510 = vunpack.c.h.b16 %v1422
    %v1511 = vunpack.c.l.b16 %v1423
    %v1512 = vunpack.c.h.b16 %v1423
    %v1513 = vunpack.c.l.b16 %v1424
    %v1514 = vunpack.c.h.b16 %v1424
    %v1515 = vunpack.c.l.b16 %v1425
    %v1516 = vunpack.c.h.b16 %v1425
    %v1517 = vunpack.c.l.b16 %v1426
    %v1518 = vunpack.c.h.b16 %v1426
    %v1519 = vunpack.c.l.b16 %v1427
    %v1520 = vunpack.c.h.b16 %v1427
    %v1521 = vunpack.c.l.b16 %v1428
    %v1522 = vunpack.c.h.b16 %v1428
    %v1523 = vunpack.c.l.b16 %v1429
    %v1524 = vunpack.c.h.b16 %v1429
    %v1525 = vunpack.c.l.b16 %v1430
    %v1526 = vunpack.c.h.b16 %v1430
    %v1527 = vpack.c.b16 %v1467, %v1463
    %v1528 = vpack.c.b16 %v1468, %v1464
    %v1529 = vpack.c.b16 %v1469, %v1465
    %v1530 = vpack.c.b16 %v1470, %v1466
    %v1531 = vpack.c.b16 %v1475, %v1471
    %v1532 = vpack.c.b16 %v1476, %v1472
    %v1533 = vpack.c.b16 %v1477, %v1473
    %v1534 = vpack.c.b16 %v1478, %v1474
    %v1535 = vpack.c.b16 %v1483, %v1479
    %v1536 = vpack.c.b16 %v1484, %v1480
    %v1537 = vpack.c.b16 %v1485, %v1481
    %v1538 = vpack.c.b16 %v1486, %v1482
    %v1539 = vpack.c.b16 %v1491, %v1487
    %v1540 = vpack.c.b16 %v1492, %v1488
    %v1541 = vpack.c.b16 %v1493, %v1489
    %v1542 = vpack.c.b16 %v1494, %v1490
    %v1543 = vpack.c.b16 %v1499, %v1495
    %v1544 = vpack.c.b16 %v1500, %v1496
    %v1545 = vpack.c.b16 %v1501, %v1497
    %v1546 = vpack.c.b16 %v1502, %v1498
    %v1547 = vpack.c.b16 %v1507, %v1503
    %v1548 = vpack.c.b16 %v1508, %v1504
    %v1549 = vpack.c.b16 %v1509, %v1505
    %v1550 = vpack.c.b16 %v1510, %v1506
    %v1551 = vpack.c.b16 %v1515, %v1511
    %v1552 = vpack.c.b16 %v1516, %v1512
    %v1553 = vpack.c.b16 %v1517, %v1513
    %v1554 = vpack.c.b16 %v1518, %v1514
    %v1555 = vpack.c.b16 %v1523, %v1519
    %v1556 = vpack.c.b16 %v1524, %v1520
    %v1557 = vpack.c.b16 %v1525, %v1521
    %v1558 = vpack.c.b16 %v1526, %v1522
    %1591 = vmatprep.subr.bf16.mxu0 %v1556
    %1592 = vmatpush1.bf16.msra.mxu0 %v1555
    %1593 = vmatprep.subr.bf16.mxu0 %v1552
    %1594 = vmatpush1.bf16.msra.mxu0 %v1551
    %1595 = vmatprep.subr.bf16.mxu0 %v1548
    %1596 = vmatpush1.bf16.msra.mxu0 %v1547
    %1597 = vmatprep.subr.bf16.mxu0 %v1544
    %1598 = vmatpush1.bf16.msra.mxu0 %v1543
    %1599 = vmatprep.subr.bf16.mxu0 %v1540
    %1600 = vmatpush1.bf16.msra.mxu0 %v1539
    %1601 = vmatprep.subr.bf16.mxu0 %v1536
    %1602 = vmatpush1.bf16.msra.mxu0 %v1535
    %1603 = vmatprep.subr.bf16.mxu0 %v1532
    %1604 = vmatpush1.bf16.msra.mxu0 %v1531
    %1605 = vmatprep.subr.bf16.mxu0 %v1528
    %1606 = vmatpush1.bf16.msra.mxu0 %v1527
    %1607 = vmatprep.subr.bf16.mxu0 0
    %1608 = vmatpush2.bf16.msra.mxu0 0
    %1609 = vmatprep.subr.bf16.mxu0 0
    %1610 = vmatpush2.bf16.msra.mxu0 0
    %1611 = vmatprep.subr.bf16.mxu0 0
    %1612 = vmatpush2.bf16.msra.mxu0 0
    %1613 = vmatprep.subr.bf16.mxu0 0
    %1614 = vmatpush2.bf16.msra.mxu0 0
    %1615 = vmatprep.subr.bf16.mxu0 0
    %1616 = vmatpush2.bf16.msra.mxu0 0
    %1617 = vmatprep.subr.bf16.mxu0 0
    %1618 = vmatpush2.bf16.msra.mxu0 0
    %1619 = vmatprep.subr.bf16.mxu0 0
    %1620 = vmatpush2.bf16.msra.mxu0 0
    %1621 = vmatprep.subr.bf16.mxu0 0
    %1622 = vmatpush2.bf16.msra.mxu0 0
    %1623 = vmatprep.mubr.bf16.mxu0 0
    %1624 = vmatmul.mubr.bf16.gmra.mxu0 %v1398
    %v1625 = vpop.f32.mrf.mxu0
    %v1626 = vadd.f32 0.0, %v1625
    %v1627 = vpop.f32.mrf.mxu0
    %v1628 = vadd.f32 0.0, %v1627
    %v1629 = vpop.f32.mrf.mxu0
    %v1630 = vpop.f32.mrf.mxu0
    %1631 = vdwg.mxu0
    %1632 = vmatprep.subr.bf16.mxu0 %v1558
    %1633 = vmatpush1.bf16.msra.mxu0 %v1557
    %1634 = vmatprep.subr.bf16.mxu0 %v1554
    %1635 = vmatpush1.bf16.msra.mxu0 %v1553
    %1636 = vmatprep.subr.bf16.mxu0 %v1550
    %1637 = vmatpush1.bf16.msra.mxu0 %v1549
    %1638 = vmatprep.subr.bf16.mxu0 %v1546
    %1639 = vmatpush1.bf16.msra.mxu0 %v1545
    %1640 = vmatprep.subr.bf16.mxu0 %v1542
    %1641 = vmatpush1.bf16.msra.mxu0 %v1541
    %1642 = vmatprep.subr.bf16.mxu0 %v1538
    %1643 = vmatpush1.bf16.msra.mxu0 %v1537
    %1644 = vmatprep.subr.bf16.mxu0 %v1534
    %1645 = vmatpush1.bf16.msra.mxu0 %v1533
    %1646 = vmatprep.subr.bf16.mxu0 %v1530
    %1647 = vmatpush1.bf16.msra.mxu0 %v1529
    %1648 = vmatprep.subr.bf16.mxu0 0
    %1649 = vmatpush2.bf16.msra.mxu0 0
    %1650 = vmatprep.subr.bf16.mxu0 0
    %1651 = vmatpush2.bf16.msra.mxu0 0
    %1652 = vmatprep.subr.bf16.mxu0 0
    %1653 = vmatpush2.bf16.msra.mxu0 0
    %1654 = vmatprep.subr.bf16.mxu0 0
    %1655 = vmatpush2.bf16.msra.mxu0 0
    %1656 = vmatprep.subr.bf16.mxu0 0
    %1657 = vmatpush2.bf16.msra.mxu0 0
    %1658 = vmatprep.subr.bf16.mxu0 0
    %1659 = vmatpush2.bf16.msra.mxu0 0
    %1660 = vmatprep.subr.bf16.mxu0 0
    %1661 = vmatpush2.bf16.msra.mxu0 0
    %1662 = vmatprep.subr.bf16.mxu0 0
    %1663 = vmatpush2.bf16.msra.mxu0 0
    %1664 = vmatprep.mubr.bf16.mxu0 0
    %1665 = vmatmul.mubr.bf16.gmra.mxu0 %v1398
    %v1666 = vpop.f32.mrf.mxu0
    %v1667 = vadd.f32 0.0, %v1666
    %v1668 = vpop.f32.mrf.mxu0
    %v1669 = vadd.f32 0.0, %v1668
    %v1670 = vpop.f32.mrf.mxu0
    %v1671 = vpop.f32.mrf.mxu0
    %1672 = vdwg.mxu0
    %v1673 = vadd.f32 %v1394, %v1626
    %v1674 = vadd.f32 %v1395, %v1628
    %v1675 = vadd.f32 %v1396, %v1667
    %v1676 = vadd.f32 %v1397, %v1669
    %v1677 = vmul.f32 %v1673, 0.5
    %v1678 = vtanh.pop %v1677
    %v1679 = vmul.f32 %v1678, 0.5
    %v1680 = vadd.f32 %v1679, 0.5
    %v1681 = vmul.f32 %v1674, 0.5
    %v1682 = vtanh.pop %v1681
    %v1683 = vmul.f32 %v1682, 0.5
    %v1684 = vadd.f32 %v1683, 0.5
    %v1685 = vtanh.pop %v1675
    %v1686 = vmul.f32 %v1676, 0.5
    %v1687 = vtanh.pop %v1686
    %v1688 = vmul.f32 %v1687, 0.5
    %v1689 = vadd.f32 %v1688, 0.5
    %v1690 = vmul.f32 %v1684, %v1388
    %v1691 = vmul.f32 %v1680, %v1685
    %v1692 = vadd.f32 %v1690, %v1691
    %v1693 = vtanh.pop %v1692
    %v1694 = vmul.f32 %v1689, %v1693
    %s1695 = scalar_lea.vmem [#allocation3], 32
    %1696 = vst [vmem:[%s1695] sm:$0xff] %v1694
    %s1697 = scalar_lea.vmem [#allocation2], 160
    %v1698 = vld [vmem:[%s1697] sm:$0xff]
    %v1699 = vld [vmem:[%s1697 + $0x8] sm:$0xff]
    %v1700 = vld [vmem:[%s1697 + $0x10] sm:$0xff]
    %v1701 = vld [vmem:[%s1697 + $0x18] sm:$0xff]
    %v1702 = vpack.c.bf16 %v1694, %v1694
    %v1703 = vld [vmem:[#allocation7] sm:$0xff]
    %v1704 = vld [vmem:[#allocation7 + $0x8] sm:$0xff]
    %v1705 = vld [vmem:[#allocation7 + $0x10] sm:$0xff]
    %v1706 = vld [vmem:[#allocation7 + $0x18] sm:$0xff]
    %v1707 = vld [vmem:[#allocation7 + $0x20] sm:$0xff]
    %v1708 = vld [vmem:[#allocation7 + $0x28] sm:$0xff]
    %v1709 = vld [vmem:[#allocation7 + $0x30] sm:$0xff]
    %v1710 = vld [vmem:[#allocation7 + $0x38] sm:$0xff]
    %v1711 = vld [vmem:[#allocation7 + $0x40] sm:$0xff]
    %v1712 = vld [vmem:[#allocation7 + $0x48] sm:$0xff]
    %v1713 = vld [vmem:[#allocation7 + $0x50] sm:$0xff]
    %v1714 = vld [vmem:[#allocation7 + $0x58] sm:$0xff]
    %v1715 = vld [vmem:[#allocation7 + $0x60] sm:$0xff]
    %v1716 = vld [vmem:[#allocation7 + $0x68] sm:$0xff]
    %v1717 = vld [vmem:[#allocation7 + $0x70] sm:$0xff]
    %v1718 = vld [vmem:[#allocation7 + $0x78] sm:$0xff]
    %v1719 = vld [vmem:[#allocation7 + $0x80] sm:$0xff]
    %v1720 = vld [vmem:[#allocation7 + $0x88] sm:$0xff]
    %v1721 = vld [vmem:[#allocation7 + $0x90] sm:$0xff]
    %v1722 = vld [vmem:[#allocation7 + $0x98] sm:$0xff]
    %v1723 = vld [vmem:[#allocation7 + $0xa0] sm:$0xff]
    %v1724 = vld [vmem:[#allocation7 + $0xa8] sm:$0xff]
    %v1725 = vld [vmem:[#allocation7 + $0xb0] sm:$0xff]
    %v1726 = vld [vmem:[#allocation7 + $0xb8] sm:$0xff]
    %v1727 = vld [vmem:[#allocation7 + $0xc0] sm:$0xff]
    %v1728 = vld [vmem:[#allocation7 + $0xc8] sm:$0xff]
    %v1729 = vld [vmem:[#allocation7 + $0xd0] sm:$0xff]
    %v1730 = vld [vmem:[#allocation7 + $0xd8] sm:$0xff]
    %v1731 = vld [vmem:[#allocation7 + $0xe0] sm:$0xff]
    %v1732 = vld [vmem:[#allocation7 + $0xe8] sm:$0xff]
    %v1733 = vld [vmem:[#allocation7 + $0xf0] sm:$0xff]
    %v1734 = vld [vmem:[#allocation7 + $0xf8] sm:$0xff]
    %v1767 = vunpack.c.l.b16 %v1703
    %v1768 = vunpack.c.h.b16 %v1703
    %v1769 = vunpack.c.l.b16 %v1704
    %v1770 = vunpack.c.h.b16 %v1704
    %v1771 = vunpack.c.l.b16 %v1705
    %v1772 = vunpack.c.h.b16 %v1705
    %v1773 = vunpack.c.l.b16 %v1706
    %v1774 = vunpack.c.h.b16 %v1706
    %v1775 = vunpack.c.l.b16 %v1707
    %v1776 = vunpack.c.h.b16 %v1707
    %v1777 = vunpack.c.l.b16 %v1708
    %v1778 = vunpack.c.h.b16 %v1708
    %v1779 = vunpack.c.l.b16 %v1709
    %v1780 = vunpack.c.h.b16 %v1709
    %v1781 = vunpack.c.l.b16 %v1710
    %v1782 = vunpack.c.h.b16 %v1710
    %v1783 = vunpack.c.l.b16 %v1711
    %v1784 = vunpack.c.h.b16 %v1711
    %v1785 = vunpack.c.l.b16 %v1712
    %v1786 = vunpack.c.h.b16 %v1712
    %v1787 = vunpack.c.l.b16 %v1713
    %v1788 = vunpack.c.h.b16 %v1713
    %v1789 = vunpack.c.l.b16 %v1714
    %v1790 = vunpack.c.h.b16 %v1714
    %v1791 = vunpack.c.l.b16 %v1715
    %v1792 = vunpack.c.h.b16 %v1715
    %v1793 = vunpack.c.l.b16 %v1716
    %v1794 = vunpack.c.h.b16 %v1716
    %v1795 = vunpack.c.l.b16 %v1717
    %v1796 = vunpack.c.h.b16 %v1717
    %v1797 = vunpack.c.l.b16 %v1718
    %v1798 = vunpack.c.h.b16 %v1718
    %v1799 = vunpack.c.l.b16 %v1719
    %v1800 = vunpack.c.h.b16 %v1719
    %v1801 = vunpack.c.l.b16 %v1720
    %v1802 = vunpack.c.h.b16 %v1720
    %v1803 = vunpack.c.l.b16 %v1721
    %v1804 = vunpack.c.h.b16 %v1721
    %v1805 = vunpack.c.l.b16 %v1722
    %v1806 = vunpack.c.h.b16 %v1722
    %v1807 = vunpack.c.l.b16 %v1723
    %v1808 = vunpack.c.h.b16 %v1723
    %v1809 = vunpack.c.l.b16 %v1724
    %v1810 = vunpack.c.h.b16 %v1724
    %v1811 = vunpack.c.l.b16 %v1725
    %v1812 = vunpack.c.h.b16 %v1725
    %v1813 = vunpack.c.l.b16 %v1726
    %v1814 = vunpack.c.h.b16 %v1726
    %v1815 = vunpack.c.l.b16 %v1727
    %v1816 = vunpack.c.h.b16 %v1727
    %v1817 = vunpack.c.l.b16 %v1728
    %v1818 = vunpack.c.h.b16 %v1728
    %v1819 = vunpack.c.l.b16 %v1729
    %v1820 = vunpack.c.h.b16 %v1729
    %v1821 = vunpack.c.l.b16 %v1730
    %v1822 = vunpack.c.h.b16 %v1730
    %v1823 = vunpack.c.l.b16 %v1731
    %v1824 = vunpack.c.h.b16 %v1731
    %v1825 = vunpack.c.l.b16 %v1732
    %v1826 = vunpack.c.h.b16 %v1732
    %v1827 = vunpack.c.l.b16 %v1733
    %v1828 = vunpack.c.h.b16 %v1733
    %v1829 = vunpack.c.l.b16 %v1734
    %v1830 = vunpack.c.h.b16 %v1734
    %v1831 = vpack.c.b16 %v1771, %v1767
    %v1832 = vpack.c.b16 %v1772, %v1768
    %v1833 = vpack.c.b16 %v1773, %v1769
    %v1834 = vpack.c.b16 %v1774, %v1770
    %v1835 = vpack.c.b16 %v1779, %v1775
    %v1836 = vpack.c.b16 %v1780, %v1776
    %v1837 = vpack.c.b16 %v1781, %v1777
    %v1838 = vpack.c.b16 %v1782, %v1778
    %v1839 = vpack.c.b16 %v1787, %v1783
    %v1840 = vpack.c.b16 %v1788, %v1784
    %v1841 = vpack.c.b16 %v1789, %v1785
    %v1842 = vpack.c.b16 %v1790, %v1786
    %v1843 = vpack.c.b16 %v1795, %v1791
    %v1844 = vpack.c.b16 %v1796, %v1792
    %v1845 = vpack.c.b16 %v1797, %v1793
    %v1846 = vpack.c.b16 %v1798, %v1794
    %v1847 = vpack.c.b16 %v1803, %v1799
    %v1848 = vpack.c.b16 %v1804, %v1800
    %v1849 = vpack.c.b16 %v1805, %v1801
    %v1850 = vpack.c.b16 %v1806, %v1802
    %v1851 = vpack.c.b16 %v1811, %v1807
    %v1852 = vpack.c.b16 %v1812, %v1808
    %v1853 = vpack.c.b16 %v1813, %v1809
    %v1854 = vpack.c.b16 %v1814, %v1810
    %v1855 = vpack.c.b16 %v1819, %v1815
    %v1856 = vpack.c.b16 %v1820, %v1816
    %v1857 = vpack.c.b16 %v1821, %v1817
    %v1858 = vpack.c.b16 %v1822, %v1818
    %v1859 = vpack.c.b16 %v1827, %v1823
    %v1860 = vpack.c.b16 %v1828, %v1824
    %v1861 = vpack.c.b16 %v1829, %v1825
    %v1862 = vpack.c.b16 %v1830, %v1826
    %1895 = vmatprep.subr.bf16.mxu0 %v1860
    %1896 = vmatpush1.bf16.msra.mxu0 %v1859
    %1897 = vmatprep.subr.bf16.mxu0 %v1856
    %1898 = vmatpush1.bf16.msra.mxu0 %v1855
    %1899 = vmatprep.subr.bf16.mxu0 %v1852
    %1900 = vmatpush1.bf16.msra.mxu0 %v1851
    %1901 = vmatprep.subr.bf16.mxu0 %v1848
    %1902 = vmatpush1.bf16.msra.mxu0 %v1847
    %1903 = vmatprep.subr.bf16.mxu0 %v1844
    %1904 = vmatpush1.bf16.msra.mxu0 %v1843
    %1905 = vmatprep.subr.bf16.mxu0 %v1840
    %1906 = vmatpush1.bf16.msra.mxu0 %v1839
    %1907 = vmatprep.subr.bf16.mxu0 %v1836
    %1908 = vmatpush1.bf16.msra.mxu0 %v1835
    %1909 = vmatprep.subr.bf16.mxu0 %v1832
    %1910 = vmatpush1.bf16.msra.mxu0 %v1831
    %1911 = vmatprep.subr.bf16.mxu0 0
    %1912 = vmatpush2.bf16.msra.mxu0 0
    %1913 = vmatprep.subr.bf16.mxu0 0
    %1914 = vmatpush2.bf16.msra.mxu0 0
    %1915 = vmatprep.subr.bf16.mxu0 0
    %1916 = vmatpush2.bf16.msra.mxu0 0
    %1917 = vmatprep.subr.bf16.mxu0 0
    %1918 = vmatpush2.bf16.msra.mxu0 0
    %1919 = vmatprep.subr.bf16.mxu0 0
    %1920 = vmatpush2.bf16.msra.mxu0 0
    %1921 = vmatprep.subr.bf16.mxu0 0
    %1922 = vmatpush2.bf16.msra.mxu0 0
    %1923 = vmatprep.subr.bf16.mxu0 0
    %1924 = vmatpush2.bf16.msra.mxu0 0
    %1925 = vmatprep.subr.bf16.mxu0 0
    %1926 = vmatpush2.bf16.msra.mxu0 0
    %1927 = vmatprep.mubr.bf16.mxu0 0
    %1928 = vmatmul.mubr.bf16.gmra.mxu0 %v1702
    %v1929 = vpop.f32.mrf.mxu0
    %v1930 = vadd.f32 0.0, %v1929
    %v1931 = vpop.f32.mrf.mxu0
    %v1932 = vadd.f32 0.0, %v1931
    %v1933 = vpop.f32.mrf.mxu0
    %v1934 = vpop.f32.mrf.mxu0
    %1935 = vdwg.mxu0
    %1936 = vmatprep.subr.bf16.mxu0 %v1862
    %1937 = vmatpush1.bf16.msra.mxu0 %v1861
    %1938 = vmatprep.subr.bf16.mxu0 %v1858
    %1939 = vmatpush1.bf16.msra.mxu0 %v1857
    %1940 = vmatprep.subr.bf16.mxu0 %v1854
    %1941 = vmatpush1.bf16.msra.mxu0 %v1853
    %1942 = vmatprep.subr.bf16.mxu0 %v1850
    %1943 = vmatpush1.bf16.msra.mxu0 %v1849
    %1944 = vmatprep.subr.bf16.mxu0 %v1846
    %1945 = vmatpush1.bf16.msra.mxu0 %v1845
    %1946 = vmatprep.subr.bf16.mxu0 %v1842
    %1947 = vmatpush1.bf16.msra.mxu0 %v1841
    %1948 = vmatprep.subr.bf16.mxu0 %v1838
    %1949 = vmatpush1.bf16.msra.mxu0 %v1837
    %1950 = vmatprep.subr.bf16.mxu0 %v1834
    %1951 = vmatpush1.bf16.msra.mxu0 %v1833
    %1952 = vmatprep.subr.bf16.mxu0 0
    %1953 = vmatpush2.bf16.msra.mxu0 0
    %1954 = vmatprep.subr.bf16.mxu0 0
    %1955 = vmatpush2.bf16.msra.mxu0 0
    %1956 = vmatprep.subr.bf16.mxu0 0
    %1957 = vmatpush2.bf16.msra.mxu0 0
    %1958 = vmatprep.subr.bf16.mxu0 0
    %1959 = vmatpush2.bf16.msra.mxu0 0
    %1960 = vmatprep.subr.bf16.mxu0 0
    %1961 = vmatpush2.bf16.msra.mxu0 0
    %1962 = vmatprep.subr.bf16.mxu0 0
    %1963 = vmatpush2.bf16.msra.mxu0 0
    %1964 = vmatprep.subr.bf16.mxu0 0
    %1965 = vmatpush2.bf16.msra.mxu0 0
    %1966 = vmatprep.subr.bf16.mxu0 0
    %1967 = vmatpush2.bf16.msra.mxu0 0
    %1968 = vmatprep.mubr.bf16.mxu0 0
    %1969 = vmatmul.mubr.bf16.gmra.mxu0 %v1702
    %v1970 = vpop.f32.mrf.mxu0
    %v1971 = vadd.f32 0.0, %v1970
    %v1972 = vpop.f32.mrf.mxu0
    %v1973 = vadd.f32 0.0, %v1972
    %v1974 = vpop.f32.mrf.mxu0
    %v1975 = vpop.f32.mrf.mxu0
    %1976 = vdwg.mxu0
    %v1977 = vadd.f32 %v1698, %v1930
    %v1978 = vadd.f32 %v1699, %v1932
    %v1979 = vadd.f32 %v1700, %v1971
    %v1980 = vadd.f32 %v1701, %v1973
    %v1981 = vmul.f32 %v1977, 0.5
    %v1982 = vtanh.pop %v1981
    %v1983 = vmul.f32 %v1982, 0.5
    %v1984 = vadd.f32 %v1983, 0.5
    %v1985 = vmul.f32 %v1978, 0.5
    %v1986 = vtanh.pop %v1985
    %v1987 = vmul.f32 %v1986, 0.5
    %v1988 = vadd.f32 %v1987, 0.5
    %v1989 = vtanh.pop %v1979
    %v1990 = vmul.f32 %v1980, 0.5
    %v1991 = vtanh.pop %v1990
    %v1992 = vmul.f32 %v1991, 0.5
    %v1993 = vadd.f32 %v1992, 0.5
    %v1994 = vmul.f32 %v1988, %v1692
    %v1995 = vmul.f32 %v1984, %v1989
    %v1996 = vadd.f32 %v1994, %v1995
    %v1997 = vtanh.pop %v1996
    %v1998 = vmul.f32 %v1993, %v1997
    %s1999 = scalar_lea.vmem [#allocation3], 40
    %2000 = vst [vmem:[%s1999] sm:$0xff] %v1998
    %s2001 = scalar_lea.vmem [#allocation2], 192
    %v2002 = vld [vmem:[%s2001] sm:$0xff]
    %v2003 = vld [vmem:[%s2001 + $0x8] sm:$0xff]
    %v2004 = vld [vmem:[%s2001 + $0x10] sm:$0xff]
    %v2005 = vld [vmem:[%s2001 + $0x18] sm:$0xff]
    %v2006 = vpack.c.bf16 %v1998, %v1998
    %v2007 = vld [vmem:[#allocation7] sm:$0xff]
    %v2008 = vld [vmem:[#allocation7 + $0x8] sm:$0xff]
    %v2009 = vld [vmem:[#allocation7 + $0x10] sm:$0xff]
    %v2010 = vld [vmem:[#allocation7 + $0x18] sm:$0xff]
    %v2011 = vld [vmem:[#allocation7 + $0x20] sm:$0xff]
    %v2012 = vld [vmem:[#allocation7 + $0x28] sm:$0xff]
    %v2013 = vld [vmem:[#allocation7 + $0x30] sm:$0xff]
    %v2014 = vld [vmem:[#allocation7 + $0x38] sm:$0xff]
    %v2015 = vld [vmem:[#allocation7 + $0x40] sm:$0xff]
    %v2016 = vld [vmem:[#allocation7 + $0x48] sm:$0xff]
    %v2017 = vld [vmem:[#allocation7 + $0x50] sm:$0xff]
    %v2018 = vld [vmem:[#allocation7 + $0x58] sm:$0xff]
    %v2019 = vld [vmem:[#allocation7 + $0x60] sm:$0xff]
    %v2020 = vld [vmem:[#allocation7 + $0x68] sm:$0xff]
    %v2021 = vld [vmem:[#allocation7 + $0x70] sm:$0xff]
    %v2022 = vld [vmem:[#allocation7 + $0x78] sm:$0xff]
    %v2023 = vld [vmem:[#allocation7 + $0x80] sm:$0xff]
    %v2024 = vld [vmem:[#allocation7 + $0x88] sm:$0xff]
    %v2025 = vld [vmem:[#allocation7 + $0x90] sm:$0xff]
    %v2026 = vld [vmem:[#allocation7 + $0x98] sm:$0xff]
    %v2027 = vld [vmem:[#allocation7 + $0xa0] sm:$0xff]
    %v2028 = vld [vmem:[#allocation7 + $0xa8] sm:$0xff]
    %v2029 = vld [vmem:[#allocation7 + $0xb0] sm:$0xff]
    %v2030 = vld [vmem:[#allocation7 + $0xb8] sm:$0xff]
    %v2031 = vld [vmem:[#allocation7 + $0xc0] sm:$0xff]
    %v2032 = vld [vmem:[#allocation7 + $0xc8] sm:$0xff]
    %v2033 = vld [vmem:[#allocation7 + $0xd0] sm:$0xff]
    %v2034 = vld [vmem:[#allocation7 + $0xd8] sm:$0xff]
    %v2035 = vld [vmem:[#allocation7 + $0xe0] sm:$0xff]
    %v2036 = vld [vmem:[#allocation7 + $0xe8] sm:$0xff]
    %v2037 = vld [vmem:[#allocation7 + $0xf0] sm:$0xff]
    %v2038 = vld [vmem:[#allocation7 + $0xf8] sm:$0xff]
    %v2071 = vunpack.c.l.b16 %v2007
    %v2072 = vunpack.c.h.b16 %v2007
    %v2073 = vunpack.c.l.b16 %v2008
    %v2074 = vunpack.c.h.b16 %v2008
    %v2075 = vunpack.c.l.b16 %v2009
    %v2076 = vunpack.c.h.b16 %v2009
    %v2077 = vunpack.c.l.b16 %v2010
    %v2078 = vunpack.c.h.b16 %v2010
    %v2079 = vunpack.c.l.b16 %v2011
    %v2080 = vunpack.c.h.b16 %v2011
    %v2081 = vunpack.c.l.b16 %v2012
    %v2082 = vunpack.c.h.b16 %v2012
    %v2083 = vunpack.c.l.b16 %v2013
    %v2084 = vunpack.c.h.b16 %v2013
    %v2085 = vunpack.c.l.b16 %v2014
    %v2086 = vunpack.c.h.b16 %v2014
    %v2087 = vunpack.c.l.b16 %v2015
    %v2088 = vunpack.c.h.b16 %v2015
    %v2089 = vunpack.c.l.b16 %v2016
    %v2090 = vunpack.c.h.b16 %v2016
    %v2091 = vunpack.c.l.b16 %v2017
    %v2092 = vunpack.c.h.b16 %v2017
    %v2093 = vunpack.c.l.b16 %v2018
    %v2094 = vunpack.c.h.b16 %v2018
    %v2095 = vunpack.c.l.b16 %v2019
    %v2096 = vunpack.c.h.b16 %v2019
    %v2097 = vunpack.c.l.b16 %v2020
    %v2098 = vunpack.c.h.b16 %v2020
    %v2099 = vunpack.c.l.b16 %v2021
    %v2100 = vunpack.c.h.b16 %v2021
    %v2101 = vunpack.c.l.b16 %v2022
    %v2102 = vunpack.c.h.b16 %v2022
    %v2103 = vunpack.c.l.b16 %v2023
    %v2104 = vunpack.c.h.b16 %v2023
    %v2105 = vunpack.c.l.b16 %v2024
    %v2106 = vunpack.c.h.b16 %v2024
    %v2107 = vunpack.c.l.b16 %v2025
    %v2108 = vunpack.c.h.b16 %v2025
    %v2109 = vunpack.c.l.b16 %v2026
    %v2110 = vunpack.c.h.b16 %v2026
    %v2111 = vunpack.c.l.b16 %v2027
    %v2112 = vunpack.c.h.b16 %v2027
    %v2113 = vunpack.c.l.b16 %v2028
    %v2114 = vunpack.c.h.b16 %v2028
    %v2115 = vunpack.c.l.b16 %v2029
    %v2116 = vunpack.c.h.b16 %v2029
    %v2117 = vunpack.c.l.b16 %v2030
    %v2118 = vunpack.c.h.b16 %v2030
    %v2119 = vunpack.c.l.b16 %v2031
    %v2120 = vunpack.c.h.b16 %v2031
    %v2121 = vunpack.c.l.b16 %v2032
    %v2122 = vunpack.c.h.b16 %v2032
    %v2123 = vunpack.c.l.b16 %v2033
    %v2124 = vunpack.c.h.b16 %v2033
    %v2125 = vunpack.c.l.b16 %v2034
    %v2126 = vunpack.c.h.b16 %v2034
    %v2127 = vunpack.c.l.b16 %v2035
    %v2128 = vunpack.c.h.b16 %v2035
    %v2129 = vunpack.c.l.b16 %v2036
    %v2130 = vunpack.c.h.b16 %v2036
    %v2131 = vunpack.c.l.b16 %v2037
    %v2132 = vunpack.c.h.b16 %v2037
    %v2133 = vunpack.c.l.b16 %v2038
    %v2134 = vunpack.c.h.b16 %v2038
    %v2135 = vpack.c.b16 %v2075, %v2071
    %v2136 = vpack.c.b16 %v2076, %v2072
    %v2137 = vpack.c.b16 %v2077, %v2073
    %v2138 = vpack.c.b16 %v2078, %v2074
    %v2139 = vpack.c.b16 %v2083, %v2079
    %v2140 = vpack.c.b16 %v2084, %v2080
    %v2141 = vpack.c.b16 %v2085, %v2081
    %v2142 = vpack.c.b16 %v2086, %v2082
    %v2143 = vpack.c.b16 %v2091, %v2087
    %v2144 = vpack.c.b16 %v2092, %v2088
    %v2145 = vpack.c.b16 %v2093, %v2089
    %v2146 = vpack.c.b16 %v2094, %v2090
    %v2147 = vpack.c.b16 %v2099, %v2095
    %v2148 = vpack.c.b16 %v2100, %v2096
    %v2149 = vpack.c.b16 %v2101, %v2097
    %v2150 = vpack.c.b16 %v2102, %v2098
    %v2151 = vpack.c.b16 %v2107, %v2103
    %v2152 = vpack.c.b16 %v2108, %v2104
    %v2153 = vpack.c.b16 %v2109, %v2105
    %v2154 = vpack.c.b16 %v2110, %v2106
    %v2155 = vpack.c.b16 %v2115, %v2111
    %v2156 = vpack.c.b16 %v2116, %v2112
    %v2157 = vpack.c.b16 %v2117, %v2113
    %v2158 = vpack.c.b16 %v2118, %v2114
    %v2159 = vpack.c.b16 %v2123, %v2119
    %v2160 = vpack.c.b16 %v2124, %v2120
    %v2161 = vpack.c.b16 %v2125, %v2121
    %v2162 = vpack.c.b16 %v2126, %v2122
    %v2163 = vpack.c.b16 %v2131, %v2127
    %v2164 = vpack.c.b16 %v2132, %v2128
    %v2165 = vpack.c.b16 %v2133, %v2129
    %v2166 = vpack.c.b16 %v2134, %v2130
    %2199 = vmatprep.subr.bf16.mxu0 %v2164
    %2200 = vmatpush1.bf16.msra.mxu0 %v2163
    %2201 = vmatprep.subr.bf16.mxu0 %v2160
    %2202 = vmatpush1.bf16.msra.mxu0 %v2159
    %2203 = vmatprep.subr.bf16.mxu0 %v2156
    %2204 = vmatpush1.bf16.msra.mxu0 %v2155
    %2205 = vmatprep.subr.bf16.mxu0 %v2152
    %2206 = vmatpush1.bf16.msra.mxu0 %v2151
    %2207 = vmatprep.subr.bf16.mxu0 %v2148
    %2208 = vmatpush1.bf16.msra.mxu0 %v2147
    %2209 = vmatprep.subr.bf16.mxu0 %v2144
    %2210 = vmatpush1.bf16.msra.mxu0 %v2143
    %2211 = vmatprep.subr.bf16.mxu0 %v2140
    %2212 = vmatpush1.bf16.msra.mxu0 %v2139
    %2213 = vmatprep.subr.bf16.mxu0 %v2136
    %2214 = vmatpush1.bf16.msra.mxu0 %v2135
    %2215 = vmatprep.subr.bf16.mxu0 0
    %2216 = vmatpush2.bf16.msra.mxu0 0
    %2217 = vmatprep.subr.bf16.mxu0 0
    %2218 = vmatpush2.bf16.msra.mxu0 0
    %2219 = vmatprep.subr.bf16.mxu0 0
    %2220 = vmatpush2.bf16.msra.mxu0 0
    %2221 = vmatprep.subr.bf16.mxu0 0
    %2222 = vmatpush2.bf16.msra.mxu0 0
    %2223 = vmatprep.subr.bf16.mxu0 0
    %2224 = vmatpush2.bf16.msra.mxu0 0
    %2225 = vmatprep.subr.bf16.mxu0 0
    %2226 = vmatpush2.bf16.msra.mxu0 0
    %2227 = vmatprep.subr.bf16.mxu0 0
    %2228 = vmatpush2.bf16.msra.mxu0 0
    %2229 = vmatprep.subr.bf16.mxu0 0
    %2230 = vmatpush2.bf16.msra.mxu0 0
    %2231 = vmatprep.mubr.bf16.mxu0 0
    %2232 = vmatmul.mubr.bf16.gmra.mxu0 %v2006
    %v2233 = vpop.f32.mrf.mxu0
    %v2234 = vadd.f32 0.0, %v2233
    %v2235 = vpop.f32.mrf.mxu0
    %v2236 = vadd.f32 0.0, %v2235
    %v2237 = vpop.f32.mrf.mxu0
    %v2238 = vpop.f32.mrf.mxu0
    %2239 = vdwg.mxu0
    %2240 = vmatprep.subr.bf16.mxu0 %v2166
    %2241 = vmatpush1.bf16.msra.mxu0 %v2165
    %2242 = vmatprep.subr.bf16.mxu0 %v2162
    %2243 = vmatpush1.bf16.msra.mxu0 %v2161
    %2244 = vmatprep.subr.bf16.mxu0 %v2158
    %2245 = vmatpush1.bf16.msra.mxu0 %v2157
    %2246 = vmatprep.subr.bf16.mxu0 %v2154
    %2247 = vmatpush1.bf16.msra.mxu0 %v2153
    %2248 = vmatprep.subr.bf16.mxu0 %v2150
    %2249 = vmatpush1.bf16.msra.mxu0 %v2149
    %2250 = vmatprep.subr.bf16.mxu0 %v2146
    %2251 = vmatpush1.bf16.msra.mxu0 %v2145
    %2252 = vmatprep.subr.bf16.mxu0 %v2142
    %2253 = vmatpush1.bf16.msra.mxu0 %v2141
    %2254 = vmatprep.subr.bf16.mxu0 %v2138
    %2255 = vmatpush1.bf16.msra.mxu0 %v2137
    %2256 = vmatprep.subr.bf16.mxu0 0
    %2257 = vmatpush2.bf16.msra.mxu0 0
    %2258 = vmatprep.subr.bf16.mxu0 0
    %2259 = vmatpush2.bf16.msra.mxu0 0
    %2260 = vmatprep.subr.bf16.mxu0 0
    %2261 = vmatpush2.bf16.msra.mxu0 0
    %2262 = vmatprep.subr.bf16.mxu0 0
    %2263 = vmatpush2.bf16.msra.mxu0 0
    %2264 = vmatprep.subr.bf16.mxu0 0
    %2265 = vmatpush2.bf16.msra.mxu0 0
    %2266 = vmatprep.subr.bf16.mxu0 0
    %2267 = vmatpush2.bf16.msra.mxu0 0
    %2268 = vmatprep.subr.bf16.mxu0 0
    %2269 = vmatpush2.bf16.msra.mxu0 0
    %2270 = vmatprep.subr.bf16.mxu0 0
    %2271 = vmatpush2.bf16.msra.mxu0 0
    %2272 = vmatprep.mubr.bf16.mxu0 0
    %2273 = vmatmul.mubr.bf16.gmra.mxu0 %v2006
    %v2274 = vpop.f32.mrf.mxu0
    %v2275 = vadd.f32 0.0, %v2274
    %v2276 = vpop.f32.mrf.mxu0
    %v2277 = vadd.f32 0.0, %v2276
    %v2278 = vpop.f32.mrf.mxu0
    %v2279 = vpop.f32.mrf.mxu0
    %2280 = vdwg.mxu0
    %v2281 = vadd.f32 %v2002, %v2234
    %v2282 = vadd.f32 %v2003, %v2236
    %v2283 = vadd.f32 %v2004, %v2275
    %v2284 = vadd.f32 %v2005, %v2277
    %v2285 = vmul.f32 %v2281, 0.5
    %v2286 = vtanh.pop %v2285
    %v2287 = vmul.f32 %v2286, 0.5
    %v2288 = vadd.f32 %v2287, 0.5
    %v2289 = vmul.f32 %v2282, 0.5
    %v2290 = vtanh.pop %v2289
    %v2291 = vmul.f32 %v2290, 0.5
    %v2292 = vadd.f32 %v2291, 0.5
    %v2293 = vtanh.pop %v2283
    %v2294 = vmul.f32 %v2284, 0.5
    %v2295 = vtanh.pop %v2294
    %v2296 = vmul.f32 %v2295, 0.5
    %v2297 = vadd.f32 %v2296, 0.5
    %v2298 = vmul.f32 %v2292, %v1996
    %v2299 = vmul.f32 %v2288, %v2293
    %v2300 = vadd.f32 %v2298, %v2299
    %v2301 = vtanh.pop %v2300
    %v2302 = vmul.f32 %v2297, %v2301
    %s2303 = scalar_lea.vmem [#allocation3], 48
    %2304 = vst [vmem:[%s2303] sm:$0xff] %v2302
    %s2305 = scalar_lea.vmem [#allocation2], 224
    %v2306 = vld [vmem:[%s2305] sm:$0xff]
    %v2307 = vld [vmem:[%s2305 + $0x8] sm:$0xff]
    %v2308 = vld [vmem:[%s2305 + $0x10] sm:$0xff]
    %v2309 = vld [vmem:[%s2305 + $0x18] sm:$0xff]
    %v2310 = vpack.c.bf16 %v2302, %v2302
    %v2311 = vld [vmem:[#allocation7] sm:$0xff]
    %v2312 = vld [vmem:[#allocation7 + $0x8] sm:$0xff]
    %v2313 = vld [vmem:[#allocation7 + $0x10] sm:$0xff]
    %v2314 = vld [vmem:[#allocation7 + $0x18] sm:$0xff]
    %v2315 = vld [vmem:[#allocation7 + $0x20] sm:$0xff]
    %v2316 = vld [vmem:[#allocation7 + $0x28] sm:$0xff]
    %v2317 = vld [vmem:[#allocation7 + $0x30] sm:$0xff]
    %v2318 = vld [vmem:[#allocation7 + $0x38] sm:$0xff]
    %v2319 = vld [vmem:[#allocation7 + $0x40] sm:$0xff]
    %v2320 = vld [vmem:[#allocation7 + $0x48] sm:$0xff]
    %v2321 = vld [vmem:[#allocation7 + $0x50] sm:$0xff]
    %v2322 = vld [vmem:[#allocation7 + $0x58] sm:$0xff]
    %v2323 = vld [vmem:[#allocation7 + $0x60] sm:$0xff]
    %v2324 = vld [vmem:[#allocation7 + $0x68] sm:$0xff]
    %v2325 = vld [vmem:[#allocation7 + $0x70] sm:$0xff]
    %v2326 = vld [vmem:[#allocation7 + $0x78] sm:$0xff]
    %v2327 = vld [vmem:[#allocation7 + $0x80] sm:$0xff]
    %v2328 = vld [vmem:[#allocation7 + $0x88] sm:$0xff]
    %v2329 = vld [vmem:[#allocation7 + $0x90] sm:$0xff]
    %v2330 = vld [vmem:[#allocation7 + $0x98] sm:$0xff]
    %v2331 = vld [vmem:[#allocation7 + $0xa0] sm:$0xff]
    %v2332 = vld [vmem:[#allocation7 + $0xa8] sm:$0xff]
    %v2333 = vld [vmem:[#allocation7 + $0xb0] sm:$0xff]
    %v2334 = vld [vmem:[#allocation7 + $0xb8] sm:$0xff]
    %v2335 = vld [vmem:[#allocation7 + $0xc0] sm:$0xff]
    %v2336 = vld [vmem:[#allocation7 + $0xc8] sm:$0xff]
    %v2337 = vld [vmem:[#allocation7 + $0xd0] sm:$0xff]
    %v2338 = vld [vmem:[#allocation7 + $0xd8] sm:$0xff]
    %v2339 = vld [vmem:[#allocation7 + $0xe0] sm:$0xff]
    %v2340 = vld [vmem:[#allocation7 + $0xe8] sm:$0xff]
    %v2341 = vld [vmem:[#allocation7 + $0xf0] sm:$0xff]
    %v2342 = vld [vmem:[#allocation7 + $0xf8] sm:$0xff]
    %v2375 = vunpack.c.l.b16 %v2311
    %v2376 = vunpack.c.h.b16 %v2311
    %v2377 = vunpack.c.l.b16 %v2312
    %v2378 = vunpack.c.h.b16 %v2312
    %v2379 = vunpack.c.l.b16 %v2313
    %v2380 = vunpack.c.h.b16 %v2313
    %v2381 = vunpack.c.l.b16 %v2314
    %v2382 = vunpack.c.h.b16 %v2314
    %v2383 = vunpack.c.l.b16 %v2315
    %v2384 = vunpack.c.h.b16 %v2315
    %v2385 = vunpack.c.l.b16 %v2316
    %v2386 = vunpack.c.h.b16 %v2316
    %v2387 = vunpack.c.l.b16 %v2317
    %v2388 = vunpack.c.h.b16 %v2317
    %v2389 = vunpack.c.l.b16 %v2318
    %v2390 = vunpack.c.h.b16 %v2318
    %v2391 = vunpack.c.l.b16 %v2319
    %v2392 = vunpack.c.h.b16 %v2319
    %v2393 = vunpack.c.l.b16 %v2320
    %v2394 = vunpack.c.h.b16 %v2320
    %v2395 = vunpack.c.l.b16 %v2321
    %v2396 = vunpack.c.h.b16 %v2321
    %v2397 = vunpack.c.l.b16 %v2322
    %v2398 = vunpack.c.h.b16 %v2322
    %v2399 = vunpack.c.l.b16 %v2323
    %v2400 = vunpack.c.h.b16 %v2323
    %v2401 = vunpack.c.l.b16 %v2324
    %v2402 = vunpack.c.h.b16 %v2324
    %v2403 = vunpack.c.l.b16 %v2325
    %v2404 = vunpack.c.h.b16 %v2325
    %v2405 = vunpack.c.l.b16 %v2326
    %v2406 = vunpack.c.h.b16 %v2326
    %v2407 = vunpack.c.l.b16 %v2327
    %v2408 = vunpack.c.h.b16 %v2327
    %v2409 = vunpack.c.l.b16 %v2328
    %v2410 = vunpack.c.h.b16 %v2328
    %v2411 = vunpack.c.l.b16 %v2329
    %v2412 = vunpack.c.h.b16 %v2329
    %v2413 = vunpack.c.l.b16 %v2330
    %v2414 = vunpack.c.h.b16 %v2330
    %v2415 = vunpack.c.l.b16 %v2331
    %v2416 = vunpack.c.h.b16 %v2331
    %v2417 = vunpack.c.l.b16 %v2332
    %v2418 = vunpack.c.h.b16 %v2332
    %v2419 = vunpack.c.l.b16 %v2333
    %v2420 = vunpack.c.h.b16 %v2333
    %v2421 = vunpack.c.l.b16 %v2334
    %v2422 = vunpack.c.h.b16 %v2334
    %v2423 = vunpack.c.l.b16 %v2335
    %v2424 = vunpack.c.h.b16 %v2335
    %v2425 = vunpack.c.l.b16 %v2336
    %v2426 = vunpack.c.h.b16 %v2336
    %v2427 = vunpack.c.l.b16 %v2337
    %v2428 = vunpack.c.h.b16 %v2337
    %v2429 = vunpack.c.l.b16 %v2338
    %v2430 = vunpack.c.h.b16 %v2338
    %v2431 = vunpack.c.l.b16 %v2339
    %v2432 = vunpack.c.h.b16 %v2339
    %v2433 = vunpack.c.l.b16 %v2340
    %v2434 = vunpack.c.h.b16 %v2340
    %v2435 = vunpack.c.l.b16 %v2341
    %v2436 = vunpack.c.h.b16 %v2341
    %v2437 = vunpack.c.l.b16 %v2342
    %v2438 = vunpack.c.h.b16 %v2342
    %v2439 = vpack.c.b16 %v2379, %v2375
    %v2440 = vpack.c.b16 %v2380, %v2376
    %v2441 = vpack.c.b16 %v2381, %v2377
    %v2442 = vpack.c.b16 %v2382, %v2378
    %v2443 = vpack.c.b16 %v2387, %v2383
    %v2444 = vpack.c.b16 %v2388, %v2384
    %v2445 = vpack.c.b16 %v2389, %v2385
    %v2446 = vpack.c.b16 %v2390, %v2386
    %v2447 = vpack.c.b16 %v2395, %v2391
    %v2448 = vpack.c.b16 %v2396, %v2392
    %v2449 = vpack.c.b16 %v2397, %v2393
    %v2450 = vpack.c.b16 %v2398, %v2394
    %v2451 = vpack.c.b16 %v2403, %v2399
    %v2452 = vpack.c.b16 %v2404, %v2400
    %v2453 = vpack.c.b16 %v2405, %v2401
    %v2454 = vpack.c.b16 %v2406, %v2402
    %v2455 = vpack.c.b16 %v2411, %v2407
    %v2456 = vpack.c.b16 %v2412, %v2408
    %v2457 = vpack.c.b16 %v2413, %v2409
    %v2458 = vpack.c.b16 %v2414, %v2410
    %v2459 = vpack.c.b16 %v2419, %v2415
    %v2460 = vpack.c.b16 %v2420, %v2416
    %v2461 = vpack.c.b16 %v2421, %v2417
    %v2462 = vpack.c.b16 %v2422, %v2418
    %v2463 = vpack.c.b16 %v2427, %v2423
    %v2464 = vpack.c.b16 %v2428, %v2424
    %v2465 = vpack.c.b16 %v2429, %v2425
    %v2466 = vpack.c.b16 %v2430, %v2426
    %v2467 = vpack.c.b16 %v2435, %v2431
    %v2468 = vpack.c.b16 %v2436, %v2432
    %v2469 = vpack.c.b16 %v2437, %v2433
    %v2470 = vpack.c.b16 %v2438, %v2434
    %2503 = vmatprep.subr.bf16.mxu0 %v2468
    %2504 = vmatpush1.bf16.msra.mxu0 %v2467
    %2505 = vmatprep.subr.bf16.mxu0 %v2464
    %2506 = vmatpush1.bf16.msra.mxu0 %v2463
    %2507 = vmatprep.subr.bf16.mxu0 %v2460
    %2508 = vmatpush1.bf16.msra.mxu0 %v2459
    %2509 = vmatprep.subr.bf16.mxu0 %v2456
    %2510 = vmatpush1.bf16.msra.mxu0 %v2455
    %2511 = vmatprep.subr.bf16.mxu0 %v2452
    %2512 = vmatpush1.bf16.msra.mxu0 %v2451
    %2513 = vmatprep.subr.bf16.mxu0 %v2448
    %2514 = vmatpush1.bf16.msra.mxu0 %v2447
    %2515 = vmatprep.subr.bf16.mxu0 %v2444
    %2516 = vmatpush1.bf16.msra.mxu0 %v2443
    %2517 = vmatprep.subr.bf16.mxu0 %v2440
    %2518 = vmatpush1.bf16.msra.mxu0 %v2439
    %2519 = vmatprep.subr.bf16.mxu0 0
    %2520 = vmatpush2.bf16.msra.mxu0 0
    %2521 = vmatprep.subr.bf16.mxu0 0
    %2522 = vmatpush2.bf16.msra.mxu0 0
    %2523 = vmatprep.subr.bf16.mxu0 0
    %2524 = vmatpush2.bf16.msra.mxu0 0
    %2525 = vmatprep.subr.bf16.mxu0 0
    %2526 = vmatpush2.bf16.msra.mxu0 0
    %2527 = vmatprep.subr.bf16.mxu0 0
    %2528 = vmatpush2.bf16.msra.mxu0 0
    %2529 = vmatprep.subr.bf16.mxu0 0
    %2530 = vmatpush2.bf16.msra.mxu0 0
    %2531 = vmatprep.subr.bf16.mxu0 0
    %2532 = vmatpush2.bf16.msra.mxu0 0
    %2533 = vmatprep.subr.bf16.mxu0 0
    %2534 = vmatpush2.bf16.msra.mxu0 0
    %2535 = vmatprep.mubr.bf16.mxu0 0
    %2536 = vmatmul.mubr.bf16.gmra.mxu0 %v2310
    %v2537 = vpop.f32.mrf.mxu0
    %v2538 = vadd.f32 0.0, %v2537
    %v2539 = vpop.f32.mrf.mxu0
    %v2540 = vadd.f32 0.0, %v2539
    %v2541 = vpop.f32.mrf.mxu0
    %v2542 = vpop.f32.mrf.mxu0
    %2543 = vdwg.mxu0
    %2544 = vmatprep.subr.bf16.mxu0 %v2470
    %2545 = vmatpush1.bf16.msra.mxu0 %v2469
    %2546 = vmatprep.subr.bf16.mxu0 %v2466
    %2547 = vmatpush1.bf16.msra.mxu0 %v2465
    %2548 = vmatprep.subr.bf16.mxu0 %v2462
    %2549 = vmatpush1.bf16.msra.mxu0 %v2461
    %2550 = vmatprep.subr.bf16.mxu0 %v2458
    %2551 = vmatpush1.bf16.msra.mxu0 %v2457
    %2552 = vmatprep.subr.bf16.mxu0 %v2454
    %2553 = vmatpush1.bf16.msra.mxu0 %v2453
    %2554 = vmatprep.subr.bf16.mxu0 %v2450
    %2555 = vmatpush1.bf16.msra.mxu0 %v2449
    %2556 = vmatprep.subr.bf16.mxu0 %v2446
    %2557 = vmatpush1.bf16.msra.mxu0 %v2445
    %2558 = vmatprep.subr.bf16.mxu0 %v2442
    %2559 = vmatpush1.bf16.msra.mxu0 %v2441
    %2560 = vmatprep.subr.bf16.mxu0 0
    %2561 = vmatpush2.bf16.msra.mxu0 0
    %2562 = vmatprep.subr.bf16.mxu0 0
    %2563 = vmatpush2.bf16.msra.mxu0 0
    %2564 = vmatprep.subr.bf16.mxu0 0
    %2565 = vmatpush2.bf16.msra.mxu0 0
    %2566 = vmatprep.subr.bf16.mxu0 0
    %2567 = vmatpush2.bf16.msra.mxu0 0
    %2568 = vmatprep.subr.bf16.mxu0 0
    %2569 = vmatpush2.bf16.msra.mxu0 0
    %2570 = vmatprep.subr.bf16.mxu0 0
    %2571 = vmatpush2.bf16.msra.mxu0 0
    %2572 = vmatprep.subr.bf16.mxu0 0
    %2573 = vmatpush2.bf16.msra.mxu0 0
    %2574 = vmatprep.subr.bf16.mxu0 0
    %2575 = vmatpush2.bf16.msra.mxu0 0
    %2576 = vmatprep.mubr.bf16.mxu0 0
    %2577 = vmatmul.mubr.bf16.gmra.mxu0 %v2310
    %v2578 = vpop.f32.mrf.mxu0
    %v2579 = vadd.f32 0.0, %v2578
    %v2580 = vpop.f32.mrf.mxu0
    %v2581 = vadd.f32 0.0, %v2580
    %v2582 = vpop.f32.mrf.mxu0
    %v2583 = vpop.f32.mrf.mxu0
    %2584 = vdwg.mxu0
    %v2585 = vadd.f32 %v2306, %v2538
    %v2586 = vadd.f32 %v2307, %v2540
    %v2587 = vadd.f32 %v2308, %v2579
    %v2588 = vadd.f32 %v2309, %v2581
    %v2589 = vmul.f32 %v2585, 0.5
    %v2590 = vtanh.pop %v2589
    %v2591 = vmul.f32 %v2590, 0.5
    %v2592 = vadd.f32 %v2591, 0.5
    %v2593 = vmul.f32 %v2586, 0.5
    %v2594 = vtanh.pop %v2593
    %v2595 = vmul.f32 %v2594, 0.5
    %v2596 = vadd.f32 %v2595, 0.5
    %v2597 = vtanh.pop %v2587
    %v2598 = vmul.f32 %v2588, 0.5
    %v2599 = vtanh.pop %v2598
    %v2600 = vmul.f32 %v2599, 0.5
    %v2601 = vadd.f32 %v2600, 0.5
    %v2602 = vmul.f32 %v2596, %v2300
    %v2603 = vmul.f32 %v2592, %v2597
    %v2604 = vadd.f32 %v2602, %v2603
    %v2605 = vtanh.pop %v2604
    %v2606 = vmul.f32 %v2601, %v2605
    %s2607 = scalar_lea.vmem [#allocation3], 56
    %2608 = vst [vmem:[%s2607] sm:$0xff] %v2606
    %v2609 = vld [vmem:[#allocation3] sm:$0xff]
    %v2610 = vld [vmem:[#allocation3 + $0x8] sm:$0xff]
    %v2611 = vld [vmem:[#allocation3 + $0x10] sm:$0xff]
    %v2612 = vld [vmem:[#allocation3 + $0x18] sm:$0xff]
    %v2613 = vld [vmem:[#allocation3 + $0x20] sm:$0xff]
    %v2614 = vld [vmem:[#allocation3 + $0x28] sm:$0xff]
    %v2615 = vld [vmem:[#allocation3 + $0x30] sm:$0xff]
    %v2616 = vld [vmem:[#allocation3 + $0x38] sm:$0xff]
    %v2617 = vpack.c.bf16 %v2610, %v2609
    %v2618 = vpack.c.bf16 %v2612, %v2611
    %v2619 = vpack.c.bf16 %v2614, %v2613
    %v2620 = vpack.c.bf16 %v2616, %v2615
    %v2621 = vld [vmem:[%s3] sm:$0xf]
    %v2622 = vld [vmem:[%s3 + $0x4] sm:$0xf]
    %v2623 = vld [vmem:[%s3 + $0x8] sm:$0xf]
    %v2624 = vld [vmem:[%s3 + $0xc] sm:$0xf]
    %v2625 = vld [vmem:[%s3 + $0x10] sm:$0xf]
    %v2626 = vld [vmem:[%s3 + $0x14] sm:$0xf]
    %v2627 = vld [vmem:[%s3 + $0x18] sm:$0xf]
    %v2628 = vld [vmem:[%s3 + $0x1c] sm:$0xf]
    %v2629 = vld [vmem:[%s3 + $0x20] sm:$0xf]
    %v2630 = vld [vmem:[%s3 + $0x24] sm:$0xf]
    %v2631 = vld [vmem:[%s3 + $0x28] sm:$0xf]
    %v2632 = vld [vmem:[%s3 + $0x2c] sm:$0xf]
    %v2633 = vld [vmem:[%s3 + $0x30] sm:$0xf]
    %v2634 = vld [vmem:[%s3 + $0x34] sm:$0xf]
    %v2635 = vld [vmem:[%s3 + $0x38] sm:$0xf]
    %v2636 = vld [vmem:[%s3 + $0x3c] sm:$0xf]
    %v2637 = vlaneseq
    %v2638 = vshrl.u32 %v2637, 7
    %v2639 = vsub.s32 1, %v2638
    %v2640 = vrot.slane %v64, %v2639
    %v2657 = vunpack.c.l.b16 %v2621
    %v2658 = vunpack.c.l.b16 %v2622
    %v2659 = vunpack.c.l.b16 %v2623
    %v2660 = vunpack.c.l.b16 %v2624
    %v2661 = vunpack.c.l.b16 %v2625
    %v2662 = vunpack.c.l.b16 %v2626
    %v2663 = vunpack.c.l.b16 %v2627
    %v2664 = vunpack.c.l.b16 %v2628
    %v2665 = vunpack.c.l.b16 %v2629
    %v2666 = vunpack.c.l.b16 %v2630
    %v2667 = vunpack.c.l.b16 %v2631
    %v2668 = vunpack.c.l.b16 %v2632
    %v2669 = vunpack.c.l.b16 %v2633
    %v2670 = vunpack.c.l.b16 %v2634
    %v2671 = vunpack.c.l.b16 %v2635
    %v2672 = vunpack.c.l.b16 %v2636
    %v2673 = vpack.c.b16 %v2658, %v2657
    %v2674 = vpack.c.b16 %v2660, %v2659
    %v2675 = vpack.c.b16 %v2662, %v2661
    %v2676 = vpack.c.b16 %v2664, %v2663
    %v2677 = vpack.c.b16 %v2666, %v2665
    %v2678 = vpack.c.b16 %v2668, %v2667
    %v2679 = vpack.c.b16 %v2670, %v2669
    %v2680 = vpack.c.b16 %v2672, %v2671
    %2689 = vmatprep.subr.bf16.mxu0 0
    %2690 = vmatpush1.bf16.msra.mxu0 %v2680
    %2691 = vmatprep.subr.bf16.mxu0 0
    %2692 = vmatpush1.bf16.msra.mxu0 %v2679
    %2693 = vmatprep.subr.bf16.mxu0 0
    %2694 = vmatpush1.bf16.msra.mxu0 %v2678
    %2695 = vmatprep.subr.bf16.mxu0 0
    %2696 = vmatpush1.bf16.msra.mxu0 %v2677
    %2697 = vmatprep.subr.bf16.mxu0 0
    %2698 = vmatpush1.bf16.msra.mxu0 %v2676
    %2699 = vmatprep.subr.bf16.mxu0 0
    %2700 = vmatpush1.bf16.msra.mxu0 %v2675
    %2701 = vmatprep.subr.bf16.mxu0 0
    %2702 = vmatpush1.bf16.msra.mxu0 %v2674
    %2703 = vmatprep.subr.bf16.mxu0 0
    %2704 = vmatpush1.bf16.msra.mxu0 %v2673
    %2705 = vmatprep.subr.bf16.mxu0 0
    %2706 = vmatpush2.bf16.msra.mxu0 0
    %2707 = vmatprep.subr.bf16.mxu0 0
    %2708 = vmatpush2.bf16.msra.mxu0 0
    %2709 = vmatprep.subr.bf16.mxu0 0
    %2710 = vmatpush2.bf16.msra.mxu0 0
    %2711 = vmatprep.subr.bf16.mxu0 0
    %2712 = vmatpush2.bf16.msra.mxu0 0
    %2713 = vmatprep.subr.bf16.mxu0 0
    %2714 = vmatpush2.bf16.msra.mxu0 0
    %2715 = vmatprep.subr.bf16.mxu0 0
    %2716 = vmatpush2.bf16.msra.mxu0 0
    %2717 = vmatprep.subr.bf16.mxu0 0
    %2718 = vmatpush2.bf16.msra.mxu0 0
    %2719 = vmatprep.subr.bf16.mxu0 0
    %2720 = vmatpush2.bf16.msra.mxu0 0
    %2721 = vmatprep.mubr.bf16.mxu0 0
    %2722 = vmatmul.mubr.bf16.gmra.mxu0 %v2617
    %v2723 = vpop.f32.mrf.mxu0
    %v2724 = vadd.f32 %v2640, %v2723
    %v2725 = vpop.f32.mrf.mxu0
    %v2726 = vpop.f32.mrf.mxu0
    %v2727 = vadd.f32 %v2640, %v2726
    %v2728 = vpop.f32.mrf.mxu0
    %2729 = vmatprep.mubr.bf16.mxu0 0
    %2730 = vmatmul.mubr.bf16.gmra.mxu0 %v2618
    %v2731 = vpop.f32.mrf.mxu0
    %v2732 = vadd.f32 %v2640, %v2731
    %v2733 = vpop.f32.mrf.mxu0
    %v2734 = vpop.f32.mrf.mxu0
    %v2735 = vadd.f32 %v2640, %v2734
    %v2736 = vpop.f32.mrf.mxu0
    %2737 = vmatprep.mubr.bf16.mxu0 0
    %2738 = vmatmul.mubr.bf16.gmra.mxu0 %v2619
    %v2739 = vpop.f32.mrf.mxu0
    %v2740 = vadd.f32 %v2640, %v2739
    %v2741 = vpop.f32.mrf.mxu0
    %v2742 = vpop.f32.mrf.mxu0
    %v2743 = vadd.f32 %v2640, %v2742
    %v2744 = vpop.f32.mrf.mxu0
    %2745 = vmatprep.mubr.bf16.mxu0 0
    %2746 = vmatmul.mubr.bf16.gmra.mxu0 %v2620
    %v2747 = vpop.f32.mrf.mxu0
    %v2748 = vadd.f32 %v2640, %v2747
    %v2749 = vpop.f32.mrf.mxu0
    %v2750 = vpop.f32.mrf.mxu0
    %v2751 = vadd.f32 %v2640, %v2750
    %v2752 = vpop.f32.mrf.mxu0
    %2753 = vdwg.mxu0
    %v2754 = vsel %vm76, %v2724, 0.0
    %2755 = vadd.xlane.f32.xlu0 %v2754
    %v2756 = vpop.xlane.xlu0 %2755
    %v2757 = vsel %vm76, %v2727, 0.0
    %2758 = vadd.xlane.f32.xlu0 %v2757
    %v2759 = vpop.xlane.xlu0 %2758
    %v2760 = vsel %vm76, %v2732, 0.0
    %2761 = vadd.xlane.f32.xlu0 %v2760
    %v2762 = vpop.xlane.xlu0 %2761
    %v2763 = vsel %vm76, %v2735, 0.0
    %2764 = vadd.xlane.f32.xlu0 %v2763
    %v2765 = vpop.xlane.xlu0 %2764
    %v2766 = vsel %vm76, %v2740, 0.0
    %2767 = vadd.xlane.f32.xlu0 %v2766
    %v2768 = vpop.xlane.xlu0 %2767
    %v2769 = vsel %vm76, %v2743, 0.0
    %2770 = vadd.xlane.f32.xlu0 %v2769
    %v2771 = vpop.xlane.xlu0 %2770
    %v2772 = vsel %vm76, %v2748, 0.0
    %2773 = vadd.xlane.f32.xlu0 %v2772
    %v2774 = vpop.xlane.xlu0 %2773
    %v2775 = vsel %vm76, %v2751, 0.0
    %2776 = vadd.xlane.f32.xlu0 %v2775
    %v2777 = vpop.xlane.xlu0 %2776
    %v2778 = vmul.f32 %v2756, %v101
    %v2779 = vmul.f32 %v2759, %v101
    %v2780 = vmul.f32 %v2762, %v101
    %v2781 = vmul.f32 %v2765, %v101
    %v2782 = vmul.f32 %v2768, %v101
    %v2783 = vmul.f32 %v2771, %v101
    %v2784 = vmul.f32 %v2774, %v101
    %v2785 = vmul.f32 %v2777, %v101
    %v2786 = vsub.f32 %v2724, %v2778
    %v2787 = vsub.f32 %v2727, %v2779
    %v2788 = vsub.f32 %v2732, %v2780
    %v2789 = vsub.f32 %v2735, %v2781
    %v2790 = vsub.f32 %v2740, %v2782
    %v2791 = vsub.f32 %v2743, %v2783
    %v2792 = vsub.f32 %v2748, %v2784
    %v2793 = vsub.f32 %v2751, %v2785
    %v2794 = vmul.f32 %v2786, %v2786
    %v2795 = vmul.f32 %v2787, %v2787
    %v2796 = vmul.f32 %v2788, %v2788
    %v2797 = vmul.f32 %v2789, %v2789
    %v2798 = vmul.f32 %v2790, %v2790
    %v2799 = vmul.f32 %v2791, %v2791
    %v2800 = vmul.f32 %v2792, %v2792
    %v2801 = vmul.f32 %v2793, %v2793
    %v2802 = vsel %vm76, %v2794, 0.0
    %2803 = vadd.xlane.f32.xlu0 %v2802
    %v2804 = vpop.xlane.xlu0 %2803
    %v2805 = vsel %vm76, %v2795, 0.0
    %2806 = vadd.xlane.f32.xlu0 %v2805
    %v2807 = vpop.xlane.xlu0 %2806
    %v2808 = vsel %vm76, %v2796, 0.0
    %2809 = vadd.xlane.f32.xlu0 %v2808
    %v2810 = vpop.xlane.xlu0 %2809
    %v2811 = vsel %vm76, %v2797, 0.0
    %2812 = vadd.xlane.f32.xlu0 %v2811
    %v2813 = vpop.xlane.xlu0 %2812
    %v2814 = vsel %vm76, %v2798, 0.0
    %2815 = vadd.xlane.f32.xlu0 %v2814
    %v2816 = vpop.xlane.xlu0 %2815
    %v2817 = vsel %vm76, %v2799, 0.0
    %2818 = vadd.xlane.f32.xlu0 %v2817
    %v2819 = vpop.xlane.xlu0 %2818
    %v2820 = vsel %vm76, %v2800, 0.0
    %2821 = vadd.xlane.f32.xlu0 %v2820
    %v2822 = vpop.xlane.xlu0 %2821
    %v2823 = vsel %vm76, %v2801, 0.0
    %2824 = vadd.xlane.f32.xlu0 %v2823
    %v2825 = vpop.xlane.xlu0 %2824
    %v2826 = vmul.f32 %v2804, %v101
    %v2827 = vmul.f32 %v2807, %v101
    %v2828 = vmul.f32 %v2810, %v101
    %v2829 = vmul.f32 %v2813, %v101
    %v2830 = vmul.f32 %v2816, %v101
    %v2831 = vmul.f32 %v2819, %v101
    %v2832 = vmul.f32 %v2822, %v101
    %v2833 = vmul.f32 %v2825, %v101
    %v2834 = vadd.f32 %v2826, 1e-05
    %v2835 = vadd.f32 %v2827, 1e-05
    %v2836 = vadd.f32 %v2828, 1e-05
    %v2837 = vadd.f32 %v2829, 1e-05
    %v2838 = vadd.f32 %v2830, 1e-05
    %v2839 = vadd.f32 %v2831, 1e-05
    %v2840 = vadd.f32 %v2832, 1e-05
    %v2841 = vadd.f32 %v2833, 1e-05
    %v2842 = vrsqrt.pop %v2834
    %v2843 = vrsqrt.pop %v2835
    %v2844 = vrsqrt.pop %v2836
    %v2845 = vrsqrt.pop %v2837
    %v2846 = vrsqrt.pop %v2838
    %v2847 = vrsqrt.pop %v2839
    %v2848 = vrsqrt.pop %v2840
    %v2849 = vrsqrt.pop %v2841
    %v2850 = vmul.f32 %v2786, %v2842
    %v2851 = vmul.f32 %v2787, %v2843
    %v2852 = vmul.f32 %v2788, %v2844
    %v2853 = vmul.f32 %v2789, %v2845
    %v2854 = vmul.f32 %v2790, %v2846
    %v2855 = vmul.f32 %v2791, %v2847
    %v2856 = vmul.f32 %v2792, %v2848
    %v2857 = vmul.f32 %v2793, %v2849
    %v2858 = vpack.c.bf16 %v2851, %v2850
    %v2859 = vpack.c.bf16 %v2853, %v2852
    %v2860 = vpack.c.bf16 %v2855, %v2854
    %v2861 = vpack.c.bf16 %v2857, %v2856
    %v2862 = vld [vmem:[%s4] sm:$0xf]
    %v2863 = vld [vmem:[%s4 + $0x4] sm:$0xf]
    %v2864 = vld [vmem:[%s4 + $0x8] sm:$0xf]
    %v2865 = vld [vmem:[%s4 + $0xc] sm:$0xf]
    %v2866 = vlaneseq
    %v2867 = vshrl.u32 %v2866, 7
    %v2868 = vsub.s32 2, %v2867
    %v2869 = vrot.slane %v64, %v2868
    %v2874 = vunpack.c.l.b16 %v2862
    %v2875 = vunpack.c.l.b16 %v2863
    %v2876 = vunpack.c.l.b16 %v2864
    %v2877 = vunpack.c.l.b16 %v2865
    %v2878 = vpack.c.b16 %v2875, %v2874
    %v2879 = vpack.c.b16 %v2877, %v2876
    %v2883 = vsel %vm76, %v2858, 0
    %v2886 = vsel %vm76, %v2859, 0
    %v2889 = vsel %vm76, %v2860, 0
    %v2892 = vsel %vm76, %v2861, 0
    %2894 = vmatprep.subr.bf16.mxu0 0
    %2895 = vmatpush1.bf16.msra.mxu0 0
    %2896 = vmatprep.subr.bf16.mxu0 0
    %2897 = vmatpush1.bf16.msra.mxu0 0
    %2898 = vmatprep.subr.bf16.mxu0 0
    %2899 = vmatpush1.bf16.msra.mxu0 0
    %2900 = vmatprep.subr.bf16.mxu0 0
    %2901 = vmatpush1.bf16.msra.mxu0 0
    %2902 = vmatprep.subr.bf16.mxu0 0
    %2903 = vmatpush1.bf16.msra.mxu0 0
    %2904 = vmatprep.subr.bf16.mxu0 0
    %2905 = vmatpush1.bf16.msra.mxu0 0
    %2906 = vmatprep.subr.bf16.mxu0 0
    %2907 = vmatpush1.bf16.msra.mxu0 %v2879
    %2908 = vmatprep.subr.bf16.mxu0 0
    %2909 = vmatpush1.bf16.msra.mxu0 %v2878
    %2910 = vmatprep.subr.bf16.mxu0 0
    %2911 = vmatpush2.bf16.msra.mxu0 0
    %2912 = vmatprep.subr.bf16.mxu0 0
    %2913 = vmatpush2.bf16.msra.mxu0 0
    %2914 = vmatprep.subr.bf16.mxu0 0
    %2915 = vmatpush2.bf16.msra.mxu0 0
    %2916 = vmatprep.subr.bf16.mxu0 0
    %2917 = vmatpush2.bf16.msra.mxu0 0
    %2918 = vmatprep.subr.bf16.mxu0 0
    %2919 = vmatpush2.bf16.msra.mxu0 0
    %2920 = vmatprep.subr.bf16.mxu0 0
    %2921 = vmatpush2.bf16.msra.mxu0 0
    %2922 = vmatprep.subr.bf16.mxu0 0
    %2923 = vmatpush2.bf16.msra.mxu0 0
    %2924 = vmatprep.subr.bf16.mxu0 0
    %2925 = vmatpush2.bf16.msra.mxu0 0
    %2926 = vmatprep.mubr.bf16.mxu0 0
    %2927 = vmatmul.mubr.bf16.gmra.mxu0 %v2883
    %v2928 = vpop.f32.mrf.mxu0
    %v2929 = vadd.f32 %v2869, %v2928
    %v2930 = vpop.f32.mrf.mxu0
    %v2931 = vpop.f32.mrf.mxu0
    %v2932 = vadd.f32 %v2869, %v2931
    %v2933 = vpop.f32.mrf.mxu0
    %2934 = vmatprep.mubr.bf16.mxu0 0
    %2935 = vmatmul.mubr.bf16.gmra.mxu0 %v2886
    %v2936 = vpop.f32.mrf.mxu0
    %v2937 = vadd.f32 %v2869, %v2936
    %v2938 = vpop.f32.mrf.mxu0
    %v2939 = vpop.f32.mrf.mxu0
    %v2940 = vadd.f32 %v2869, %v2939
    %v2941 = vpop.f32.mrf.mxu0
    %2942 = vmatprep.mubr.bf16.mxu0 0
    %2943 = vmatmul.mubr.bf16.gmra.mxu0 %v2889
    %v2944 = vpop.f32.mrf.mxu0
    %v2945 = vadd.f32 %v2869, %v2944
    %v2946 = vpop.f32.mrf.mxu0
    %v2947 = vpop.f32.mrf.mxu0
    %v2948 = vadd.f32 %v2869, %v2947
    %v2949 = vpop.f32.mrf.mxu0
    %2950 = vmatprep.mubr.bf16.mxu0 0
    %2951 = vmatmul.mubr.bf16.gmra.mxu0 %v2892
    %v2952 = vpop.f32.mrf.mxu0
    %v2953 = vadd.f32 %v2869, %v2952
    %v2954 = vpop.f32.mrf.mxu0
    %v2955 = vpop.f32.mrf.mxu0
    %v2956 = vadd.f32 %v2869, %v2955
    %v2957 = vpop.f32.mrf.mxu0
    %2958 = vdwg.mxu0
    %2959 = vst [vmem:[#allocation10] sm:$0xff] %v2929
    %2960 = vst [vmem:[#allocation10 + $0x8] sm:$0xff] %v2932
    %2961 = vst [vmem:[#allocation10 + $0x10] sm:$0xff] %v2937
    %2962 = vst [vmem:[#allocation10 + $0x18] sm:$0xff] %v2940
    %2963 = vst [vmem:[#allocation10 + $0x20] sm:$0xff] %v2945
    %2964 = vst [vmem:[#allocation10 + $0x28] sm:$0xff] %v2948
    %2965 = vst [vmem:[#allocation10 + $0x30] sm:$0xff] %v2953
    %2966 = vst [vmem:[#allocation10 + $0x38] sm:$0xff] %v2956
    // Predicated region
    $region38: #{tpu_custom_call.1} parent=1 // pred_check
      _
    $region39: #{tpu_custom_call.1} parent=1 // pred_check_branch
      %2968 = sbr.rel (0) target = $region41
    $region40: #{tpu_custom_call.1} parent=1 // pred_region
      %s2970 = ssub.s32 1024, 1024
      %2971 = vsyncadd [#allocation6], %s2970
      %s2972 = sshll.u32 [#allocation10], 4
      %s2973 = int_to_ptr.vmem [resolvable:$true] %s2972
      %2978 = dma.vmem_to_hbm [thread:$0]  %s2973, 1024, %s6, [#allocation6], 128, 128, 8
    $region41: #{tpu_custom_call.1} parent=1 // pred_fallthru
      _
    // Predicated region
    $region42: #{tpu_custom_call.1} parent=1 // pred_check
      _
    $region43: #{tpu_custom_call.1} parent=1 // pred_check_branch
      %2980 = sbr.rel (0) target = $region45
    $region44: #{tpu_custom_call.1} parent=1 // pred_region
      %2981 = dma.done [#allocation6], 1024
    $region45: #{tpu_custom_call.1} parent=1 // pred_fallthru
      _
    %2982 = vsyncpa [#allocation5], 1
    %2983 = vsyncpa [#allocation8], 1
    %2984 = vsyncpa [#allocation6], 1

</llo_original>
